<compile_context>
chip_gen: v7x
topology: tpu7x:2x2x1
jax: 0.10.0
libtpu: 0.0.40
codegen_flags: <defaults>
</compile_context>

<pallas_src>
import math

import jax
import jax.numpy as jnp
from jax import lax
from jax.experimental import pallas as pl
from jax.experimental.pallas import tpu as pltpu

_ACT_DTYPE = jnp.bfloat16     # HBM dtype of activations (x, h, phase-split inputs)


def _round_up(x, m):
    return (x + m - 1) // m * m


# ----------------------------------------------------------------------------
# Kernel bodies
# ----------------------------------------------------------------------------
def _relu_bn(acc, prm):
    # prm: (3, M, 1) f32 = [conv bias, BN scale, BN shift];  acc: (M, PT) f32
    return jnp.maximum(acc + prm[0], 0.0) * prm[1] + prm[2]


def _make_stage1_kernel(taps, cin, pt):
    """Conv3d(Cin,Cin,3,p=1) + ReLU + BN for one output D-plane."""
    def kernel(p0_ref, p1_ref, p2_ref, w_ref, prm_ref, msk_ref, o_ref, xk_ref):
        planes = (p0_ref, p1_ref, p2_ref)
        # Folded-K patch matrix (27*Cin, PT); K is exact -> no per-step zero-fill.
        for t, (kd, off) in enumerate(taps):
            xk_ref[t * cin:(t + 1) * cin, :] = (
                planes[kd][:, off:off + pt].astype(jnp.float32))
        acc = jnp.dot(w_ref[...], xk_ref[...], preferred_element_type=jnp.float32)
        # mask zeroes the padded-plane border lanes so h is already zero-padded
        # in (H, W) for stage 2.
        y = _relu_bn(acc, prm_ref[...]) * msk_ref[...]
        o_ref[...] = y.astype(o_ref.dtype)
    return kernel


def _make_stage2_kernel(taps, cin, pt):
    """Fused: Conv3d(s=2)+ReLU+BN on h  +  Conv3d(s=2)+ReLU+BN on x  + add."""
    def kernel(h0_ref, h1_ref, x0_ref, x1_ref, w2_ref, w3_ref, p2_ref, p3_ref,
               o_ref, xk_ref):
        def branch(b0, b1, w_ref, prm_ref):
            blks = (b0, b1)
            for t, (blk, ph, off) in enumerate(taps):
                xk_ref[t * cin:(t + 1) * cin, :] = (
                    blks[blk][ph, :, off:off + pt].astype(jnp.float32))
            acc = jnp.dot(w_ref[...], xk_ref[...],
                          preferred_element_type=jnp.float32)
            return _relu_bn(acc, prm_ref[...])

        y = branch(h0_ref, h1_ref, w2_ref, p2_ref) + branch(x0_ref, x1_ref,
                                                            w3_ref, p3_ref)
        o_ref[...] = y.astype(o_ref.dtype)
    return kernel


# ----------------------------------------------------------------------------
# pallas_call wrappers
# ----------------------------------------------------------------------------
def _conv1_relu_bn(xpl, wm, prm, mask, *, cin, d_out, pt, padl, wp_):
    n, _, _, l1 = xpl.shape
    k = 27 * cin
    taps = [(kd, padl + (kh - 1) * wp_ + (kw - 1))
            for kd in range(3) for kh in range(3) for kw in range(3)]
    return pl.pallas_call(
        _make_stage1_kernel(taps, cin, pt),
        out_shape=jax.ShapeDtypeStruct((n, d_out, cin, pt), _ACT_DTYPE),
        grid_spec=pltpu.PrefetchScalarGridSpec(
            num_scalar_prefetch=0,
            grid=(n, d_out),
            in_specs=[
                # +/-1 plane halo expressed via three plane-indexed views of x.
                pl.BlockSpec((None, None, cin, l1), lambda i, d: (i, d, 0, 0)),
                pl.BlockSpec((None, None, cin, l1), lambda i, d: (i, d + 1, 0, 0)),
                pl.BlockSpec((None, None, cin, l1), lambda i, d: (i, d + 2, 0, 0)),
                pl.BlockSpec((cin, k), lambda i, d: (0, 0)),
                pl.BlockSpec((3, cin, 1), lambda i, d: (0, 0, 0)),
                pl.BlockSpec((1, pt), lambda i, d: (0, 0)),
            ],
            out_specs=pl.BlockSpec((None, None, cin, pt), lambda i, d: (i, d, 0, 0)),
            scratch_shapes=[pltpu.VMEM((k, pt), jnp.float32)],
        ),
        compiler_params=pltpu.CompilerParams(
            dimension_semantics=("parallel", "parallel"),
            vmem_limit_bytes=32 * 1024 * 1024),
    )(xpl, xpl, xpl, wm, prm, mask)


def _downsample_residual(hps, xps, wm2, prm2, wm3, prm3, *, cin, coutp, d_out,
                         w2_, pt):
    n, _, _, _, l2 = hps.shape
    k = 27 * cin
    # (source D2-block {0,1}, phase index pd*4+ph*2+pw, in-phase lane offset)
    taps = [(1 if kd == 2 else 0,
             (kd % 2) * 4 + (kh % 2) * 2 + (kw % 2),
             (kh // 2) * w2_ + (kw // 2))
            for kd in range(3) for kh in range(3) for kw in range(3)]
    return pl.pallas_call(
        _make_stage2_kernel(taps, cin, pt),
        out_shape=jax.ShapeDtypeStruct((n, d_out, coutp, pt), jnp.float32),
        grid_spec=pltpu.PrefetchScalarGridSpec(
            num_scalar_prefetch=0,
            grid=(n, d_out),
            in_specs=[
                pl.BlockSpec((None, None, 8, cin, l2), lambda i, d: (i, d, 0, 0, 0)),
                pl.BlockSpec((None, None, 8, cin, l2), lambda i, d: (i, d + 1, 0, 0, 0)),
                pl.BlockSpec((None, None, 8, cin, l2), lambda i, d: (i, d, 0, 0, 0)),
                pl.BlockSpec((None, None, 8, cin, l2), lambda i, d: (i, d + 1, 0, 0, 0)),
                pl.BlockSpec((coutp, k), lambda i, d: (0, 0)),
                pl.BlockSpec((coutp, k), lambda i, d: (0, 0)),
                pl.BlockSpec((3, coutp, 1), lambda i, d: (0, 0, 0)),
                pl.BlockSpec((3, coutp, 1), lambda i, d: (0, 0, 0)),
            ],
            out_specs=pl.BlockSpec((None, None, coutp, pt), lambda i, d: (i, d, 0, 0)),
            scratch_shapes=[pltpu.VMEM((k, pt), jnp.float32)],
        ),
        compiler_params=pltpu.CompilerParams(
            dimension_semantics=("parallel", "parallel"),
            vmem_limit_bytes=32 * 1024 * 1024),
    )(hps, hps, xps, xps, wm2, wm3, prm2, prm3)


# ----------------------------------------------------------------------------
# JAX-side layout glue (pure indexing / padding, ~1x bytes, no window stacking)
# ----------------------------------------------------------------------------
def _plane_layout(x, padl, l1):
    """(N,C,D,H,W) f32 -> (N, D+2, C, L1) bf16; conv-padded planes flattened,
    left halo of `padl` lanes so all 27 tap offsets are non-negative."""
    n, c, d, h, w = x.shape
    xp = jnp.pad(x, ((0, 0), (0, 0), (1, 1), (1, 1), (1, 1)))
    xp = xp.transpose(0, 2, 1, 3, 4).reshape(n, d + 2, c, (h + 2) * (w + 2))
    xp = jnp.pad(xp, ((0, 0), (0, 0), (0, 0),
                      (padl, l1 - padl - (h + 2) * (w + 2))))
    return xp.astype(_ACT_DTYPE)


def _phase_split(vol, l2):
    """(N, Dp, C, Hp, Wp) conv-padded -> (N, D2, 8, C, L2) bf16 stride-2 phases."""
    n, dp, c, hp, wp = vol.shape
    vol = jnp.pad(vol, ((0, 0), (0, dp % 2), (0, 0), (0, hp % 2), (0, wp % 2)))
    d2, h2, w2 = vol.shape[1] // 2, vol.shape[3] // 2, vol.shape[4] // 2
    v = vol.reshape(n, d2, 2, c, h2, 2, w2, 2)
    v = v.transpose(0, 1, 2, 5, 7, 3, 4, 6).reshape(n, d2, 8, c, h2 * w2)
    v = jnp.pad(v, ((0, 0), (0, 0), (0, 0), (0, 0), (0, l2 - h2 * w2)))
    return v.astype(_ACT_DTYPE)


def _border_mask(h, w, wp, pt):
    q = jnp.arange(pt)
    hp_i, wp_i = q // wp, q % wp
    m = (hp_i >= 1) & (hp_i <= h) & (wp_i >= 1) & (wp_i <= w)
    return m.astype(jnp.float32)[None, :]


# ----------------------------------------------------------------------------
# Parameter folding + top-level forward
# ----------------------------------------------------------------------------
def _weight_matrix(w_dhwio, m_pad=None):
    kd, kh, kw, cin, cout = w_dhwio.shape
    wm = jnp.transpose(w_dhwio, (4, 0, 1, 2, 3)).reshape(cout, kd * kh * kw * cin)
    if m_pad is not None and m_pad > cout:
        wm = jnp.pad(wm, ((0, m_pad - cout), (0, 0)))
    return wm.astype(jnp.float32)


def _fold_bias_bn(bias, gamma, beta, mean, var, m_pad=None, eps=1e-5):
    scale = gamma / jnp.sqrt(var + eps)
    shift = beta - mean * scale
    prm = jnp.stack([bias, scale, shift], axis=0)
    if m_pad is not None and m_pad > bias.shape[0]:
        prm = jnp.pad(prm, ((0, 0), (0, m_pad - bias.shape[0])))
    return prm[..., None].astype(jnp.float32)


def en_res_block(x, params):
    """x: (N, Cin, D, H, W) f32 NCDHW  ->  (N, Cout, ceil(D/2), ceil(H/2), ceil(W/2))."""
    n, cin, d, h, w = x.shape
    cout = params["w2"].shape[-1]
    coutp = _round_up(cout, 8)
    hp, wp, dp = h + 2, w + 2, d + 2

    # stage-1 tiling: one conv-padded D-plane per grid step
    pt1 = _round_up(hp * wp, 128)
    padl = _round_up(wp + 1, 8)
    l1 = _round_up(padl + wp + 1 + pt1, 128)

    # stage-2 tiling: one output D-plane per grid step (stride-2 phase planes)
    do, ho, wo = (d - 1) // 2 + 1, (h - 1) // 2 + 1, (w - 1) // 2 + 1
    d2 = (dp + dp % 2) // 2
    h2 = (hp + hp % 2) // 2
    w2 = (wp + wp % 2) // 2
    pt2 = _round_up(ho * w2, 128)
    l2 = _round_up(max(h2 * w2, w2 + 1 + pt2), 128)
    assert d2 >= do + 1

    wm1 = _weight_matrix(params["w1"])
    wm2 = _weight_matrix(params["w2"], coutp)
    wm3 = _weight_matrix(params["w3"], coutp)
    prm1 = _fold_bias_bn(params["b1"], *params["bn1"])
    prm2 = _fold_bias_bn(params["b2"], *params["bn2"], m_pad=coutp)
    prm3 = _fold_bias_bn(params["b3"], *params["bn3"], m_pad=coutp)

    # ---- stage 1: Conv3d(Cin,Cin,3,p=1) + ReLU + BN ----
    xpl = _plane_layout(x, padl, l1)                         # (N, D+2, C, L1) bf16
    mask1 = _border_mask(h, w, wp, pt1)
    hbuf = _conv1_relu_bn(xpl, wm1, prm1, mask1,
                          cin=cin, d_out=d, pt=pt1, padl=padl, wp_=wp)
    # hbuf: (N, D, C, PT1) bf16, each plane already zero-bordered in (H, W)

    # ---- stage 2 prep: single phase-split repack pass for h and x ----
    hvol = hbuf[..., :hp * wp].reshape(n, d, cin, hp, wp)
    hvol = jnp.pad(hvol, ((0, 0), (1, 1), (0, 0), (0, 0), (0, 0)))   # pad D only
    hps = _phase_split(hvol, l2)                             # (N, D2, 8, C, L2)
    xvol = xpl[..., padl:padl + hp * wp].reshape(n, dp, cin, hp, wp)
    xps = _phase_split(xvol, l2)

    # ---- stage 2: fused conv2 + skip conv + ReLU/BN + residual add ----
    out = _downsample_residual(hps, xps, wm2, prm2, wm3, prm3,
                               cin=cin, coutp=coutp, d_out=do, w2_=w2, pt=pt2)

    # ---- crop over-computed phase-plane borders / padded channels -> NCDHW ----
    y = out[:, :, :cout, :ho * w2].reshape(n, do, cout, ho, w2)[..., :wo]
    return y.transpose(0, 2, 1, 3, 4)


# ----------------------------------------------------------------------------
# Pure-JAX reference (XLA convs) for verification.
# Inputs and the intermediate activation are passed through bf16 exactly like
# the kernel's data path, so the comparison isolates kernel correctness from
# the intended bf16 storage (accumulation is f32 in both).
# ----------------------------------------------------------------------------
def _bn_inf(y, gamma, beta, mean, var, eps=1e-5):
    return (y - mean) / jnp.sqrt(var + eps) * gamma + beta


def en_res_block_ref(x, params):
    q = lambda a: a.astype(_ACT_DTYPE).astype(jnp.float32)
    dn = ("NDHWC", "DHWIO", "NDHWC")
    xt = q(jnp.transpose(x, (0, 2, 3, 4, 1)))

    def conv(inp, wgt, b, s):
        return lax.conv_general_dilated(
            inp, wgt, (s, s, s), [(1, 1)] * 3, dimension_numbers=dn,
            precision=lax.Precision.HIGHEST) + b

    hh = _bn_inf(jnp.maximum(conv(xt, params["w1"], params["b1"], 1), 0.0),
                 *params["bn1"])
    hh = q(hh)      # kernel stores the intermediate activation as bf16
    y = _bn_inf(jnp.maximum(conv(hh, params["w2"], params["b2"], 2), 0.0),
                *params["bn2"])
    s_ = _bn_inf(jnp.maximum(conv(xt, params["w3"], params["b3"], 2), 0.0),
                 *params["bn3"])
    return jnp.transpose(y + s_, (0, 4, 1, 2, 3))


# ----------------------------------------------------------------------------
# Deterministic example run
# ----------------------------------------------------------------------------
def _conv_params(kw, kb, cin, cout):
    bound = 1.0 / math.sqrt(cin * 27)
    w = jax.random.uniform(kw, (3, 3, 3, cin, cout), jnp.float32, -bound, bound)
    b = jax.random.uniform(kb, (cout,), jnp.float32, -bound, bound)
    return w, b


def _bn_params(key, c):
    k1, k2, k3, k4 = jax.random.split(key, 4)
    gamma = jax.random.uniform(k1, (c,), jnp.float32, 0.5, 1.5)
    beta = 0.1 * jax.random.normal(k2, (c,), jnp.float32)
    mean = 0.1 * jax.random.normal(k3, (c,), jnp.float32)
    var = jax.random.uniform(k4, (c,), jnp.float32, 0.5, 1.5)
    return (gamma, beta, mean, var)


if __name__ == "__main__":
    in_channels, out_channels = 4, 8
    N, D, H, W = 2, 16, 16, 16

    keys = jax.random.split(jax.random.PRNGKey(0), 10)
    x = jax.random.normal(keys[0], (N, in_channels, D, H, W), jnp.float32)

    w1, b1 = _conv_params(keys[1], keys[2], in_channels, in_channels)
    w2, b2 = _conv_params(keys[3], keys[4], in_channels, out_channels)
    w3, b3 = _conv_params(keys[5], keys[6], in_channels, out_channels)
    params = dict(
        w1=w1, b1=b1, bn1=_bn_params(keys[7], in_channels),
        w2=w2, b2=b2, bn2=_bn_params(keys[8], out_channels),
        w3=w3, b3=b3, bn3=_bn_params(keys[9], out_channels),
    )

    fwd = jax.jit(en_res_block)
    out = jax.block_until_ready(fwd(x, params))
    ref = en_res_block_ref(x, params)

    assert out.shape == (N, out_channels, D // 2, H // 2, W // 2), out.shape
    err = float(jnp.max(jnp.abs(out - ref)))
    # Tolerance covers bf16-ulp rounding flips of the intermediate activation
    # (both paths use f32 accumulation on identical bf16-quantized inputs).
    assert jnp.allclose(out, ref, rtol=1e-2, atol=1e-2), f"mismatch vs reference: {err}"

    print("KERNEL_OK")
</pallas_src>

<mosaic_0001>
module attributes {stable_mosaic.version = 11 : i64} {
  func.func @kernel(%arg0: i32, %arg1: i32, %arg2: memref<1x1x4x512xbf16, #tpu.memory_space<vmem>>, %arg3: memref<1x1x4x512xbf16, #tpu.memory_space<vmem>>, %arg4: memref<1x1x4x512xbf16, #tpu.memory_space<vmem>>, %arg5: memref<4x108xf32, #tpu.memory_space<vmem>>, %arg6: memref<3x4x1xf32, #tpu.memory_space<vmem>>, %arg7: memref<1x384xf32, #tpu.memory_space<vmem>>, %arg8: memref<1x1x4x384xbf16, #tpu.memory_space<vmem>>, %arg9: memref<108x384xf32, #tpu.memory_space<vmem>>) attributes {dimension_semantics = [#tpu.dimension_semantics<parallel>, #tpu.dimension_semantics<parallel>], iteration_bounds = array<i64: 2, 16>, scalar_prefetch = 0 : i64, scratch_operands = 1 : i64, tpu.core_type = #tpu.core_type<tc>, window_params = [{transform_indices = @transform_0, window_bounds = array<i64: 1, 1, 4, 512>}, {transform_indices = @transform_1, window_bounds = array<i64: 1, 1, 4, 512>}, {transform_indices = @transform_2, window_bounds = array<i64: 1, 1, 4, 512>}, {pipeline_mode = #tpu.pipeline_mode<synchronous>, transform_indices = @transform_3, window_bounds = array<i64: 4, 108>}, {pipeline_mode = #tpu.pipeline_mode<synchronous>, transform_indices = @transform_4, window_bounds = array<i64: 3, 4, 1>}, {pipeline_mode = #tpu.pipeline_mode<synchronous>, transform_indices = @transform_5, window_bounds = array<i64: 1, 384>}, {transform_indices = @transform_6, window_bounds = array<i64: 1, 1, 4, 384>}]} {
    %c0 = arith.constant 0 : index
    %c0_0 = arith.constant 0 : index
    %c0_1 = arith.constant 0 : index
    %c5 = arith.constant 5 : index
    %0 = vector.load %arg2[%c0, %c0_0, %c0_1, %c5] : memref<1x1x4x512xbf16, #tpu.memory_space<vmem>>, vector<1x1x4x384xbf16>
    %1 = vector.shape_cast %0 : vector<1x1x4x384xbf16> to vector<4x384xbf16>
    %2 = arith.extf %1 : vector<4x384xbf16> to vector<4x384xf32>
    %c0_2 = arith.constant 0 : index
    %c0_3 = arith.constant 0 : index
    %3 = vector.load %arg9[%c0_2, %c0_3] : memref<108x384xf32, #tpu.memory_space<vmem>>, vector<4x384xf32>
    tpu.vector_store %arg9[%c0_2, %c0_3], %2 {strides = array<i32>} : memref<108x384xf32, #tpu.memory_space<vmem>>, vector<4x384xf32>,
    %c0_4 = arith.constant 0 : index
    %c0_5 = arith.constant 0 : index
    %c0_6 = arith.constant 0 : index
    %c6 = arith.constant 6 : index
    %4 = vector.load %arg2[%c0_4, %c0_5, %c0_6, %c6] : memref<1x1x4x512xbf16, #tpu.memory_space<vmem>>, vector<1x1x4x384xbf16>
    %5 = vector.shape_cast %4 : vector<1x1x4x384xbf16> to vector<4x384xbf16>
    %6 = arith.extf %5 : vector<4x384xbf16> to vector<4x384xf32>
    %c4 = arith.constant 4 : index
    %c0_7 = arith.constant 0 : index
    %7 = vector.load %arg9[%c4, %c0_7] : memref<108x384xf32, #tpu.memory_space<vmem>>, vector<4x384xf32>
    tpu.vector_store %arg9[%c4, %c0_7], %6 {strides = array<i32>} : memref<108x384xf32, #tpu.memory_space<vmem>>, vector<4x384xf32>,
    %c0_8 = arith.constant 0 : index
    %c0_9 = arith.constant 0 : index
    %c0_10 = arith.constant 0 : index
    %c7 = arith.constant 7 : index
    %8 = vector.load %arg2[%c0_8, %c0_9, %c0_10, %c7] : memref<1x1x4x512xbf16, #tpu.memory_space<vmem>>, vector<1x1x4x384xbf16>
    %9 = vector.shape_cast %8 : vector<1x1x4x384xbf16> to vector<4x384xbf16>
    %10 = arith.extf %9 : vector<4x384xbf16> to vector<4x384xf32>
    %c8 = arith.constant 8 : index
    %c0_11 = arith.constant 0 : index
    %11 = vector.load %arg9[%c8, %c0_11] : memref<108x384xf32, #tpu.memory_space<vmem>>, vector<4x384xf32>
    tpu.vector_store %arg9[%c8, %c0_11], %10 {strides = array<i32>} : memref<108x384xf32, #tpu.memory_space<vmem>>, vector<4x384xf32>,
    %c0_12 = arith.constant 0 : index
    %c0_13 = arith.constant 0 : index
    %c0_14 = arith.constant 0 : index
    %c23 = arith.constant 23 : index
    %12 = vector.load %arg2[%c0_12, %c0_13, %c0_14, %c23] : memref<1x1x4x512xbf16, #tpu.memory_space<vmem>>, vector<1x1x4x384xbf16>
    %13 = vector.shape_cast %12 : vector<1x1x4x384xbf16> to vector<4x384xbf16>
    %14 = arith.extf %13 : vector<4x384xbf16> to vector<4x384xf32>
    %c12 = arith.constant 12 : index
    %c0_15 = arith.constant 0 : index
    %15 = vector.load %arg9[%c12, %c0_15] : memref<108x384xf32, #tpu.memory_space<vmem>>, vector<4x384xf32>
    tpu.vector_store %arg9[%c12, %c0_15], %14 {strides = array<i32>} : memref<108x384xf32, #tpu.memory_space<vmem>>, vector<4x384xf32>,
    %c0_16 = arith.constant 0 : index
    %c0_17 = arith.constant 0 : index
    %c0_18 = arith.constant 0 : index
    %c24 = arith.constant 24 : index
    %16 = vector.load %arg2[%c0_16, %c0_17, %c0_18, %c24] : memref<1x1x4x512xbf16, #tpu.memory_space<vmem>>, vector<1x1x4x384xbf16>
    %17 = vector.shape_cast %16 : vector<1x1x4x384xbf16> to vector<4x384xbf16>
    %18 = arith.extf %17 : vector<4x384xbf16> to vector<4x384xf32>
    %c16 = arith.constant 16 : index
    %c0_19 = arith.constant 0 : index
    %19 = vector.load %arg9[%c16, %c0_19] : memref<108x384xf32, #tpu.memory_space<vmem>>, vector<4x384xf32>
    tpu.vector_store %arg9[%c16, %c0_19], %18 {strides = array<i32>} : memref<108x384xf32, #tpu.memory_space<vmem>>, vector<4x384xf32>,
    %c0_20 = arith.constant 0 : index
    %c0_21 = arith.constant 0 : index
    %c0_22 = arith.constant 0 : index
    %c25 = arith.constant 25 : index
    %20 = vector.load %arg2[%c0_20, %c0_21, %c0_22, %c25] : memref<1x1x4x512xbf16, #tpu.memory_space<vmem>>, vector<1x1x4x384xbf16>
    %21 = vector.shape_cast %20 : vector<1x1x4x384xbf16> to vector<4x384xbf16>
    %22 = arith.extf %21 : vector<4x384xbf16> to vector<4x384xf32>
    %c20 = arith.constant 20 : index
    %c0_23 = arith.constant 0 : index
    %23 = vector.load %arg9[%c20, %c0_23] : memref<108x384xf32, #tpu.memory_space<vmem>>, vector<4x384xf32>
    tpu.vector_store %arg9[%c20, %c0_23], %22 {strides = array<i32>} : memref<108x384xf32, #tpu.memory_space<vmem>>, vector<4x384xf32>,
    %c0_24 = arith.constant 0 : index
    %c0_25 = arith.constant 0 : index
    %c0_26 = arith.constant 0 : index
    %c41 = arith.constant 41 : index
    %24 = vector.load %arg2[%c0_24, %c0_25, %c0_26, %c41] : memref<1x1x4x512xbf16, #tpu.memory_space<vmem>>, vector<1x1x4x384xbf16>
    %25 = vector.shape_cast %24 : vector<1x1x4x384xbf16> to vector<4x384xbf16>
    %26 = arith.extf %25 : vector<4x384xbf16> to vector<4x384xf32>
    %c24_27 = arith.constant 24 : index
    %c0_28 = arith.constant 0 : index
    %27 = vector.load %arg9[%c24_27, %c0_28] : memref<108x384xf32, #tpu.memory_space<vmem>>, vector<4x384xf32>
    tpu.vector_store %arg9[%c24_27, %c0_28], %26 {strides = array<i32>} : memref<108x384xf32, #tpu.memory_space<vmem>>, vector<4x384xf32>,
    %c0_29 = arith.constant 0 : index
    %c0_30 = arith.constant 0 : index
    %c0_31 = arith.constant 0 : index
    %c42 = arith.constant 42 : index
    %28 = vector.load %arg2[%c0_29, %c0_30, %c0_31, %c42] : memref<1x1x4x512xbf16, #tpu.memory_space<vmem>>, vector<1x1x4x384xbf16>
    %29 = vector.shape_cast %28 : vector<1x1x4x384xbf16> to vector<4x384xbf16>
    %30 = arith.extf %29 : vector<4x384xbf16> to vector<4x384xf32>
    %c28 = arith.constant 28 : index
    %c0_32 = arith.constant 0 : index
    %31 = vector.load %arg9[%c28, %c0_32] : memref<108x384xf32, #tpu.memory_space<vmem>>, vector<4x384xf32>
    tpu.vector_store %arg9[%c28, %c0_32], %30 {strides = array<i32>} : memref<108x384xf32, #tpu.memory_space<vmem>>, vector<4x384xf32>,
    %c0_33 = arith.constant 0 : index
    %c0_34 = arith.constant 0 : index
    %c0_35 = arith.constant 0 : index
    %c43 = arith.constant 43 : index
    %32 = vector.load %arg2[%c0_33, %c0_34, %c0_35, %c43] : memref<1x1x4x512xbf16, #tpu.memory_space<vmem>>, vector<1x1x4x384xbf16>
    %33 = vector.shape_cast %32 : vector<1x1x4x384xbf16> to vector<4x384xbf16>
    %34 = arith.extf %33 : vector<4x384xbf16> to vector<4x384xf32>
    %c32 = arith.constant 32 : index
    %c0_36 = arith.constant 0 : index
    %35 = vector.load %arg9[%c32, %c0_36] : memref<108x384xf32, #tpu.memory_space<vmem>>, vector<4x384xf32>
    tpu.vector_store %arg9[%c32, %c0_36], %34 {strides = array<i32>} : memref<108x384xf32, #tpu.memory_space<vmem>>, vector<4x384xf32>,
    %c0_37 = arith.constant 0 : index
    %c0_38 = arith.constant 0 : index
    %c0_39 = arith.constant 0 : index
    %c5_40 = arith.constant 5 : index
    %36 = vector.load %arg3[%c0_37, %c0_38, %c0_39, %c5_40] : memref<1x1x4x512xbf16, #tpu.memory_space<vmem>>, vector<1x1x4x384xbf16>
    %37 = vector.shape_cast %36 : vector<1x1x4x384xbf16> to vector<4x384xbf16>
    %38 = arith.extf %37 : vector<4x384xbf16> to vector<4x384xf32>
    %c36 = arith.constant 36 : index
    %c0_41 = arith.constant 0 : index
    %39 = vector.load %arg9[%c36, %c0_41] : memref<108x384xf32, #tpu.memory_space<vmem>>, vector<4x384xf32>
    tpu.vector_store %arg9[%c36, %c0_41], %38 {strides = array<i32>} : memref<108x384xf32, #tpu.memory_space<vmem>>, vector<4x384xf32>,
    %c0_42 = arith.constant 0 : index
    %c0_43 = arith.constant 0 : index
    %c0_44 = arith.constant 0 : index
    %c6_45 = arith.constant 6 : index
    %40 = vector.load %arg3[%c0_42, %c0_43, %c0_44, %c6_45] : memref<1x1x4x512xbf16, #tpu.memory_space<vmem>>, vector<1x1x4x384xbf16>
    %41 = vector.shape_cast %40 : vector<1x1x4x384xbf16> to vector<4x384xbf16>
    %42 = arith.extf %41 : vector<4x384xbf16> to vector<4x384xf32>
    %c40 = arith.constant 40 : index
    %c0_46 = arith.constant 0 : index
    %43 = vector.load %arg9[%c40, %c0_46] : memref<108x384xf32, #tpu.memory_space<vmem>>, vector<4x384xf32>
    tpu.vector_store %arg9[%c40, %c0_46], %42 {strides = array<i32>} : memref<108x384xf32, #tpu.memory_space<vmem>>, vector<4x384xf32>,
    %c0_47 = arith.constant 0 : index
    %c0_48 = arith.constant 0 : index
    %c0_49 = arith.constant 0 : index
    %c7_50 = arith.constant 7 : index
    %44 = vector.load %arg3[%c0_47, %c0_48, %c0_49, %c7_50] : memref<1x1x4x512xbf16, #tpu.memory_space<vmem>>, vector<1x1x4x384xbf16>
    %45 = vector.shape_cast %44 : vector<1x1x4x384xbf16> to vector<4x384xbf16>
    %46 = arith.extf %45 : vector<4x384xbf16> to vector<4x384xf32>
    %c44 = arith.constant 44 : index
    %c0_51 = arith.constant 0 : index
    %47 = vector.load %arg9[%c44, %c0_51] : memref<108x384xf32, #tpu.memory_space<vmem>>, vector<4x384xf32>
    tpu.vector_store %arg9[%c44, %c0_51], %46 {strides = array<i32>} : memref<108x384xf32, #tpu.memory_space<vmem>>, vector<4x384xf32>,
    %c0_52 = arith.constant 0 : index
    %c0_53 = arith.constant 0 : index
    %c0_54 = arith.constant 0 : index
    %c23_55 = arith.constant 23 : index
    %48 = vector.load %arg3[%c0_52, %c0_53, %c0_54, %c23_55] : memref<1x1x4x512xbf16, #tpu.memory_space<vmem>>, vector<1x1x4x384xbf16>
    %49 = vector.shape_cast %48 : vector<1x1x4x384xbf16> to vector<4x384xbf16>
    %50 = arith.extf %49 : vector<4x384xbf16> to vector<4x384xf32>
    %c48 = arith.constant 48 : index
    %c0_56 = arith.constant 0 : index
    %51 = vector.load %arg9[%c48, %c0_56] : memref<108x384xf32, #tpu.memory_space<vmem>>, vector<4x384xf32>
    tpu.vector_store %arg9[%c48, %c0_56], %50 {strides = array<i32>} : memref<108x384xf32, #tpu.memory_space<vmem>>, vector<4x384xf32>,
    %c0_57 = arith.constant 0 : index
    %c0_58 = arith.constant 0 : index
    %c0_59 = arith.constant 0 : index
    %c24_60 = arith.constant 24 : index
    %52 = vector.load %arg3[%c0_57, %c0_58, %c0_59, %c24_60] : memref<1x1x4x512xbf16, #tpu.memory_space<vmem>>, vector<1x1x4x384xbf16>
    %53 = vector.shape_cast %52 : vector<1x1x4x384xbf16> to vector<4x384xbf16>
    %54 = arith.extf %53 : vector<4x384xbf16> to vector<4x384xf32>
    %c52 = arith.constant 52 : index
    %c0_61 = arith.constant 0 : index
    %55 = vector.load %arg9[%c52, %c0_61] : memref<108x384xf32, #tpu.memory_space<vmem>>, vector<4x384xf32>
    tpu.vector_store %arg9[%c52, %c0_61], %54 {strides = array<i32>} : memref<108x384xf32, #tpu.memory_space<vmem>>, vector<4x384xf32>,
    %c0_62 = arith.constant 0 : index
    %c0_63 = arith.constant 0 : index
    %c0_64 = arith.constant 0 : index
    %c25_65 = arith.constant 25 : index
    %56 = vector.load %arg3[%c0_62, %c0_63, %c0_64, %c25_65] : memref<1x1x4x512xbf16, #tpu.memory_space<vmem>>, vector<1x1x4x384xbf16>
    %57 = vector.shape_cast %56 : vector<1x1x4x384xbf16> to vector<4x384xbf16>
    %58 = arith.extf %57 : vector<4x384xbf16> to vector<4x384xf32>
    %c56 = arith.constant 56 : index
    %c0_66 = arith.constant 0 : index
    %59 = vector.load %arg9[%c56, %c0_66] : memref<108x384xf32, #tpu.memory_space<vmem>>, vector<4x384xf32>
    tpu.vector_store %arg9[%c56, %c0_66], %58 {strides = array<i32>} : memref<108x384xf32, #tpu.memory_space<vmem>>, vector<4x384xf32>,
    %c0_67 = arith.constant 0 : index
    %c0_68 = arith.constant 0 : index
    %c0_69 = arith.constant 0 : index
    %c41_70 = arith.constant 41 : index
    %60 = vector.load %arg3[%c0_67, %c0_68, %c0_69, %c41_70] : memref<1x1x4x512xbf16, #tpu.memory_space<vmem>>, vector<1x1x4x384xbf16>
    %61 = vector.shape_cast %60 : vector<1x1x4x384xbf16> to vector<4x384xbf16>
    %62 = arith.extf %61 : vector<4x384xbf16> to vector<4x384xf32>
    %c60 = arith.constant 60 : index
    %c0_71 = arith.constant 0 : index
    %63 = vector.load %arg9[%c60, %c0_71] : memref<108x384xf32, #tpu.memory_space<vmem>>, vector<4x384xf32>
    tpu.vector_store %arg9[%c60, %c0_71], %62 {strides = array<i32>} : memref<108x384xf32, #tpu.memory_space<vmem>>, vector<4x384xf32>,
    %c0_72 = arith.constant 0 : index
    %c0_73 = arith.constant 0 : index
    %c0_74 = arith.constant 0 : index
    %c42_75 = arith.constant 42 : index
    %64 = vector.load %arg3[%c0_72, %c0_73, %c0_74, %c42_75] : memref<1x1x4x512xbf16, #tpu.memory_space<vmem>>, vector<1x1x4x384xbf16>
    %65 = vector.shape_cast %64 : vector<1x1x4x384xbf16> to vector<4x384xbf16>
    %66 = arith.extf %65 : vector<4x384xbf16> to vector<4x384xf32>
    %c64 = arith.constant 64 : index
    %c0_76 = arith.constant 0 : index
    %67 = vector.load %arg9[%c64, %c0_76] : memref<108x384xf32, #tpu.memory_space<vmem>>, vector<4x384xf32>
    tpu.vector_store %arg9[%c64, %c0_76], %66 {strides = array<i32>} : memref<108x384xf32, #tpu.memory_space<vmem>>, vector<4x384xf32>,
    %c0_77 = arith.constant 0 : index
    %c0_78 = arith.constant 0 : index
    %c0_79 = arith.constant 0 : index
    %c43_80 = arith.constant 43 : index
    %68 = vector.load %arg3[%c0_77, %c0_78, %c0_79, %c43_80] : memref<1x1x4x512xbf16, #tpu.memory_space<vmem>>, vector<1x1x4x384xbf16>
    %69 = vector.shape_cast %68 : vector<1x1x4x384xbf16> to vector<4x384xbf16>
    %70 = arith.extf %69 : vector<4x384xbf16> to vector<4x384xf32>
    %c68 = arith.constant 68 : index
    %c0_81 = arith.constant 0 : index
    %71 = vector.load %arg9[%c68, %c0_81] : memref<108x384xf32, #tpu.memory_space<vmem>>, vector<4x384xf32>
    tpu.vector_store %arg9[%c68, %c0_81], %70 {strides = array<i32>} : memref<108x384xf32, #tpu.memory_space<vmem>>, vector<4x384xf32>,
    %c0_82 = arith.constant 0 : index
    %c0_83 = arith.constant 0 : index
    %c0_84 = arith.constant 0 : index
    %c5_85 = arith.constant 5 : index
    %72 = vector.load %arg4[%c0_82, %c0_83, %c0_84, %c5_85] : memref<1x1x4x512xbf16, #tpu.memory_space<vmem>>, vector<1x1x4x384xbf16>
    %73 = vector.shape_cast %72 : vector<1x1x4x384xbf16> to vector<4x384xbf16>
    %74 = arith.extf %73 : vector<4x384xbf16> to vector<4x384xf32>
    %c72 = arith.constant 72 : index
    %c0_86 = arith.constant 0 : index
    %75 = vector.load %arg9[%c72, %c0_86] : memref<108x384xf32, #tpu.memory_space<vmem>>, vector<4x384xf32>
    tpu.vector_store %arg9[%c72, %c0_86], %74 {strides = array<i32>} : memref<108x384xf32, #tpu.memory_space<vmem>>, vector<4x384xf32>,
    %c0_87 = arith.constant 0 : index
    %c0_88 = arith.constant 0 : index
    %c0_89 = arith.constant 0 : index
    %c6_90 = arith.constant 6 : index
    %76 = vector.load %arg4[%c0_87, %c0_88, %c0_89, %c6_90] : memref<1x1x4x512xbf16, #tpu.memory_space<vmem>>, vector<1x1x4x384xbf16>
    %77 = vector.shape_cast %76 : vector<1x1x4x384xbf16> to vector<4x384xbf16>
    %78 = arith.extf %77 : vector<4x384xbf16> to vector<4x384xf32>
    %c76 = arith.constant 76 : index
    %c0_91 = arith.constant 0 : index
    %79 = vector.load %arg9[%c76, %c0_91] : memref<108x384xf32, #tpu.memory_space<vmem>>, vector<4x384xf32>
    tpu.vector_store %arg9[%c76, %c0_91], %78 {strides = array<i32>} : memref<108x384xf32, #tpu.memory_space<vmem>>, vector<4x384xf32>,
    %c0_92 = arith.constant 0 : index
    %c0_93 = arith.constant 0 : index
    %c0_94 = arith.constant 0 : index
    %c7_95 = arith.constant 7 : index
    %80 = vector.load %arg4[%c0_92, %c0_93, %c0_94, %c7_95] : memref<1x1x4x512xbf16, #tpu.memory_space<vmem>>, vector<1x1x4x384xbf16>
    %81 = vector.shape_cast %80 : vector<1x1x4x384xbf16> to vector<4x384xbf16>
    %82 = arith.extf %81 : vector<4x384xbf16> to vector<4x384xf32>
    %c80 = arith.constant 80 : index
    %c0_96 = arith.constant 0 : index
    %83 = vector.load %arg9[%c80, %c0_96] : memref<108x384xf32, #tpu.memory_space<vmem>>, vector<4x384xf32>
    tpu.vector_store %arg9[%c80, %c0_96], %82 {strides = array<i32>} : memref<108x384xf32, #tpu.memory_space<vmem>>, vector<4x384xf32>,
    %c0_97 = arith.constant 0 : index
    %c0_98 = arith.constant 0 : index
    %c0_99 = arith.constant 0 : index
    %c23_100 = arith.constant 23 : index
    %84 = vector.load %arg4[%c0_97, %c0_98, %c0_99, %c23_100] : memref<1x1x4x512xbf16, #tpu.memory_space<vmem>>, vector<1x1x4x384xbf16>
    %85 = vector.shape_cast %84 : vector<1x1x4x384xbf16> to vector<4x384xbf16>
    %86 = arith.extf %85 : vector<4x384xbf16> to vector<4x384xf32>
    %c84 = arith.constant 84 : index
    %c0_101 = arith.constant 0 : index
    %87 = vector.load %arg9[%c84, %c0_101] : memref<108x384xf32, #tpu.memory_space<vmem>>, vector<4x384xf32>
    tpu.vector_store %arg9[%c84, %c0_101], %86 {strides = array<i32>} : memref<108x384xf32, #tpu.memory_space<vmem>>, vector<4x384xf32>,
    %c0_102 = arith.constant 0 : index
    %c0_103 = arith.constant 0 : index
    %c0_104 = arith.constant 0 : index
    %c24_105 = arith.constant 24 : index
    %88 = vector.load %arg4[%c0_102, %c0_103, %c0_104, %c24_105] : memref<1x1x4x512xbf16, #tpu.memory_space<vmem>>, vector<1x1x4x384xbf16>
    %89 = vector.shape_cast %88 : vector<1x1x4x384xbf16> to vector<4x384xbf16>
    %90 = arith.extf %89 : vector<4x384xbf16> to vector<4x384xf32>
    %c88 = arith.constant 88 : index
    %c0_106 = arith.constant 0 : index
    %91 = vector.load %arg9[%c88, %c0_106] : memref<108x384xf32, #tpu.memory_space<vmem>>, vector<4x384xf32>
    tpu.vector_store %arg9[%c88, %c0_106], %90 {strides = array<i32>} : memref<108x384xf32, #tpu.memory_space<vmem>>, vector<4x384xf32>,
    %c0_107 = arith.constant 0 : index
    %c0_108 = arith.constant 0 : index
    %c0_109 = arith.constant 0 : index
    %c25_110 = arith.constant 25 : index
    %92 = vector.load %arg4[%c0_107, %c0_108, %c0_109, %c25_110] : memref<1x1x4x512xbf16, #tpu.memory_space<vmem>>, vector<1x1x4x384xbf16>
    %93 = vector.shape_cast %92 : vector<1x1x4x384xbf16> to vector<4x384xbf16>
    %94 = arith.extf %93 : vector<4x384xbf16> to vector<4x384xf32>
    %c92 = arith.constant 92 : index
    %c0_111 = arith.constant 0 : index
    %95 = vector.load %arg9[%c92, %c0_111] : memref<108x384xf32, #tpu.memory_space<vmem>>, vector<4x384xf32>
    tpu.vector_store %arg9[%c92, %c0_111], %94 {strides = array<i32>} : memref<108x384xf32, #tpu.memory_space<vmem>>, vector<4x384xf32>,
    %c0_112 = arith.constant 0 : index
    %c0_113 = arith.constant 0 : index
    %c0_114 = arith.constant 0 : index
    %c41_115 = arith.constant 41 : index
    %96 = vector.load %arg4[%c0_112, %c0_113, %c0_114, %c41_115] : memref<1x1x4x512xbf16, #tpu.memory_space<vmem>>, vector<1x1x4x384xbf16>
    %97 = vector.shape_cast %96 : vector<1x1x4x384xbf16> to vector<4x384xbf16>
    %98 = arith.extf %97 : vector<4x384xbf16> to vector<4x384xf32>
    %c96 = arith.constant 96 : index
    %c0_116 = arith.constant 0 : index
    %99 = vector.load %arg9[%c96, %c0_116] : memref<108x384xf32, #tpu.memory_space<vmem>>, vector<4x384xf32>
    tpu.vector_store %arg9[%c96, %c0_116], %98 {strides = array<i32>} : memref<108x384xf32, #tpu.memory_space<vmem>>, vector<4x384xf32>,
    %c0_117 = arith.constant 0 : index
    %c0_118 = arith.constant 0 : index
    %c0_119 = arith.constant 0 : index
    %c42_120 = arith.constant 42 : index
    %100 = vector.load %arg4[%c0_117, %c0_118, %c0_119, %c42_120] : memref<1x1x4x512xbf16, #tpu.memory_space<vmem>>, vector<1x1x4x384xbf16>
    %101 = vector.shape_cast %100 : vector<1x1x4x384xbf16> to vector<4x384xbf16>
    %102 = arith.extf %101 : vector<4x384xbf16> to vector<4x384xf32>
    %c100 = arith.constant 100 : index
    %c0_121 = arith.constant 0 : index
    %103 = vector.load %arg9[%c100, %c0_121] : memref<108x384xf32, #tpu.memory_space<vmem>>, vector<4x384xf32>
    tpu.vector_store %arg9[%c100, %c0_121], %102 {strides = array<i32>} : memref<108x384xf32, #tpu.memory_space<vmem>>, vector<4x384xf32>,
    %c0_122 = arith.constant 0 : index
    %c0_123 = arith.constant 0 : index
    %c0_124 = arith.constant 0 : index
    %c43_125 = arith.constant 43 : index
    %104 = vector.load %arg4[%c0_122, %c0_123, %c0_124, %c43_125] : memref<1x1x4x512xbf16, #tpu.memory_space<vmem>>, vector<1x1x4x384xbf16>
    %105 = vector.shape_cast %104 : vector<1x1x4x384xbf16> to vector<4x384xbf16>
    %106 = arith.extf %105 : vector<4x384xbf16> to vector<4x384xf32>
    %c104 = arith.constant 104 : index
    %c0_126 = arith.constant 0 : index
    %107 = vector.load %arg9[%c104, %c0_126] : memref<108x384xf32, #tpu.memory_space<vmem>>, vector<4x384xf32>
    tpu.vector_store %arg9[%c104, %c0_126], %106 {strides = array<i32>} : memref<108x384xf32, #tpu.memory_space<vmem>>, vector<4x384xf32>,
    %c0_127 = arith.constant 0 : index
    %c0_128 = arith.constant 0 : index
    %108 = vector.load %arg5[%c0_127, %c0_128] : memref<4x108xf32, #tpu.memory_space<vmem>>, vector<4x108xf32>
    %c0_129 = arith.constant 0 : index
    %c0_130 = arith.constant 0 : index
    %109 = vector.load %arg9[%c0_129, %c0_130] : memref<108x384xf32, #tpu.memory_space<vmem>>, vector<108x384xf32>
    %cst = arith.constant dense<0.000000e+00> : vector<4x384xf32>
    %110 = tpu.matmul %108, %109, %cst {dimension_numbers = #tpu.dot_dimension_numbers<[1], [0], [0], [1], [0, 0, 1, 1], [], []>} : vector<4x108xf32>, vector<108x384xf32>, vector<4x384xf32> -> vector<4x384xf32>
    %c0_131 = arith.constant 0 : index
    %c0_132 = arith.constant 0 : index
    %c0_133 = arith.constant 0 : index
    %111 = vector.load %arg6[%c0_131, %c0_132, %c0_133] : memref<3x4x1xf32, #tpu.memory_space<vmem>>, vector<3x4x1xf32>
    %112 = vector.extract_strided_slice %111 {offsets = [0, 0, 0], sizes = [1, 4, 1], strides = [1, 1, 1]} : vector<3x4x1xf32> to vector<1x4x1xf32>
    %113 = vector.shape_cast %112 : vector<1x4x1xf32> to vector<4x1xf32>
    %114 = vector.broadcast %113 : vector<4x1xf32> to vector<4x384xf32>
    %115 = arith.addf %110, %114 : vector<4x384xf32>
    %cst_134 = arith.constant 0.000000e+00 : f32
    %116 = vector.broadcast %cst_134 : f32 to vector<4x384xf32>
    %117 = arith.maximumf %115, %116 : vector<4x384xf32>
    %118 = vector.extract_strided_slice %111 {offsets = [1, 0, 0], sizes = [1, 4, 1], strides = [1, 1, 1]} : vector<3x4x1xf32> to vector<1x4x1xf32>
    %119 = vector.shape_cast %118 : vector<1x4x1xf32> to vector<4x1xf32>
    %120 = vector.broadcast %119 : vector<4x1xf32> to vector<4x384xf32>
    %121 = arith.mulf %117, %120 : vector<4x384xf32>
    %122 = vector.extract_strided_slice %111 {offsets = [2, 0, 0], sizes = [1, 4, 1], strides = [1, 1, 1]} : vector<3x4x1xf32> to vector<1x4x1xf32>
    %123 = vector.shape_cast %122 : vector<1x4x1xf32> to vector<4x1xf32>
    %124 = vector.broadcast %123 : vector<4x1xf32> to vector<4x384xf32>
    %125 = arith.addf %121, %124 : vector<4x384xf32>
    %c0_135 = arith.constant 0 : index
    %c0_136 = arith.constant 0 : index
    %126 = vector.load %arg7[%c0_135, %c0_136] : memref<1x384xf32, #tpu.memory_space<vmem>>, vector<1x384xf32>
    %127 = vector.broadcast %126 : vector<1x384xf32> to vector<4x384xf32>
    %128 = arith.mulf %125, %127 : vector<4x384xf32>
    %129 = arith.truncf %128 : vector<4x384xf32> to vector<4x384xbf16>
    %c0_137 = arith.constant 0 : index
    %c0_138 = arith.constant 0 : index
    %c0_139 = arith.constant 0 : index
    %c0_140 = arith.constant 0 : index
    %130 = vector.load %arg8[%c0_137, %c0_138, %c0_139, %c0_140] : memref<1x1x4x384xbf16, #tpu.memory_space<vmem>>, vector<1x1x4x384xbf16>
    %131 = vector.shape_cast %130 : vector<1x1x4x384xbf16> to vector<4x384xbf16>
    %132 = vector.shape_cast %129 : vector<4x384xbf16> to vector<1x1x4x384xbf16>
    tpu.vector_store %arg8[%c0_137, %c0_138, %c0_139, %c0_140], %132 {strides = array<i32>} : memref<1x1x4x384xbf16, #tpu.memory_space<vmem>>, vector<1x1x4x384xbf16>,
    return
  }
  func.func @transform_0(%arg0: i32, %arg1: i32) -> (i32, i32, i32, i32) {
    %c0_i32 = arith.constant 0 : i32
    %c0_i32_0 = arith.constant 0 : i32
    %c0_i32_1 = arith.constant 0 : i32
    return %arg0, %arg1, %c0_i32, %c0_i32_0 : i32, i32, i32, i32
  }
  func.func @transform_1(%arg0: i32, %arg1: i32) -> (i32, i32, i32, i32) {
    %c1_i32 = arith.constant 1 : i32
    %0 = arith.addi %arg1, %c1_i32 : i32
    %c0_i32 = arith.constant 0 : i32
    %c0_i32_0 = arith.constant 0 : i32
    %c0_i32_1 = arith.constant 0 : i32
    return %arg0, %0, %c0_i32, %c0_i32_0 : i32, i32, i32, i32
  }
  func.func @transform_2(%arg0: i32, %arg1: i32) -> (i32, i32, i32, i32) {
    %c2_i32 = arith.constant 2 : i32
    %0 = arith.addi %arg1, %c2_i32 : i32
    %c0_i32 = arith.constant 0 : i32
    %c0_i32_0 = arith.constant 0 : i32
    %c0_i32_1 = arith.constant 0 : i32
    return %arg0, %0, %c0_i32, %c0_i32_0 : i32, i32, i32, i32
  }
  func.func @transform_3(%arg0: i32, %arg1: i32) -> (i32, i32) {
    %c0_i32 = arith.constant 0 : i32
    %c0_i32_0 = arith.constant 0 : i32
    %c0_i32_1 = arith.constant 0 : i32
    return %c0_i32, %c0_i32_0 : i32, i32
  }
  func.func @transform_4(%arg0: i32, %arg1: i32) -> (i32, i32, i32) {
    %c0_i32 = arith.constant 0 : i32
    %c0_i32_0 = arith.constant 0 : i32
    %c0_i32_1 = arith.constant 0 : i32
    %c0_i32_2 = arith.constant 0 : i32
    return %c0_i32, %c0_i32_0, %c0_i32_1 : i32, i32, i32
  }
  func.func @transform_5(%arg0: i32, %arg1: i32) -> (i32, i32) {
    %c0_i32 = arith.constant 0 : i32
    %c0_i32_0 = arith.constant 0 : i32
    %c0_i32_1 = arith.constant 0 : i32
    return %c0_i32, %c0_i32_0 : i32, i32
  }
  func.func @transform_6(%arg0: i32, %arg1: i32) -> (i32, i32, i32, i32) {
    %c0_i32 = arith.constant 0 : i32
    %c0_i32_0 = arith.constant 0 : i32
    %c0_i32_1 = arith.constant 0 : i32
    return %arg0, %arg1, %c0_i32, %c0_i32_0 : i32, i32, i32, i32
  }
}

module attributes {stable_mosaic.version = 11 : i64} {
  func.func @kernel(%arg0: i32, %arg1: i32, %arg2: memref<1x1x8x4x256xbf16, #tpu.memory_space<vmem>>, %arg3: memref<1x1x8x4x256xbf16, #tpu.memory_space<vmem>>, %arg4: memref<1x1x8x4x256xbf16, #tpu.memory_space<vmem>>, %arg5: memref<1x1x8x4x256xbf16, #tpu.memory_space<vmem>>, %arg6: memref<8x108xf32, #tpu.memory_space<vmem>>, %arg7: memref<8x108xf32, #tpu.memory_space<vmem>>, %arg8: memref<3x8x1xf32, #tpu.memory_space<vmem>>, %arg9: memref<3x8x1xf32, #tpu.memory_space<vmem>>, %arg10: memref<1x1x8x128xf32, #tpu.memory_space<vmem>>, %arg11: memref<108x128xf32, #tpu.memory_space<vmem>>) attributes {dimension_semantics = [#tpu.dimension_semantics<parallel>, #tpu.dimension_semantics<parallel>], iteration_bounds = array<i64: 2, 8>, scalar_prefetch = 0 : i64, scratch_operands = 1 : i64, tpu.core_type = #tpu.core_type<tc>, window_params = [{transform_indices = @transform_0, window_bounds = array<i64: 1, 1, 8, 4, 256>}, {transform_indices = @transform_1, window_bounds = array<i64: 1, 1, 8, 4, 256>}, {transform_indices = @transform_2, window_bounds = array<i64: 1, 1, 8, 4, 256>}, {transform_indices = @transform_3, window_bounds = array<i64: 1, 1, 8, 4, 256>}, {pipeline_mode = #tpu.pipeline_mode<synchronous>, transform_indices = @transform_4, window_bounds = array<i64: 8, 108>}, {pipeline_mode = #tpu.pipeline_mode<synchronous>, transform_indices = @transform_5, window_bounds = array<i64: 8, 108>}, {pipeline_mode = #tpu.pipeline_mode<synchronous>, transform_indices = @transform_6, window_bounds = array<i64: 3, 8, 1>}, {pipeline_mode = #tpu.pipeline_mode<synchronous>, transform_indices = @transform_7, window_bounds = array<i64: 3, 8, 1>}, {transform_indices = @transform_8, window_bounds = array<i64: 1, 1, 8, 128>}]} {
    %c0 = arith.constant 0 : index
    %c0_0 = arith.constant 0 : index
    %c0_1 = arith.constant 0 : index
    %c0_2 = arith.constant 0 : index
    %c0_3 = arith.constant 0 : index
    %0 = vector.load %arg2[%c0, %c0_0, %c0_1, %c0_2, %c0_3] : memref<1x1x8x4x256xbf16, #tpu.memory_space<vmem>>, vector<1x1x1x4x128xbf16>
    %1 = vector.shape_cast %0 : vector<1x1x1x4x128xbf16> to vector<4x128xbf16>
    %2 = arith.extf %1 : vector<4x128xbf16> to vector<4x128xf32>
    %c0_4 = arith.constant 0 : index
    %c0_5 = arith.constant 0 : index
    %3 = vector.load %arg11[%c0_4, %c0_5] : memref<108x128xf32, #tpu.memory_space<vmem>>, vector<4x128xf32>
    tpu.vector_store %arg11[%c0_4, %c0_5], %2 {strides = array<i32>} : memref<108x128xf32, #tpu.memory_space<vmem>>, vector<4x128xf32>,
    %c0_6 = arith.constant 0 : index
    %c0_7 = arith.constant 0 : index
    %c1 = arith.constant 1 : index
    %c0_8 = arith.constant 0 : index
    %c0_9 = arith.constant 0 : index
    %4 = vector.load %arg2[%c0_6, %c0_7, %c1, %c0_8, %c0_9] : memref<1x1x8x4x256xbf16, #tpu.memory_space<vmem>>, vector<1x1x1x4x128xbf16>
    %5 = vector.shape_cast %4 : vector<1x1x1x4x128xbf16> to vector<4x128xbf16>
    %6 = arith.extf %5 : vector<4x128xbf16> to vector<4x128xf32>
    %c4 = arith.constant 4 : index
    %c0_10 = arith.constant 0 : index
    %7 = vector.load %arg11[%c4, %c0_10] : memref<108x128xf32, #tpu.memory_space<vmem>>, vector<4x128xf32>
    tpu.vector_store %arg11[%c4, %c0_10], %6 {strides = array<i32>} : memref<108x128xf32, #tpu.memory_space<vmem>>, vector<4x128xf32>,
    %c0_11 = arith.constant 0 : index
    %c0_12 = arith.constant 0 : index
    %c0_13 = arith.constant 0 : index
    %c0_14 = arith.constant 0 : index
    %c1_15 = arith.constant 1 : index
    %8 = vector.load %arg2[%c0_11, %c0_12, %c0_13, %c0_14, %c1_15] : memref<1x1x8x4x256xbf16, #tpu.memory_space<vmem>>, vector<1x1x1x4x128xbf16>
    %9 = vector.shape_cast %8 : vector<1x1x1x4x128xbf16> to vector<4x128xbf16>
    %10 = arith.extf %9 : vector<4x128xbf16> to vector<4x128xf32>
    %c8 = arith.constant 8 : index
    %c0_16 = arith.constant 0 : index
    %11 = vector.load %arg11[%c8, %c0_16] : memref<108x128xf32, #tpu.memory_space<vmem>>, vector<4x128xf32>
    tpu.vector_store %arg11[%c8, %c0_16], %10 {strides = array<i32>} : memref<108x128xf32, #tpu.memory_space<vmem>>, vector<4x128xf32>,
    %c0_17 = arith.constant 0 : index
    %c0_18 = arith.constant 0 : index
    %c2 = arith.constant 2 : index
    %c0_19 = arith.constant 0 : index
    %c0_20 = arith.constant 0 : index
    %12 = vector.load %arg2[%c0_17, %c0_18, %c2, %c0_19, %c0_20] : memref<1x1x8x4x256xbf16, #tpu.memory_space<vmem>>, vector<1x1x1x4x128xbf16>
    %13 = vector.shape_cast %12 : vector<1x1x1x4x128xbf16> to vector<4x128xbf16>
    %14 = arith.extf %13 : vector<4x128xbf16> to vector<4x128xf32>
    %c12 = arith.constant 12 : index
    %c0_21 = arith.constant 0 : index
    %15 = vector.load %arg11[%c12, %c0_21] : memref<108x128xf32, #tpu.memory_space<vmem>>, vector<4x128xf32>
    tpu.vector_store %arg11[%c12, %c0_21], %14 {strides = array<i32>} : memref<108x128xf32, #tpu.memory_space<vmem>>, vector<4x128xf32>,
    %c0_22 = arith.constant 0 : index
    %c0_23 = arith.constant 0 : index
    %c3 = arith.constant 3 : index
    %c0_24 = arith.constant 0 : index
    %c0_25 = arith.constant 0 : index
    %16 = vector.load %arg2[%c0_22, %c0_23, %c3, %c0_24, %c0_25] : memref<1x1x8x4x256xbf16, #tpu.memory_space<vmem>>, vector<1x1x1x4x128xbf16>
    %17 = vector.shape_cast %16 : vector<1x1x1x4x128xbf16> to vector<4x128xbf16>
    %18 = arith.extf %17 : vector<4x128xbf16> to vector<4x128xf32>
    %c16 = arith.constant 16 : index
    %c0_26 = arith.constant 0 : index
    %19 = vector.load %arg11[%c16, %c0_26] : memref<108x128xf32, #tpu.memory_space<vmem>>, vector<4x128xf32>
    tpu.vector_store %arg11[%c16, %c0_26], %18 {strides = array<i32>} : memref<108x128xf32, #tpu.memory_space<vmem>>, vector<4x128xf32>,
    %c0_27 = arith.constant 0 : index
    %c0_28 = arith.constant 0 : index
    %c2_29 = arith.constant 2 : index
    %c0_30 = arith.constant 0 : index
    %c1_31 = arith.constant 1 : index
    %20 = vector.load %arg2[%c0_27, %c0_28, %c2_29, %c0_30, %c1_31] : memref<1x1x8x4x256xbf16, #tpu.memory_space<vmem>>, vector<1x1x1x4x128xbf16>
    %21 = vector.shape_cast %20 : vector<1x1x1x4x128xbf16> to vector<4x128xbf16>
    %22 = arith.extf %21 : vector<4x128xbf16> to vector<4x128xf32>
    %c20 = arith.constant 20 : index
    %c0_32 = arith.constant 0 : index
    %23 = vector.load %arg11[%c20, %c0_32] : memref<108x128xf32, #tpu.memory_space<vmem>>, vector<4x128xf32>
    tpu.vector_store %arg11[%c20, %c0_32], %22 {strides = array<i32>} : memref<108x128xf32, #tpu.memory_space<vmem>>, vector<4x128xf32>,
    %c0_33 = arith.constant 0 : index
    %c0_34 = arith.constant 0 : index
    %c0_35 = arith.constant 0 : index
    %c0_36 = arith.constant 0 : index
    %c9 = arith.constant 9 : index
    %24 = vector.load %arg2[%c0_33, %c0_34, %c0_35, %c0_36, %c9] : memref<1x1x8x4x256xbf16, #tpu.memory_space<vmem>>, vector<1x1x1x4x128xbf16>
    %25 = vector.shape_cast %24 : vector<1x1x1x4x128xbf16> to vector<4x128xbf16>
    %26 = arith.extf %25 : vector<4x128xbf16> to vector<4x128xf32>
    %c24 = arith.constant 24 : index
    %c0_37 = arith.constant 0 : index
    %27 = vector.load %arg11[%c24, %c0_37] : memref<108x128xf32, #tpu.memory_space<vmem>>, vector<4x128xf32>
    tpu.vector_store %arg11[%c24, %c0_37], %26 {strides = array<i32>} : memref<108x128xf32, #tpu.memory_space<vmem>>, vector<4x128xf32>,
    %c0_38 = arith.constant 0 : index
    %c0_39 = arith.constant 0 : index
    %c1_40 = arith.constant 1 : index
    %c0_41 = arith.constant 0 : index
    %c9_42 = arith.constant 9 : index
    %28 = vector.load %arg2[%c0_38, %c0_39, %c1_40, %c0_41, %c9_42] : memref<1x1x8x4x256xbf16, #tpu.memory_space<vmem>>, vector<1x1x1x4x128xbf16>
    %29 = vector.shape_cast %28 : vector<1x1x1x4x128xbf16> to vector<4x128xbf16>
    %30 = arith.extf %29 : vector<4x128xbf16> to vector<4x128xf32>
    %c28 = arith.constant 28 : index
    %c0_43 = arith.constant 0 : index
    %31 = vector.load %arg11[%c28, %c0_43] : memref<108x128xf32, #tpu.memory_space<vmem>>, vector<4x128xf32>
    tpu.vector_store %arg11[%c28, %c0_43], %30 {strides = array<i32>} : memref<108x128xf32, #tpu.memory_space<vmem>>, vector<4x128xf32>,
    %c0_44 = arith.constant 0 : index
    %c0_45 = arith.constant 0 : index
    %c0_46 = arith.constant 0 : index
    %c0_47 = arith.constant 0 : index
    %c10 = arith.constant 10 : index
    %32 = vector.load %arg2[%c0_44, %c0_45, %c0_46, %c0_47, %c10] : memref<1x1x8x4x256xbf16, #tpu.memory_space<vmem>>, vector<1x1x1x4x128xbf16>
    %33 = vector.shape_cast %32 : vector<1x1x1x4x128xbf16> to vector<4x128xbf16>
    %34 = arith.extf %33 : vector<4x128xbf16> to vector<4x128xf32>
    %c32 = arith.constant 32 : index
    %c0_48 = arith.constant 0 : index
    %35 = vector.load %arg11[%c32, %c0_48] : memref<108x128xf32, #tpu.memory_space<vmem>>, vector<4x128xf32>
    tpu.vector_store %arg11[%c32, %c0_48], %34 {strides = array<i32>} : memref<108x128xf32, #tpu.memory_space<vmem>>, vector<4x128xf32>,
    %c0_49 = arith.constant 0 : index
    %c0_50 = arith.constant 0 : index
    %c4_51 = arith.constant 4 : index
    %c0_52 = arith.constant 0 : index
    %c0_53 = arith.constant 0 : index
    %36 = vector.load %arg2[%c0_49, %c0_50, %c4_51, %c0_52, %c0_53] : memref<1x1x8x4x256xbf16, #tpu.memory_space<vmem>>, vector<1x1x1x4x128xbf16>
    %37 = vector.shape_cast %36 : vector<1x1x1x4x128xbf16> to vector<4x128xbf16>
    %38 = arith.extf %37 : vector<4x128xbf16> to vector<4x128xf32>
    %c36 = arith.constant 36 : index
    %c0_54 = arith.constant 0 : index
    %39 = vector.load %arg11[%c36, %c0_54] : memref<108x128xf32, #tpu.memory_space<vmem>>, vector<4x128xf32>
    tpu.vector_store %arg11[%c36, %c0_54], %38 {strides = array<i32>} : memref<108x128xf32, #tpu.memory_space<vmem>>, vector<4x128xf32>,
    %c0_55 = arith.constant 0 : index
    %c0_56 = arith.constant 0 : index
    %c5 = arith.constant 5 : index
    %c0_57 = arith.constant 0 : index
    %c0_58 = arith.constant 0 : index
    %40 = vector.load %arg2[%c0_55, %c0_56, %c5, %c0_57, %c0_58] : memref<1x1x8x4x256xbf16, #tpu.memory_space<vmem>>, vector<1x1x1x4x128xbf16>
    %41 = vector.shape_cast %40 : vector<1x1x1x4x128xbf16> to vector<4x128xbf16>
    %42 = arith.extf %41 : vector<4x128xbf16> to vector<4x128xf32>
    %c40 = arith.constant 40 : index
    %c0_59 = arith.constant 0 : index
    %43 = vector.load %arg11[%c40, %c0_59] : memref<108x128xf32, #tpu.memory_space<vmem>>, vector<4x128xf32>
    tpu.vector_store %arg11[%c40, %c0_59], %42 {strides = array<i32>} : memref<108x128xf32, #tpu.memory_space<vmem>>, vector<4x128xf32>,
    %c0_60 = arith.constant 0 : index
    %c0_61 = arith.constant 0 : index
    %c4_62 = arith.constant 4 : index
    %c0_63 = arith.constant 0 : index
    %c1_64 = arith.constant 1 : index
    %44 = vector.load %arg2[%c0_60, %c0_61, %c4_62, %c0_63, %c1_64] : memref<1x1x8x4x256xbf16, #tpu.memory_space<vmem>>, vector<1x1x1x4x128xbf16>
    %45 = vector.shape_cast %44 : vector<1x1x1x4x128xbf16> to vector<4x128xbf16>
    %46 = arith.extf %45 : vector<4x128xbf16> to vector<4x128xf32>
    %c44 = arith.constant 44 : index
    %c0_65 = arith.constant 0 : index
    %47 = vector.load %arg11[%c44, %c0_65] : memref<108x128xf32, #tpu.memory_space<vmem>>, vector<4x128xf32>
    tpu.vector_store %arg11[%c44, %c0_65], %46 {strides = array<i32>} : memref<108x128xf32, #tpu.memory_space<vmem>>, vector<4x128xf32>,
    %c0_66 = arith.constant 0 : index
    %c0_67 = arith.constant 0 : index
    %c6 = arith.constant 6 : index
    %c0_68 = arith.constant 0 : index
    %c0_69 = arith.constant 0 : index
    %48 = vector.load %arg2[%c0_66, %c0_67, %c6, %c0_68, %c0_69] : memref<1x1x8x4x256xbf16, #tpu.memory_space<vmem>>, vector<1x1x1x4x128xbf16>
    %49 = vector.shape_cast %48 : vector<1x1x1x4x128xbf16> to vector<4x128xbf16>
    %50 = arith.extf %49 : vector<4x128xbf16> to vector<4x128xf32>
    %c48 = arith.constant 48 : index
    %c0_70 = arith.constant 0 : index
    %51 = vector.load %arg11[%c48, %c0_70] : memref<108x128xf32, #tpu.memory_space<vmem>>, vector<4x128xf32>
    tpu.vector_store %arg11[%c48, %c0_70], %50 {strides = array<i32>} : memref<108x128xf32, #tpu.memory_space<vmem>>, vector<4x128xf32>,
    %c0_71 = arith.constant 0 : index
    %c0_72 = arith.constant 0 : index
    %c7 = arith.constant 7 : index
    %c0_73 = arith.constant 0 : index
    %c0_74 = arith.constant 0 : index
    %52 = vector.load %arg2[%c0_71, %c0_72, %c7, %c0_73, %c0_74] : memref<1x1x8x4x256xbf16, #tpu.memory_space<vmem>>, vector<1x1x1x4x128xbf16>
    %53 = vector.shape_cast %52 : vector<1x1x1x4x128xbf16> to vector<4x128xbf16>
    %54 = arith.extf %53 : vector<4x128xbf16> to vector<4x128xf32>
    %c52 = arith.constant 52 : index
    %c0_75 = arith.constant 0 : index
    %55 = vector.load %arg11[%c52, %c0_75] : memref<108x128xf32, #tpu.memory_space<vmem>>, vector<4x128xf32>
    tpu.vector_store %arg11[%c52, %c0_75], %54 {strides = array<i32>} : memref<108x128xf32, #tpu.memory_space<vmem>>, vector<4x128xf32>,
    %c0_76 = arith.constant 0 : index
    %c0_77 = arith.constant 0 : index
    %c6_78 = arith.constant 6 : index
    %c0_79 = arith.constant 0 : index
    %c1_80 = arith.constant 1 : index
    %56 = vector.load %arg2[%c0_76, %c0_77, %c6_78, %c0_79, %c1_80] : memref<1x1x8x4x256xbf16, #tpu.memory_space<vmem>>, vector<1x1x1x4x128xbf16>
    %57 = vector.shape_cast %56 : vector<1x1x1x4x128xbf16> to vector<4x128xbf16>
    %58 = arith.extf %57 : vector<4x128xbf16> to vector<4x128xf32>
    %c56 = arith.constant 56 : index
    %c0_81 = arith.constant 0 : index
    %59 = vector.load %arg11[%c56, %c0_81] : memref<108x128xf32, #tpu.memory_space<vmem>>, vector<4x128xf32>
    tpu.vector_store %arg11[%c56, %c0_81], %58 {strides = array<i32>} : memref<108x128xf32, #tpu.memory_space<vmem>>, vector<4x128xf32>,
    %c0_82 = arith.constant 0 : index
    %c0_83 = arith.constant 0 : index
    %c4_84 = arith.constant 4 : index
    %c0_85 = arith.constant 0 : index
    %c9_86 = arith.constant 9 : index
    %60 = vector.load %arg2[%c0_82, %c0_83, %c4_84, %c0_85, %c9_86] : memref<1x1x8x4x256xbf16, #tpu.memory_space<vmem>>, vector<1x1x1x4x128xbf16>
    %61 = vector.shape_cast %60 : vector<1x1x1x4x128xbf16> to vector<4x128xbf16>
    %62 = arith.extf %61 : vector<4x128xbf16> to vector<4x128xf32>
    %c60 = arith.constant 60 : index
    %c0_87 = arith.constant 0 : index
    %63 = vector.load %arg11[%c60, %c0_87] : memref<108x128xf32, #tpu.memory_space<vmem>>, vector<4x128xf32>
    tpu.vector_store %arg11[%c60, %c0_87], %62 {strides = array<i32>} : memref<108x128xf32, #tpu.memory_space<vmem>>, vector<4x128xf32>,
    %c0_88 = arith.constant 0 : index
    %c0_89 = arith.constant 0 : index
    %c5_90 = arith.constant 5 : index
    %c0_91 = arith.constant 0 : index
    %c9_92 = arith.constant 9 : index
    %64 = vector.load %arg2[%c0_88, %c0_89, %c5_90, %c0_91, %c9_92] : memref<1x1x8x4x256xbf16, #tpu.memory_space<vmem>>, vector<1x1x1x4x128xbf16>
    %65 = vector.shape_cast %64 : vector<1x1x1x4x128xbf16> to vector<4x128xbf16>
    %66 = arith.extf %65 : vector<4x128xbf16> to vector<4x128xf32>
    %c64 = arith.constant 64 : index
    %c0_93 = arith.constant 0 : index
    %67 = vector.load %arg11[%c64, %c0_93] : memref<108x128xf32, #tpu.memory_space<vmem>>, vector<4x128xf32>
    tpu.vector_store %arg11[%c64, %c0_93], %66 {strides = array<i32>} : memref<108x128xf32, #tpu.memory_space<vmem>>, vector<4x128xf32>,
    %c0_94 = arith.constant 0 : index
    %c0_95 = arith.constant 0 : index
    %c4_96 = arith.constant 4 : index
    %c0_97 = arith.constant 0 : index
    %c10_98 = arith.constant 10 : index
    %68 = vector.load %arg2[%c0_94, %c0_95, %c4_96, %c0_97, %c10_98] : memref<1x1x8x4x256xbf16, #tpu.memory_space<vmem>>, vector<1x1x1x4x128xbf16>
    %69 = vector.shape_cast %68 : vector<1x1x1x4x128xbf16> to vector<4x128xbf16>
    %70 = arith.extf %69 : vector<4x128xbf16> to vector<4x128xf32>
    %c68 = arith.constant 68 : index
    %c0_99 = arith.constant 0 : index
    %71 = vector.load %arg11[%c68, %c0_99] : memref<108x128xf32, #tpu.memory_space<vmem>>, vector<4x128xf32>
    tpu.vector_store %arg11[%c68, %c0_99], %70 {strides = array<i32>} : memref<108x128xf32, #tpu.memory_space<vmem>>, vector<4x128xf32>,
    %c0_100 = arith.constant 0 : index
    %c0_101 = arith.constant 0 : index
    %c0_102 = arith.constant 0 : index
    %c0_103 = arith.constant 0 : index
    %c0_104 = arith.constant 0 : index
    %72 = vector.load %arg3[%c0_100, %c0_101, %c0_102, %c0_103, %c0_104] : memref<1x1x8x4x256xbf16, #tpu.memory_space<vmem>>, vector<1x1x1x4x128xbf16>
    %73 = vector.shape_cast %72 : vector<1x1x1x4x128xbf16> to vector<4x128xbf16>
    %74 = arith.extf %73 : vector<4x128xbf16> to vector<4x128xf32>
    %c72 = arith.constant 72 : index
    %c0_105 = arith.constant 0 : index
    %75 = vector.load %arg11[%c72, %c0_105] : memref<108x128xf32, #tpu.memory_space<vmem>>, vector<4x128xf32>
    tpu.vector_store %arg11[%c72, %c0_105], %74 {strides = array<i32>} : memref<108x128xf32, #tpu.memory_space<vmem>>, vector<4x128xf32>,
    %c0_106 = arith.constant 0 : index
    %c0_107 = arith.constant 0 : index
    %c1_108 = arith.constant 1 : index
    %c0_109 = arith.constant 0 : index
    %c0_110 = arith.constant 0 : index
    %76 = vector.load %arg3[%c0_106, %c0_107, %c1_108, %c0_109, %c0_110] : memref<1x1x8x4x256xbf16, #tpu.memory_space<vmem>>, vector<1x1x1x4x128xbf16>
    %77 = vector.shape_cast %76 : vector<1x1x1x4x128xbf16> to vector<4x128xbf16>
    %78 = arith.extf %77 : vector<4x128xbf16> to vector<4x128xf32>
    %c76 = arith.constant 76 : index
    %c0_111 = arith.constant 0 : index
    %79 = vector.load %arg11[%c76, %c0_111] : memref<108x128xf32, #tpu.memory_space<vmem>>, vector<4x128xf32>
    tpu.vector_store %arg11[%c76, %c0_111], %78 {strides = array<i32>} : memref<108x128xf32, #tpu.memory_space<vmem>>, vector<4x128xf32>,
    %c0_112 = arith.constant 0 : index
    %c0_113 = arith.constant 0 : index
    %c0_114 = arith.constant 0 : index
    %c0_115 = arith.constant 0 : index
    %c1_116 = arith.constant 1 : index
    %80 = vector.load %arg3[%c0_112, %c0_113, %c0_114, %c0_115, %c1_116] : memref<1x1x8x4x256xbf16, #tpu.memory_space<vmem>>, vector<1x1x1x4x128xbf16>
    %81 = vector.shape_cast %80 : vector<1x1x1x4x128xbf16> to vector<4x128xbf16>
    %82 = arith.extf %81 : vector<4x128xbf16> to vector<4x128xf32>
    %c80 = arith.constant 80 : index
    %c0_117 = arith.constant 0 : index
    %83 = vector.load %arg11[%c80, %c0_117] : memref<108x128xf32, #tpu.memory_space<vmem>>, vector<4x128xf32>
    tpu.vector_store %arg11[%c80, %c0_117], %82 {strides = array<i32>} : memref<108x128xf32, #tpu.memory_space<vmem>>, vector<4x128xf32>,
    %c0_118 = arith.constant 0 : index
    %c0_119 = arith.constant 0 : index
    %c2_120 = arith.constant 2 : index
    %c0_121 = arith.constant 0 : index
    %c0_122 = arith.constant 0 : index
    %84 = vector.load %arg3[%c0_118, %c0_119, %c2_120, %c0_121, %c0_122] : memref<1x1x8x4x256xbf16, #tpu.memory_space<vmem>>, vector<1x1x1x4x128xbf16>
    %85 = vector.shape_cast %84 : vector<1x1x1x4x128xbf16> to vector<4x128xbf16>
    %86 = arith.extf %85 : vector<4x128xbf16> to vector<4x128xf32>
    %c84 = arith.constant 84 : index
    %c0_123 = arith.constant 0 : index
    %87 = vector.load %arg11[%c84, %c0_123] : memref<108x128xf32, #tpu.memory_space<vmem>>, vector<4x128xf32>
    tpu.vector_store %arg11[%c84, %c0_123], %86 {strides = array<i32>} : memref<108x128xf32, #tpu.memory_space<vmem>>, vector<4x128xf32>,
    %c0_124 = arith.constant 0 : index
    %c0_125 = arith.constant 0 : index
    %c3_126 = arith.constant 3 : index
    %c0_127 = arith.constant 0 : index
    %c0_128 = arith.constant 0 : index
    %88 = vector.load %arg3[%c0_124, %c0_125, %c3_126, %c0_127, %c0_128] : memref<1x1x8x4x256xbf16, #tpu.memory_space<vmem>>, vector<1x1x1x4x128xbf16>
    %89 = vector.shape_cast %88 : vector<1x1x1x4x128xbf16> to vector<4x128xbf16>
    %90 = arith.extf %89 : vector<4x128xbf16> to vector<4x128xf32>
    %c88 = arith.constant 88 : index
    %c0_129 = arith.constant 0 : index
    %91 = vector.load %arg11[%c88, %c0_129] : memref<108x128xf32, #tpu.memory_space<vmem>>, vector<4x128xf32>
    tpu.vector_store %arg11[%c88, %c0_129], %90 {strides = array<i32>} : memref<108x128xf32, #tpu.memory_space<vmem>>, vector<4x128xf32>,
    %c0_130 = arith.constant 0 : index
    %c0_131 = arith.constant 0 : index
    %c2_132 = arith.constant 2 : index
    %c0_133 = arith.constant 0 : index
    %c1_134 = arith.constant 1 : index
    %92 = vector.load %arg3[%c0_130, %c0_131, %c2_132, %c0_133, %c1_134] : memref<1x1x8x4x256xbf16, #tpu.memory_space<vmem>>, vector<1x1x1x4x128xbf16>
    %93 = vector.shape_cast %92 : vector<1x1x1x4x128xbf16> to vector<4x128xbf16>
    %94 = arith.extf %93 : vector<4x128xbf16> to vector<4x128xf32>
    %c92 = arith.constant 92 : index
    %c0_135 = arith.constant 0 : index
    %95 = vector.load %arg11[%c92, %c0_135] : memref<108x128xf32, #tpu.memory_space<vmem>>, vector<4x128xf32>
    tpu.vector_store %arg11[%c92, %c0_135], %94 {strides = array<i32>} : memref<108x128xf32, #tpu.memory_space<vmem>>, vector<4x128xf32>,
    %c0_136 = arith.constant 0 : index
    %c0_137 = arith.constant 0 : index
    %c0_138 = arith.constant 0 : index
    %c0_139 = arith.constant 0 : index
    %c9_140 = arith.constant 9 : index
    %96 = vector.load %arg3[%c0_136, %c0_137, %c0_138, %c0_139, %c9_140] : memref<1x1x8x4x256xbf16, #tpu.memory_space<vmem>>, vector<1x1x1x4x128xbf16>
    %97 = vector.shape_cast %96 : vector<1x1x1x4x128xbf16> to vector<4x128xbf16>
    %98 = arith.extf %97 : vector<4x128xbf16> to vector<4x128xf32>
    %c96 = arith.constant 96 : index
    %c0_141 = arith.constant 0 : index
    %99 = vector.load %arg11[%c96, %c0_141] : memref<108x128xf32, #tpu.memory_space<vmem>>, vector<4x128xf32>
    tpu.vector_store %arg11[%c96, %c0_141], %98 {strides = array<i32>} : memref<108x128xf32, #tpu.memory_space<vmem>>, vector<4x128xf32>,
    %c0_142 = arith.constant 0 : index
    %c0_143 = arith.constant 0 : index
    %c1_144 = arith.constant 1 : index
    %c0_145 = arith.constant 0 : index
    %c9_146 = arith.constant 9 : index
    %100 = vector.load %arg3[%c0_142, %c0_143, %c1_144, %c0_145, %c9_146] : memref<1x1x8x4x256xbf16, #tpu.memory_space<vmem>>, vector<1x1x1x4x128xbf16>
    %101 = vector.shape_cast %100 : vector<1x1x1x4x128xbf16> to vector<4x128xbf16>
    %102 = arith.extf %101 : vector<4x128xbf16> to vector<4x128xf32>
    %c100 = arith.constant 100 : index
    %c0_147 = arith.constant 0 : index
    %103 = vector.load %arg11[%c100, %c0_147] : memref<108x128xf32, #tpu.memory_space<vmem>>, vector<4x128xf32>
    tpu.vector_store %arg11[%c100, %c0_147], %102 {strides = array<i32>} : memref<108x128xf32, #tpu.memory_space<vmem>>, vector<4x128xf32>,
    %c0_148 = arith.constant 0 : index
    %c0_149 = arith.constant 0 : index
    %c0_150 = arith.constant 0 : index
    %c0_151 = arith.constant 0 : index
    %c10_152 = arith.constant 10 : index
    %104 = vector.load %arg3[%c0_148, %c0_149, %c0_150, %c0_151, %c10_152] : memref<1x1x8x4x256xbf16, #tpu.memory_space<vmem>>, vector<1x1x1x4x128xbf16>
    %105 = vector.shape_cast %104 : vector<1x1x1x4x128xbf16> to vector<4x128xbf16>
    %106 = arith.extf %105 : vector<4x128xbf16> to vector<4x128xf32>
    %c104 = arith.constant 104 : index
    %c0_153 = arith.constant 0 : index
    %107 = vector.load %arg11[%c104, %c0_153] : memref<108x128xf32, #tpu.memory_space<vmem>>, vector<4x128xf32>
    tpu.vector_store %arg11[%c104, %c0_153], %106 {strides = array<i32>} : memref<108x128xf32, #tpu.memory_space<vmem>>, vector<4x128xf32>,
    %c0_154 = arith.constant 0 : index
    %c0_155 = arith.constant 0 : index
    %108 = vector.load %arg6[%c0_154, %c0_155] : memref<8x108xf32, #tpu.memory_space<vmem>>, vector<8x108xf32>
    %c0_156 = arith.constant 0 : index
    %c0_157 = arith.constant 0 : index
    %109 = vector.load %arg11[%c0_156, %c0_157] : memref<108x128xf32, #tpu.memory_space<vmem>>, vector<108x128xf32>
    %cst = arith.constant dense<0.000000e+00> : vector<8x128xf32>
    %110 = tpu.matmul %108, %109, %cst {dimension_numbers = #tpu.dot_dimension_numbers<[1], [0], [0], [1], [0, 0, 1, 1], [], []>} : vector<8x108xf32>, vector<108x128xf32>, vector<8x128xf32> -> vector<8x128xf32>
    %c0_158 = arith.constant 0 : index
    %c0_159 = arith.constant 0 : index
    %c0_160 = arith.constant 0 : index
    %111 = vector.load %arg8[%c0_158, %c0_159, %c0_160] : memref<3x8x1xf32, #tpu.memory_space<vmem>>, vector<3x8x1xf32>
    %112 = vector.extract_strided_slice %111 {offsets = [0, 0, 0], sizes = [1, 8, 1], strides = [1, 1, 1]} : vector<3x8x1xf32> to vector<1x8x1xf32>
    %113 = vector.shape_cast %112 : vector<1x8x1xf32> to vector<8x1xf32>
    %114 = vector.broadcast %113 : vector<8x1xf32> to vector<8x128xf32>
    %115 = arith.addf %110, %114 : vector<8x128xf32>
    %cst_161 = arith.constant 0.000000e+00 : f32
    %116 = vector.broadcast %cst_161 : f32 to vector<8x128xf32>
    %117 = arith.maximumf %115, %116 : vector<8x128xf32>
    %118 = vector.extract_strided_slice %111 {offsets = [1, 0, 0], sizes = [1, 8, 1], strides = [1, 1, 1]} : vector<3x8x1xf32> to vector<1x8x1xf32>
    %119 = vector.shape_cast %118 : vector<1x8x1xf32> to vector<8x1xf32>
    %120 = vector.broadcast %119 : vector<8x1xf32> to vector<8x128xf32>
    %121 = arith.mulf %117, %120 : vector<8x128xf32>
    %122 = vector.extract_strided_slice %111 {offsets = [2, 0, 0], sizes = [1, 8, 1], strides = [1, 1, 1]} : vector<3x8x1xf32> to vector<1x8x1xf32>
    %123 = vector.shape_cast %122 : vector<1x8x1xf32> to vector<8x1xf32>
    %124 = vector.broadcast %123 : vector<8x1xf32> to vector<8x128xf32>
    %125 = arith.addf %121, %124 : vector<8x128xf32>
    %c0_162 = arith.constant 0 : index
    %c0_163 = arith.constant 0 : index
    %c0_164 = arith.constant 0 : index
    %c0_165 = arith.constant 0 : index
    %c0_166 = arith.constant 0 : index
    %126 = vector.load %arg4[%c0_162, %c0_163, %c0_164, %c0_165, %c0_166] : memref<1x1x8x4x256xbf16, #tpu.memory_space<vmem>>, vector<1x1x1x4x128xbf16>
    %127 = vector.shape_cast %126 : vector<1x1x1x4x128xbf16> to vector<4x128xbf16>
    %128 = arith.extf %127 : vector<4x128xbf16> to vector<4x128xf32>
    %c0_167 = arith.constant 0 : index
    %c0_168 = arith.constant 0 : index
    %129 = vector.load %arg11[%c0_167, %c0_168] : memref<108x128xf32, #tpu.memory_space<vmem>>, vector<4x128xf32>
    tpu.vector_store %arg11[%c0_167, %c0_168], %128 {strides = array<i32>} : memref<108x128xf32, #tpu.memory_space<vmem>>, vector<4x128xf32>,
    %c0_169 = arith.constant 0 : index
    %c0_170 = arith.constant 0 : index
    %c1_171 = arith.constant 1 : index
    %c0_172 = arith.constant 0 : index
    %c0_173 = arith.constant 0 : index
    %130 = vector.load %arg4[%c0_169, %c0_170, %c1_171, %c0_172, %c0_173] : memref<1x1x8x4x256xbf16, #tpu.memory_space<vmem>>, vector<1x1x1x4x128xbf16>
    %131 = vector.shape_cast %130 : vector<1x1x1x4x128xbf16> to vector<4x128xbf16>
    %132 = arith.extf %131 : vector<4x128xbf16> to vector<4x128xf32>
    %c4_174 = arith.constant 4 : index
    %c0_175 = arith.constant 0 : index
    %133 = vector.load %arg11[%c4_174, %c0_175] : memref<108x128xf32, #tpu.memory_space<vmem>>, vector<4x128xf32>
    tpu.vector_store %arg11[%c4_174, %c0_175], %132 {strides = array<i32>} : memref<108x128xf32, #tpu.memory_space<vmem>>, vector<4x128xf32>,
    %c0_176 = arith.constant 0 : index
    %c0_177 = arith.constant 0 : index
    %c0_178 = arith.constant 0 : index
    %c0_179 = arith.constant 0 : index
    %c1_180 = arith.constant 1 : index
    %134 = vector.load %arg4[%c0_176, %c0_177, %c0_178, %c0_179, %c1_180] : memref<1x1x8x4x256xbf16, #tpu.memory_space<vmem>>, vector<1x1x1x4x128xbf16>
    %135 = vector.shape_cast %134 : vector<1x1x1x4x128xbf16> to vector<4x128xbf16>
    %136 = arith.extf %135 : vector<4x128xbf16> to vector<4x128xf32>
    %c8_181 = arith.constant 8 : index
    %c0_182 = arith.constant 0 : index
    %137 = vector.load %arg11[%c8_181, %c0_182] : memref<108x128xf32, #tpu.memory_space<vmem>>, vector<4x128xf32>
    tpu.vector_store %arg11[%c8_181, %c0_182], %136 {strides = array<i32>} : memref<108x128xf32, #tpu.memory_space<vmem>>, vector<4x128xf32>,
    %c0_183 = arith.constant 0 : index
    %c0_184 = arith.constant 0 : index
    %c2_185 = arith.constant 2 : index
    %c0_186 = arith.constant 0 : index
    %c0_187 = arith.constant 0 : index
    %138 = vector.load %arg4[%c0_183, %c0_184, %c2_185, %c0_186, %c0_187] : memref<1x1x8x4x256xbf16, #tpu.memory_space<vmem>>, vector<1x1x1x4x128xbf16>
    %139 = vector.shape_cast %138 : vector<1x1x1x4x128xbf16> to vector<4x128xbf16>
    %140 = arith.extf %139 : vector<4x128xbf16> to vector<4x128xf32>
    %c12_188 = arith.constant 12 : index
    %c0_189 = arith.constant 0 : index
    %141 = vector.load %arg11[%c12_188, %c0_189] : memref<108x128xf32, #tpu.memory_space<vmem>>, vector<4x128xf32>
    tpu.vector_store %arg11[%c12_188, %c0_189], %140 {strides = array<i32>} : memref<108x128xf32, #tpu.memory_space<vmem>>, vector<4x128xf32>,
    %c0_190 = arith.constant 0 : index
    %c0_191 = arith.constant 0 : index
    %c3_192 = arith.constant 3 : index
    %c0_193 = arith.constant 0 : index
    %c0_194 = arith.constant 0 : index
    %142 = vector.load %arg4[%c0_190, %c0_191, %c3_192, %c0_193, %c0_194] : memref<1x1x8x4x256xbf16, #tpu.memory_space<vmem>>, vector<1x1x1x4x128xbf16>
    %143 = vector.shape_cast %142 : vector<1x1x1x4x128xbf16> to vector<4x128xbf16>
    %144 = arith.extf %143 : vector<4x128xbf16> to vector<4x128xf32>
    %c16_195 = arith.constant 16 : index
    %c0_196 = arith.constant 0 : index
    %145 = vector.load %arg11[%c16_195, %c0_196] : memref<108x128xf32, #tpu.memory_space<vmem>>, vector<4x128xf32>
    tpu.vector_store %arg11[%c16_195, %c0_196], %144 {strides = array<i32>} : memref<108x128xf32, #tpu.memory_space<vmem>>, vector<4x128xf32>,
    %c0_197 = arith.constant 0 : index
    %c0_198 = arith.constant 0 : index
    %c2_199 = arith.constant 2 : index
    %c0_200 = arith.constant 0 : index
    %c1_201 = arith.constant 1 : index
    %146 = vector.load %arg4[%c0_197, %c0_198, %c2_199, %c0_200, %c1_201] : memref<1x1x8x4x256xbf16, #tpu.memory_space<vmem>>, vector<1x1x1x4x128xbf16>
    %147 = vector.shape_cast %146 : vector<1x1x1x4x128xbf16> to vector<4x128xbf16>
    %148 = arith.extf %147 : vector<4x128xbf16> to vector<4x128xf32>
    %c20_202 = arith.constant 20 : index
    %c0_203 = arith.constant 0 : index
    %149 = vector.load %arg11[%c20_202, %c0_203] : memref<108x128xf32, #tpu.memory_space<vmem>>, vector<4x128xf32>
    tpu.vector_store %arg11[%c20_202, %c0_203], %148 {strides = array<i32>} : memref<108x128xf32, #tpu.memory_space<vmem>>, vector<4x128xf32>,
    %c0_204 = arith.constant 0 : index
    %c0_205 = arith.constant 0 : index
    %c0_206 = arith.constant 0 : index
    %c0_207 = arith.constant 0 : index
    %c9_208 = arith.constant 9 : index
    %150 = vector.load %arg4[%c0_204, %c0_205, %c0_206, %c0_207, %c9_208] : memref<1x1x8x4x256xbf16, #tpu.memory_space<vmem>>, vector<1x1x1x4x128xbf16>
    %151 = vector.shape_cast %150 : vector<1x1x1x4x128xbf16> to vector<4x128xbf16>
    %152 = arith.extf %151 : vector<4x128xbf16> to vector<4x128xf32>
    %c24_209 = arith.constant 24 : index
    %c0_210 = arith.constant 0 : index
    %153 = vector.load %arg11[%c24_209, %c0_210] : memref<108x128xf32, #tpu.memory_space<vmem>>, vector<4x128xf32>
    tpu.vector_store %arg11[%c24_209, %c0_210], %152 {strides = array<i32>} : memref<108x128xf32, #tpu.memory_space<vmem>>, vector<4x128xf32>,
    %c0_211 = arith.constant 0 : index
    %c0_212 = arith.constant 0 : index
    %c1_213 = arith.constant 1 : index
    %c0_214 = arith.constant 0 : index
    %c9_215 = arith.constant 9 : index
    %154 = vector.load %arg4[%c0_211, %c0_212, %c1_213, %c0_214, %c9_215] : memref<1x1x8x4x256xbf16, #tpu.memory_space<vmem>>, vector<1x1x1x4x128xbf16>
    %155 = vector.shape_cast %154 : vector<1x1x1x4x128xbf16> to vector<4x128xbf16>
    %156 = arith.extf %155 : vector<4x128xbf16> to vector<4x128xf32>
    %c28_216 = arith.constant 28 : index
    %c0_217 = arith.constant 0 : index
    %157 = vector.load %arg11[%c28_216, %c0_217] : memref<108x128xf32, #tpu.memory_space<vmem>>, vector<4x128xf32>
    tpu.vector_store %arg11[%c28_216, %c0_217], %156 {strides = array<i32>} : memref<108x128xf32, #tpu.memory_space<vmem>>, vector<4x128xf32>,
    %c0_218 = arith.constant 0 : index
    %c0_219 = arith.constant 0 : index
    %c0_220 = arith.constant 0 : index
    %c0_221 = arith.constant 0 : index
    %c10_222 = arith.constant 10 : index
    %158 = vector.load %arg4[%c0_218, %c0_219, %c0_220, %c0_221, %c10_222] : memref<1x1x8x4x256xbf16, #tpu.memory_space<vmem>>, vector<1x1x1x4x128xbf16>
    %159 = vector.shape_cast %158 : vector<1x1x1x4x128xbf16> to vector<4x128xbf16>
    %160 = arith.extf %159 : vector<4x128xbf16> to vector<4x128xf32>
    %c32_223 = arith.constant 32 : index
    %c0_224 = arith.constant 0 : index
    %161 = vector.load %arg11[%c32_223, %c0_224] : memref<108x128xf32, #tpu.memory_space<vmem>>, vector<4x128xf32>
    tpu.vector_store %arg11[%c32_223, %c0_224], %160 {strides = array<i32>} : memref<108x128xf32, #tpu.memory_space<vmem>>, vector<4x128xf32>,
    %c0_225 = arith.constant 0 : index
    %c0_226 = arith.constant 0 : index
    %c4_227 = arith.constant 4 : index
    %c0_228 = arith.constant 0 : index
    %c0_229 = arith.constant 0 : index
    %162 = vector.load %arg4[%c0_225, %c0_226, %c4_227, %c0_228, %c0_229] : memref<1x1x8x4x256xbf16, #tpu.memory_space<vmem>>, vector<1x1x1x4x128xbf16>
    %163 = vector.shape_cast %162 : vector<1x1x1x4x128xbf16> to vector<4x128xbf16>
    %164 = arith.extf %163 : vector<4x128xbf16> to vector<4x128xf32>
    %c36_230 = arith.constant 36 : index
    %c0_231 = arith.constant 0 : index
    %165 = vector.load %arg11[%c36_230, %c0_231] : memref<108x128xf32, #tpu.memory_space<vmem>>, vector<4x128xf32>
    tpu.vector_store %arg11[%c36_230, %c0_231], %164 {strides = array<i32>} : memref<108x128xf32, #tpu.memory_space<vmem>>, vector<4x128xf32>,
    %c0_232 = arith.constant 0 : index
    %c0_233 = arith.constant 0 : index
    %c5_234 = arith.constant 5 : index
    %c0_235 = arith.constant 0 : index
    %c0_236 = arith.constant 0 : index
    %166 = vector.load %arg4[%c0_232, %c0_233, %c5_234, %c0_235, %c0_236] : memref<1x1x8x4x256xbf16, #tpu.memory_space<vmem>>, vector<1x1x1x4x128xbf16>
    %167 = vector.shape_cast %166 : vector<1x1x1x4x128xbf16> to vector<4x128xbf16>
    %168 = arith.extf %167 : vector<4x128xbf16> to vector<4x128xf32>
    %c40_237 = arith.constant 40 : index
    %c0_238 = arith.constant 0 : index
    %169 = vector.load %arg11[%c40_237, %c0_238] : memref<108x128xf32, #tpu.memory_space<vmem>>, vector<4x128xf32>
    tpu.vector_store %arg11[%c40_237, %c0_238], %168 {strides = array<i32>} : memref<108x128xf32, #tpu.memory_space<vmem>>, vector<4x128xf32>,
    %c0_239 = arith.constant 0 : index
    %c0_240 = arith.constant 0 : index
    %c4_241 = arith.constant 4 : index
    %c0_242 = arith.constant 0 : index
    %c1_243 = arith.constant 1 : index
    %170 = vector.load %arg4[%c0_239, %c0_240, %c4_241, %c0_242, %c1_243] : memref<1x1x8x4x256xbf16, #tpu.memory_space<vmem>>, vector<1x1x1x4x128xbf16>
    %171 = vector.shape_cast %170 : vector<1x1x1x4x128xbf16> to vector<4x128xbf16>
    %172 = arith.extf %171 : vector<4x128xbf16> to vector<4x128xf32>
    %c44_244 = arith.constant 44 : index
    %c0_245 = arith.constant 0 : index
    %173 = vector.load %arg11[%c44_244, %c0_245] : memref<108x128xf32, #tpu.memory_space<vmem>>, vector<4x128xf32>
    tpu.vector_store %arg11[%c44_244, %c0_245], %172 {strides = array<i32>} : memref<108x128xf32, #tpu.memory_space<vmem>>, vector<4x128xf32>,
    %c0_246 = arith.constant 0 : index
    %c0_247 = arith.constant 0 : index
    %c6_248 = arith.constant 6 : index
    %c0_249 = arith.constant 0 : index
    %c0_250 = arith.constant 0 : index
    %174 = vector.load %arg4[%c0_246, %c0_247, %c6_248, %c0_249, %c0_250] : memref<1x1x8x4x256xbf16, #tpu.memory_space<vmem>>, vector<1x1x1x4x128xbf16>
    %175 = vector.shape_cast %174 : vector<1x1x1x4x128xbf16> to vector<4x128xbf16>
    %176 = arith.extf %175 : vector<4x128xbf16> to vector<4x128xf32>
    %c48_251 = arith.constant 48 : index
    %c0_252 = arith.constant 0 : index
    %177 = vector.load %arg11[%c48_251, %c0_252] : memref<108x128xf32, #tpu.memory_space<vmem>>, vector<4x128xf32>
    tpu.vector_store %arg11[%c48_251, %c0_252], %176 {strides = array<i32>} : memref<108x128xf32, #tpu.memory_space<vmem>>, vector<4x128xf32>,
    %c0_253 = arith.constant 0 : index
    %c0_254 = arith.constant 0 : index
    %c7_255 = arith.constant 7 : index
    %c0_256 = arith.constant 0 : index
    %c0_257 = arith.constant 0 : index
    %178 = vector.load %arg4[%c0_253, %c0_254, %c7_255, %c0_256, %c0_257] : memref<1x1x8x4x256xbf16, #tpu.memory_space<vmem>>, vector<1x1x1x4x128xbf16>
    %179 = vector.shape_cast %178 : vector<1x1x1x4x128xbf16> to vector<4x128xbf16>
    %180 = arith.extf %179 : vector<4x128xbf16> to vector<4x128xf32>
    %c52_258 = arith.constant 52 : index
    %c0_259 = arith.constant 0 : index
    %181 = vector.load %arg11[%c52_258, %c0_259] : memref<108x128xf32, #tpu.memory_space<vmem>>, vector<4x128xf32>
    tpu.vector_store %arg11[%c52_258, %c0_259], %180 {strides = array<i32>} : memref<108x128xf32, #tpu.memory_space<vmem>>, vector<4x128xf32>,
    %c0_260 = arith.constant 0 : index
    %c0_261 = arith.constant 0 : index
    %c6_262 = arith.constant 6 : index
    %c0_263 = arith.constant 0 : index
    %c1_264 = arith.constant 1 : index
    %182 = vector.load %arg4[%c0_260, %c0_261, %c6_262, %c0_263, %c1_264] : memref<1x1x8x4x256xbf16, #tpu.memory_space<vmem>>, vector<1x1x1x4x128xbf16>
    %183 = vector.shape_cast %182 : vector<1x1x1x4x128xbf16> to vector<4x128xbf16>
    %184 = arith.extf %183 : vector<4x128xbf16> to vector<4x128xf32>
    %c56_265 = arith.constant 56 : index
    %c0_266 = arith.constant 0 : index
    %185 = vector.load %arg11[%c56_265, %c0_266] : memref<108x128xf32, #tpu.memory_space<vmem>>, vector<4x128xf32>
    tpu.vector_store %arg11[%c56_265, %c0_266], %184 {strides = array<i32>} : memref<108x128xf32, #tpu.memory_space<vmem>>, vector<4x128xf32>,
    %c0_267 = arith.constant 0 : index
    %c0_268 = arith.constant 0 : index
    %c4_269 = arith.constant 4 : index
    %c0_270 = arith.constant 0 : index
    %c9_271 = arith.constant 9 : index
    %186 = vector.load %arg4[%c0_267, %c0_268, %c4_269, %c0_270, %c9_271] : memref<1x1x8x4x256xbf16, #tpu.memory_space<vmem>>, vector<1x1x1x4x128xbf16>
    %187 = vector.shape_cast %186 : vector<1x1x1x4x128xbf16> to vector<4x128xbf16>
    %188 = arith.extf %187 : vector<4x128xbf16> to vector<4x128xf32>
    %c60_272 = arith.constant 60 : index
    %c0_273 = arith.constant 0 : index
    %189 = vector.load %arg11[%c60_272, %c0_273] : memref<108x128xf32, #tpu.memory_space<vmem>>, vector<4x128xf32>
    tpu.vector_store %arg11[%c60_272, %c0_273], %188 {strides = array<i32>} : memref<108x128xf32, #tpu.memory_space<vmem>>, vector<4x128xf32>,
    %c0_274 = arith.constant 0 : index
    %c0_275 = arith.constant 0 : index
    %c5_276 = arith.constant 5 : index
    %c0_277 = arith.constant 0 : index
    %c9_278 = arith.constant 9 : index
    %190 = vector.load %arg4[%c0_274, %c0_275, %c5_276, %c0_277, %c9_278] : memref<1x1x8x4x256xbf16, #tpu.memory_space<vmem>>, vector<1x1x1x4x128xbf16>
    %191 = vector.shape_cast %190 : vector<1x1x1x4x128xbf16> to vector<4x128xbf16>
    %192 = arith.extf %191 : vector<4x128xbf16> to vector<4x128xf32>
    %c64_279 = arith.constant 64 : index
    %c0_280 = arith.constant 0 : index
    %193 = vector.load %arg11[%c64_279, %c0_280] : memref<108x128xf32, #tpu.memory_space<vmem>>, vector<4x128xf32>
    tpu.vector_store %arg11[%c64_279, %c0_280], %192 {strides = array<i32>} : memref<108x128xf32, #tpu.memory_space<vmem>>, vector<4x128xf32>,
    %c0_281 = arith.constant 0 : index
    %c0_282 = arith.constant 0 : index
    %c4_283 = arith.constant 4 : index
    %c0_284 = arith.constant 0 : index
    %c10_285 = arith.constant 10 : index
    %194 = vector.load %arg4[%c0_281, %c0_282, %c4_283, %c0_284, %c10_285] : memref<1x1x8x4x256xbf16, #tpu.memory_space<vmem>>, vector<1x1x1x4x128xbf16>
    %195 = vector.shape_cast %194 : vector<1x1x1x4x128xbf16> to vector<4x128xbf16>
    %196 = arith.extf %195 : vector<4x128xbf16> to vector<4x128xf32>
    %c68_286 = arith.constant 68 : index
    %c0_287 = arith.constant 0 : index
    %197 = vector.load %arg11[%c68_286, %c0_287] : memref<108x128xf32, #tpu.memory_space<vmem>>, vector<4x128xf32>
    tpu.vector_store %arg11[%c68_286, %c0_287], %196 {strides = array<i32>} : memref<108x128xf32, #tpu.memory_space<vmem>>, vector<4x128xf32>,
    %c0_288 = arith.constant 0 : index
    %c0_289 = arith.constant 0 : index
    %c0_290 = arith.constant 0 : index
    %c0_291 = arith.constant 0 : index
    %c0_292 = arith.constant 0 : index
    %198 = vector.load %arg5[%c0_288, %c0_289, %c0_290, %c0_291, %c0_292] : memref<1x1x8x4x256xbf16, #tpu.memory_space<vmem>>, vector<1x1x1x4x128xbf16>
    %199 = vector.shape_cast %198 : vector<1x1x1x4x128xbf16> to vector<4x128xbf16>
    %200 = arith.extf %199 : vector<4x128xbf16> to vector<4x128xf32>
    %c72_293 = arith.constant 72 : index
    %c0_294 = arith.constant 0 : index
    %201 = vector.load %arg11[%c72_293, %c0_294] : memref<108x128xf32, #tpu.memory_space<vmem>>, vector<4x128xf32>
    tpu.vector_store %arg11[%c72_293, %c0_294], %200 {strides = array<i32>} : memref<108x128xf32, #tpu.memory_space<vmem>>, vector<4x128xf32>,
    %c0_295 = arith.constant 0 : index
    %c0_296 = arith.constant 0 : index
    %c1_297 = arith.constant 1 : index
    %c0_298 = arith.constant 0 : index
    %c0_299 = arith.constant 0 : index
    %202 = vector.load %arg5[%c0_295, %c0_296, %c1_297, %c0_298, %c0_299] : memref<1x1x8x4x256xbf16, #tpu.memory_space<vmem>>, vector<1x1x1x4x128xbf16>
    %203 = vector.shape_cast %202 : vector<1x1x1x4x128xbf16> to vector<4x128xbf16>
    %204 = arith.extf %203 : vector<4x128xbf16> to vector<4x128xf32>
    %c76_300 = arith.constant 76 : index
    %c0_301 = arith.constant 0 : index
    %205 = vector.load %arg11[%c76_300, %c0_301] : memref<108x128xf32, #tpu.memory_space<vmem>>, vector<4x128xf32>
    tpu.vector_store %arg11[%c76_300, %c0_301], %204 {strides = array<i32>} : memref<108x128xf32, #tpu.memory_space<vmem>>, vector<4x128xf32>,
    %c0_302 = arith.constant 0 : index
    %c0_303 = arith.constant 0 : index
    %c0_304 = arith.constant 0 : index
    %c0_305 = arith.constant 0 : index
    %c1_306 = arith.constant 1 : index
    %206 = vector.load %arg5[%c0_302, %c0_303, %c0_304, %c0_305, %c1_306] : memref<1x1x8x4x256xbf16, #tpu.memory_space<vmem>>, vector<1x1x1x4x128xbf16>
    %207 = vector.shape_cast %206 : vector<1x1x1x4x128xbf16> to vector<4x128xbf16>
    %208 = arith.extf %207 : vector<4x128xbf16> to vector<4x128xf32>
    %c80_307 = arith.constant 80 : index
    %c0_308 = arith.constant 0 : index
    %209 = vector.load %arg11[%c80_307, %c0_308] : memref<108x128xf32, #tpu.memory_space<vmem>>, vector<4x128xf32>
    tpu.vector_store %arg11[%c80_307, %c0_308], %208 {strides = array<i32>} : memref<108x128xf32, #tpu.memory_space<vmem>>, vector<4x128xf32>,
    %c0_309 = arith.constant 0 : index
    %c0_310 = arith.constant 0 : index
    %c2_311 = arith.constant 2 : index
    %c0_312 = arith.constant 0 : index
    %c0_313 = arith.constant 0 : index
    %210 = vector.load %arg5[%c0_309, %c0_310, %c2_311, %c0_312, %c0_313] : memref<1x1x8x4x256xbf16, #tpu.memory_space<vmem>>, vector<1x1x1x4x128xbf16>
    %211 = vector.shape_cast %210 : vector<1x1x1x4x128xbf16> to vector<4x128xbf16>
    %212 = arith.extf %211 : vector<4x128xbf16> to vector<4x128xf32>
    %c84_314 = arith.constant 84 : index
    %c0_315 = arith.constant 0 : index
    %213 = vector.load %arg11[%c84_314, %c0_315] : memref<108x128xf32, #tpu.memory_space<vmem>>, vector<4x128xf32>
    tpu.vector_store %arg11[%c84_314, %c0_315], %212 {strides = array<i32>} : memref<108x128xf32, #tpu.memory_space<vmem>>, vector<4x128xf32>,
    %c0_316 = arith.constant 0 : index
    %c0_317 = arith.constant 0 : index
    %c3_318 = arith.constant 3 : index
    %c0_319 = arith.constant 0 : index
    %c0_320 = arith.constant 0 : index
    %214 = vector.load %arg5[%c0_316, %c0_317, %c3_318, %c0_319, %c0_320] : memref<1x1x8x4x256xbf16, #tpu.memory_space<vmem>>, vector<1x1x1x4x128xbf16>
    %215 = vector.shape_cast %214 : vector<1x1x1x4x128xbf16> to vector<4x128xbf16>
    %216 = arith.extf %215 : vector<4x128xbf16> to vector<4x128xf32>
    %c88_321 = arith.constant 88 : index
    %c0_322 = arith.constant 0 : index
    %217 = vector.load %arg11[%c88_321, %c0_322] : memref<108x128xf32, #tpu.memory_space<vmem>>, vector<4x128xf32>
    tpu.vector_store %arg11[%c88_321, %c0_322], %216 {strides = array<i32>} : memref<108x128xf32, #tpu.memory_space<vmem>>, vector<4x128xf32>,
    %c0_323 = arith.constant 0 : index
    %c0_324 = arith.constant 0 : index
    %c2_325 = arith.constant 2 : index
    %c0_326 = arith.constant 0 : index
    %c1_327 = arith.constant 1 : index
    %218 = vector.load %arg5[%c0_323, %c0_324, %c2_325, %c0_326, %c1_327] : memref<1x1x8x4x256xbf16, #tpu.memory_space<vmem>>, vector<1x1x1x4x128xbf16>
    %219 = vector.shape_cast %218 : vector<1x1x1x4x128xbf16> to vector<4x128xbf16>
    %220 = arith.extf %219 : vector<4x128xbf16> to vector<4x128xf32>
    %c92_328 = arith.constant 92 : index
    %c0_329 = arith.constant 0 : index
    %221 = vector.load %arg11[%c92_328, %c0_329] : memref<108x128xf32, #tpu.memory_space<vmem>>, vector<4x128xf32>
    tpu.vector_store %arg11[%c92_328, %c0_329], %220 {strides = array<i32>} : memref<108x128xf32, #tpu.memory_space<vmem>>, vector<4x128xf32>,
    %c0_330 = arith.constant 0 : index
    %c0_331 = arith.constant 0 : index
    %c0_332 = arith.constant 0 : index
    %c0_333 = arith.constant 0 : index
    %c9_334 = arith.constant 9 : index
    %222 = vector.load %arg5[%c0_330, %c0_331, %c0_332, %c0_333, %c9_334] : memref<1x1x8x4x256xbf16, #tpu.memory_space<vmem>>, vector<1x1x1x4x128xbf16>
    %223 = vector.shape_cast %222 : vector<1x1x1x4x128xbf16> to vector<4x128xbf16>
    %224 = arith.extf %223 : vector<4x128xbf16> to vector<4x128xf32>
    %c96_335 = arith.constant 96 : index
    %c0_336 = arith.constant 0 : index
    %225 = vector.load %arg11[%c96_335, %c0_336] : memref<108x128xf32, #tpu.memory_space<vmem>>, vector<4x128xf32>
    tpu.vector_store %arg11[%c96_335, %c0_336], %224 {strides = array<i32>} : memref<108x128xf32, #tpu.memory_space<vmem>>, vector<4x128xf32>,
    %c0_337 = arith.constant 0 : index
    %c0_338 = arith.constant 0 : index
    %c1_339 = arith.constant 1 : index
    %c0_340 = arith.constant 0 : index
    %c9_341 = arith.constant 9 : index
    %226 = vector.load %arg5[%c0_337, %c0_338, %c1_339, %c0_340, %c9_341] : memref<1x1x8x4x256xbf16, #tpu.memory_space<vmem>>, vector<1x1x1x4x128xbf16>
    %227 = vector.shape_cast %226 : vector<1x1x1x4x128xbf16> to vector<4x128xbf16>
    %228 = arith.extf %227 : vector<4x128xbf16> to vector<4x128xf32>
    %c100_342 = arith.constant 100 : index
    %c0_343 = arith.constant 0 : index
    %229 = vector.load %arg11[%c100_342, %c0_343] : memref<108x128xf32, #tpu.memory_space<vmem>>, vector<4x128xf32>
    tpu.vector_store %arg11[%c100_342, %c0_343], %228 {strides = array<i32>} : memref<108x128xf32, #tpu.memory_space<vmem>>, vector<4x128xf32>,
    %c0_344 = arith.constant 0 : index
    %c0_345 = arith.constant 0 : index
    %c0_346 = arith.constant 0 : index
    %c0_347 = arith.constant 0 : index
    %c10_348 = arith.constant 10 : index
    %230 = vector.load %arg5[%c0_344, %c0_345, %c0_346, %c0_347, %c10_348] : memref<1x1x8x4x256xbf16, #tpu.memory_space<vmem>>, vector<1x1x1x4x128xbf16>
    %231 = vector.shape_cast %230 : vector<1x1x1x4x128xbf16> to vector<4x128xbf16>
    %232 = arith.extf %231 : vector<4x128xbf16> to vector<4x128xf32>
    %c104_349 = arith.constant 104 : index
    %c0_350 = arith.constant 0 : index
    %233 = vector.load %arg11[%c104_349, %c0_350] : memref<108x128xf32, #tpu.memory_space<vmem>>, vector<4x128xf32>
    tpu.vector_store %arg11[%c104_349, %c0_350], %232 {strides = array<i32>} : memref<108x128xf32, #tpu.memory_space<vmem>>, vector<4x128xf32>,
    %c0_351 = arith.constant 0 : index
    %c0_352 = arith.constant 0 : index
    %234 = vector.load %arg7[%c0_351, %c0_352] : memref<8x108xf32, #tpu.memory_space<vmem>>, vector<8x108xf32>
    %c0_353 = arith.constant 0 : index
    %c0_354 = arith.constant 0 : index
    %235 = vector.load %arg11[%c0_353, %c0_354] : memref<108x128xf32, #tpu.memory_space<vmem>>, vector<108x128xf32>
    %cst_355 = arith.constant dense<0.000000e+00> : vector<8x128xf32>
    %236 = tpu.matmul %234, %235, %cst_355 {dimension_numbers = #tpu.dot_dimension_numbers<[1], [0], [0], [1], [0, 0, 1, 1], [], []>} : vector<8x108xf32>, vector<108x128xf32>, vector<8x128xf32> -> vector<8x128xf32>
    %c0_356 = arith.constant 0 : index
    %c0_357 = arith.constant 0 : index
    %c0_358 = arith.constant 0 : index
    %237 = vector.load %arg9[%c0_356, %c0_357, %c0_358] : memref<3x8x1xf32, #tpu.memory_space<vmem>>, vector<3x8x1xf32>
    %238 = vector.extract_strided_slice %237 {offsets = [0, 0, 0], sizes = [1, 8, 1], strides = [1, 1, 1]} : vector<3x8x1xf32> to vector<1x8x1xf32>
    %239 = vector.shape_cast %238 : vector<1x8x1xf32> to vector<8x1xf32>
    %240 = vector.broadcast %239 : vector<8x1xf32> to vector<8x128xf32>
    %241 = arith.addf %236, %240 : vector<8x128xf32>
    %cst_359 = arith.constant 0.000000e+00 : f32
    %242 = vector.broadcast %cst_359 : f32 to vector<8x128xf32>
    %243 = arith.maximumf %241, %242 : vector<8x128xf32>
    %244 = vector.extract_strided_slice %237 {offsets = [1, 0, 0], sizes = [1, 8, 1], strides = [1, 1, 1]} : vector<3x8x1xf32> to vector<1x8x1xf32>
    %245 = vector.shape_cast %244 : vector<1x8x1xf32> to vector<8x1xf32>
    %246 = vector.broadcast %245 : vector<8x1xf32> to vector<8x128xf32>
    %247 = arith.mulf %243, %246 : vector<8x128xf32>
    %248 = vector.extract_strided_slice %237 {offsets = [2, 0, 0], sizes = [1, 8, 1], strides = [1, 1, 1]} : vector<3x8x1xf32> to vector<1x8x1xf32>
    %249 = vector.shape_cast %248 : vector<1x8x1xf32> to vector<8x1xf32>
    %250 = vector.broadcast %249 : vector<8x1xf32> to vector<8x128xf32>
    %251 = arith.addf %247, %250 : vector<8x128xf32>
    %252 = arith.addf %125, %251 : vector<8x128xf32>
    %c0_360 = arith.constant 0 : index
    %c0_361 = arith.constant 0 : index
    %c0_362 = arith.constant 0 : index
    %c0_363 = arith.constant 0 : index
    %253 = vector.load %arg10[%c0_360, %c0_361, %c0_362, %c0_363] : memref<1x1x8x128xf32, #tpu.memory_space<vmem>>, vector<1x1x8x128xf32>
    %254 = vector.shape_cast %253 : vector<1x1x8x128xf32> to vector<8x128xf32>
    %255 = vector.shape_cast %252 : vector<8x128xf32> to vector<1x1x8x128xf32>
    tpu.vector_store %arg10[%c0_360, %c0_361, %c0_362, %c0_363], %255 {strides = array<i32>} : memref<1x1x8x128xf32, #tpu.memory_space<vmem>>, vector<1x1x8x128xf32>,
    return
  }
  func.func @transform_0(%arg0: i32, %arg1: i32) -> (i32, i32, i32, i32, i32) {
    %c0_i32 = arith.constant 0 : i32
    %c0_i32_0 = arith.constant 0 : i32
    %c0_i32_1 = arith.constant 0 : i32
    %c0_i32_2 = arith.constant 0 : i32
    return %arg0, %arg1, %c0_i32, %c0_i32_0, %c0_i32_1 : i32, i32, i32, i32, i32
  }
  func.func @transform_1(%arg0: i32, %arg1: i32) -> (i32, i32, i32, i32, i32) {
    %c1_i32 = arith.constant 1 : i32
    %0 = arith.addi %arg1, %c1_i32 : i32
    %c0_i32 = arith.constant 0 : i32
    %c0_i32_0 = arith.constant 0 : i32
    %c0_i32_1 = arith.constant 0 : i32
    %c0_i32_2 = arith.constant 0 : i32
    return %arg0, %0, %c0_i32, %c0_i32_0, %c0_i32_1 : i32, i32, i32, i32, i32
  }
  func.func @transform_2(%arg0: i32, %arg1: i32) -> (i32, i32, i32, i32, i32) {
    %c0_i32 = arith.constant 0 : i32
    %c0_i32_0 = arith.constant 0 : i32
    %c0_i32_1 = arith.constant 0 : i32
    %c0_i32_2 = arith.constant 0 : i32
    return %arg0, %arg1, %c0_i32, %c0_i32_0, %c0_i32_1 : i32, i32, i32, i32, i32
  }
  func.func @transform_3(%arg0: i32, %arg1: i32) -> (i32, i32, i32, i32, i32) {
    %c1_i32 = arith.constant 1 : i32
    %0 = arith.addi %arg1, %c1_i32 : i32
    %c0_i32 = arith.constant 0 : i32
    %c0_i32_0 = arith.constant 0 : i32
    %c0_i32_1 = arith.constant 0 : i32
    %c0_i32_2 = arith.constant 0 : i32
    return %arg0, %0, %c0_i32, %c0_i32_0, %c0_i32_1 : i32, i32, i32, i32, i32
  }
  func.func @transform_4(%arg0: i32, %arg1: i32) -> (i32, i32) {
    %c0_i32 = arith.constant 0 : i32
    %c0_i32_0 = arith.constant 0 : i32
    %c0_i32_1 = arith.constant 0 : i32
    return %c0_i32, %c0_i32_0 : i32, i32
  }
  func.func @transform_5(%arg0: i32, %arg1: i32) -> (i32, i32) {
    %c0_i32 = arith.constant 0 : i32
    %c0_i32_0 = arith.constant 0 : i32
    %c0_i32_1 = arith.constant 0 : i32
    return %c0_i32, %c0_i32_0 : i32, i32
  }
  func.func @transform_6(%arg0: i32, %arg1: i32) -> (i32, i32, i32) {
    %c0_i32 = arith.constant 0 : i32
    %c0_i32_0 = arith.constant 0 : i32
    %c0_i32_1 = arith.constant 0 : i32
    %c0_i32_2 = arith.constant 0 : i32
    return %c0_i32, %c0_i32_0, %c0_i32_1 : i32, i32, i32
  }
  func.func @transform_7(%arg0: i32, %arg1: i32) -> (i32, i32, i32) {
    %c0_i32 = arith.constant 0 : i32
    %c0_i32_0 = arith.constant 0 : i32
    %c0_i32_1 = arith.constant 0 : i32
    %c0_i32_2 = arith.constant 0 : i32
    return %c0_i32, %c0_i32_0, %c0_i32_1 : i32, i32, i32
  }
  func.func @transform_8(%arg0: i32, %arg1: i32) -> (i32, i32, i32, i32) {
    %c0_i32 = arith.constant 0 : i32
    %c0_i32_0 = arith.constant 0 : i32
    %c0_i32_1 = arith.constant 0 : i32
    return %arg0, %arg1, %c0_i32, %c0_i32_0 : i32, i32, i32, i32
  }
}

</mosaic_0001>

<llo_original>
// kernel: en_res_block.2
$region0: #{en_res_block.2}
  #allocation0 [shape = 'u32[]', space=smem, size = 0x4, offset = 0x4, fixed_abs, tag = 'smem constant byte address 0x4 - core index']
  #allocation1 [shape = 'u32[144,128]{1,0:T(1,128)}', space=vmem, size = 0x12000, scoped, tag = 'internal scratch']
  #allocation2 [shape = 'f32[108,384]{1,0:T(8,128)}', space=vmem, size = 0x2a000, scoped, tag = 'scratch operand']
  %s0 = inlined_call_operand.vmem [shape: bf16[2,18,4,512], index: 0, kind: input, shape index: {}, may-alias: {0,1,2}]
  %s1 = inlined_call_operand.vmem [shape: bf16[2,18,4,512], index: 1, kind: input, shape index: {}, may-alias: {0,1,2}]
  %s2 = inlined_call_operand.vmem [shape: bf16[2,18,4,512], index: 2, kind: input, shape index: {}, may-alias: {0,1,2}]
  %s3 = inlined_call_operand.vmem [shape: f32[4,108], index: 3, kind: input, shape index: {}]
  %s4 = inlined_call_operand.vmem [shape: f32[3,4,1], index: 4, kind: input, shape index: {}]
  %s5 = inlined_call_operand.vmem [shape: f32[1,384], index: 5, kind: input, shape index: {}]
  %s6 = inlined_call_operand.vmem [shape: bf16[2,16,4,384], index: 6, kind: output, shape index: {}]
  %s7 = sld [smem:[#allocation0]]
  $region57: #{en_res_block.2} parent=0
    _
  %s9 = ssub.s32 1, %s7
  %s10 = scalar_select 0, %s9, %s7
  loop: start=0, step=1, limit=34
  $region2: #{en_res_block.2} parent=0 // loop_pre_header
    _
  $region3: #{en_res_block.2} parent=0 // loop_header
    %s12 = sphi 0, %s16
    %p13 = scmp.ge.s32.totalorder %s12, 34
    %s19 = sphi 0, %s31
    %s20 = sphi 0, %s27
    %s21 = sphi 0, %s19
    %s22 = sphi 0, %s20
    %s23 = sphi 0, %s21
    %s24 = sphi 0, %s22
    %s36 = sphi 0, %s38
    %s39 = sphi 0, %s36
    %s40 = sphi 0, %s39
    %s56 = sphi 0, %s40
    %s66 = sphi 0, %s68
    %s69 = sphi 0, %s66
    %s70 = sphi 0, %s69
    %s86 = sphi 0, %s70
    %s96 = sphi 0, %s98
    %s99 = sphi 0, %s96
    %s100 = sphi 0, %s99
    %s116 = sphi 0, %s100
    %s120 = sphi 0, %s120
    %s122 = sphi 0, %s120
    %s123 = sphi 0, %s122
    %s137 = sphi 0, %s123
    %s141 = sphi 0, %s141
    %s143 = sphi 0, %s141
    %s144 = sphi 0, %s143
    %s158 = sphi 0, %s144
    %s162 = sphi 0, %s162
    %s164 = sphi 0, %s162
    %s165 = sphi 0, %s164
    %s179 = sphi 0, %s165
    %s187 = sphi 0, %s189
    %s190 = sphi 0, %s187
    %s191 = sphi 0, %s190
    %s207 = sphi 0, %s191
  $region4: #{en_res_block.2} parent=0 // loop_header_branch
    %15 = sbr.rel (%p13) target = $region8
  $region5: #{en_res_block.2} parent=0 // loop_body
    %s17 = ssub.s32 %s12, 1
    %s18 = ssub.s32 %s12, 2
    %s25 = sadd.s32 1, %s20
    %p26 = scmp.ge.s32.totalorder %s25, 16
    %s27 = scalar_select %p26, 0, %s25
    %s28 = sadd.s32 1, %s19
    %s29 = scalar_select %p26, %s28, %s19
    %p30 = scmp.ge.s32.totalorder %s29, 2
    %s31 = scalar_select %p30, 0, %s29
    %s32 = ssub.s32 %s19, %s31
    %s33 = ssub.s32 %s20, %s27
    %s34 = sor.u32 %s32, %s33
    %p35 = scmp.eq.s32.totalorder %s34, 0
    %s37 = sadd.s32 %s36, 1
    %s38 = scalar_select %p35, %s36, %s37
    %p41 = pneg %p35
    %p42 = scmp.eq.s32.totalorder %s12, 31
    %p43 = por %p41, %p42
    %p44 = scmp.ne.s32.totalorder %s36, %s39
    %p45 = scmp.eq.s32.totalorder %s12, 0
    %p46 = por %p44, %p45
    %p47 = scmp.ne.s32.totalorder %s36, %s39
    %p48 = scmp.eq.s32.totalorder %s17, 31
    %p49 = por %p47, %p48
    %p50 = scmp.ne.s32.totalorder %s39, %s40
    %p51 = scmp.eq.s32.totalorder %s17, 0
    %p52 = por %p50, %p51
    %p53 = scmp.ne.s32.totalorder %s39, %s40
    %p54 = scmp.eq.s32.totalorder %s18, 31
    %p55 = por %p53, %p54
    %p57 = scmp.ne.s32.totalorder %s40, %s56
    %p58 = scmp.eq.s32.totalorder %s18, 0
    %p59 = por %p57, %p58
    %s60 = sadd.s32 %s20, 1
    %s61 = sadd.s32 %s27, 1
    %s62 = ssub.s32 %s19, %s31
    %s63 = ssub.s32 %s60, %s61
    %s64 = sor.u32 %s62, %s63
    %p65 = scmp.eq.s32.totalorder %s64, 0
    %s67 = sadd.s32 %s66, 1
    %s68 = scalar_select %p65, %s66, %s67
    %p71 = pneg %p65
    %p72 = scmp.eq.s32.totalorder %s12, 31
    %p73 = por %p71, %p72
    %p74 = scmp.ne.s32.totalorder %s66, %s69
    %p75 = scmp.eq.s32.totalorder %s12, 0
    %p76 = por %p74, %p75
    %p77 = scmp.ne.s32.totalorder %s66, %s69
    %p78 = scmp.eq.s32.totalorder %s17, 31
    %p79 = por %p77, %p78
    %p80 = scmp.ne.s32.totalorder %s69, %s70
    %p81 = scmp.eq.s32.totalorder %s17, 0
    %p82 = por %p80, %p81
    %p83 = scmp.ne.s32.totalorder %s69, %s70
    %p84 = scmp.eq.s32.totalorder %s18, 31
    %p85 = por %p83, %p84
    %p87 = scmp.ne.s32.totalorder %s70, %s86
    %p88 = scmp.eq.s32.totalorder %s18, 0
    %p89 = por %p87, %p88
    %s90 = sadd.s32 %s20, 2
    %s91 = sadd.s32 %s27, 2
    %s92 = ssub.s32 %s19, %s31
    %s93 = ssub.s32 %s90, %s91
    %s94 = sor.u32 %s92, %s93
    %p95 = scmp.eq.s32.totalorder %s94, 0
    %s97 = sadd.s32 %s96, 1
    %s98 = scalar_select %p95, %s96, %s97
    %p101 = pneg %p95
    %p102 = scmp.eq.s32.totalorder %s12, 31
    %p103 = por %p101, %p102
    %p104 = scmp.ne.s32.totalorder %s96, %s99
    %p105 = scmp.eq.s32.totalorder %s12, 0
    %p106 = por %p104, %p105
    %p107 = scmp.ne.s32.totalorder %s96, %s99
    %p108 = scmp.eq.s32.totalorder %s17, 31
    %p109 = por %p107, %p108
    %p110 = scmp.ne.s32.totalorder %s99, %s100
    %p111 = scmp.eq.s32.totalorder %s17, 0
    %p112 = por %p110, %p111
    %p113 = scmp.ne.s32.totalorder %s99, %s100
    %p114 = scmp.eq.s32.totalorder %s18, 31
    %p115 = por %p113, %p114
    %p117 = scmp.ne.s32.totalorder %s100, %s116
    %p118 = scmp.eq.s32.totalorder %s18, 0
    %p119 = por %p117, %p118
    %s121 = sadd.s32 %s120, 1
    %p124 = scmp.eq.s32.totalorder %s12, 31
    %p125 = scmp.ne.s32.totalorder %s120, %s122
    %p126 = scmp.eq.s32.totalorder %s12, 0
    %p127 = por %p125, %p126
    %p128 = scmp.ne.s32.totalorder %s120, %s122
    %p129 = scmp.eq.s32.totalorder %s17, 31
    %p130 = por %p128, %p129
    %p131 = scmp.ne.s32.totalorder %s122, %s123
    %p132 = scmp.eq.s32.totalorder %s17, 0
    %p133 = por %p131, %p132
    %p134 = scmp.ne.s32.totalorder %s122, %s123
    %p135 = scmp.eq.s32.totalorder %s18, 31
    %p136 = por %p134, %p135
    %p138 = scmp.ne.s32.totalorder %s123, %s137
    %p139 = scmp.eq.s32.totalorder %s18, 0
    %p140 = por %p138, %p139
    %s142 = sadd.s32 %s141, 1
    %p145 = scmp.eq.s32.totalorder %s12, 31
    %p146 = scmp.ne.s32.totalorder %s141, %s143
    %p147 = scmp.eq.s32.totalorder %s12, 0
    %p148 = por %p146, %p147
    %p149 = scmp.ne.s32.totalorder %s141, %s143
    %p150 = scmp.eq.s32.totalorder %s17, 31
    %p151 = por %p149, %p150
    %p152 = scmp.ne.s32.totalorder %s143, %s144
    %p153 = scmp.eq.s32.totalorder %s17, 0
    %p154 = por %p152, %p153
    %p155 = scmp.ne.s32.totalorder %s143, %s144
    %p156 = scmp.eq.s32.totalorder %s18, 31
    %p157 = por %p155, %p156
    %p159 = scmp.ne.s32.totalorder %s144, %s158
    %p160 = scmp.eq.s32.totalorder %s18, 0
    %p161 = por %p159, %p160
    %s163 = sadd.s32 %s162, 1
    %p166 = scmp.eq.s32.totalorder %s12, 31
    %p167 = scmp.ne.s32.totalorder %s162, %s164
    %p168 = scmp.eq.s32.totalorder %s12, 0
    %p169 = por %p167, %p168
    %p170 = scmp.ne.s32.totalorder %s162, %s164
    %p171 = scmp.eq.s32.totalorder %s17, 31
    %p172 = por %p170, %p171
    %p173 = scmp.ne.s32.totalorder %s164, %s165
    %p174 = scmp.eq.s32.totalorder %s17, 0
    %p175 = por %p173, %p174
    %p176 = scmp.ne.s32.totalorder %s164, %s165
    %p177 = scmp.eq.s32.totalorder %s18, 31
    %p178 = por %p176, %p177
    %p180 = scmp.ne.s32.totalorder %s165, %s179
    %p181 = scmp.eq.s32.totalorder %s18, 0
    %p182 = por %p180, %p181
    %s183 = ssub.s32 %s19, %s31
    %s184 = ssub.s32 %s20, %s27
    %s185 = sor.u32 %s183, %s184
    %p186 = scmp.eq.s32.totalorder %s185, 0
    %s188 = sadd.s32 %s187, 1
    %s189 = scalar_select %p186, %s187, %s188
    %p192 = pneg %p186
    %p193 = scmp.eq.s32.totalorder %s12, 31
    %p194 = por %p192, %p193
    %p195 = scmp.ne.s32.totalorder %s187, %s190
    %p196 = scmp.eq.s32.totalorder %s12, 0
    %p197 = por %p195, %p196
    %p198 = scmp.ne.s32.totalorder %s187, %s190
    %p199 = scmp.eq.s32.totalorder %s17, 31
    %p200 = por %p198, %p199
    %p201 = scmp.ne.s32.totalorder %s190, %s191
    %p202 = scmp.eq.s32.totalorder %s17, 0
    %p203 = por %p201, %p202
    %p204 = scmp.ne.s32.totalorder %s190, %s191
    %p205 = scmp.eq.s32.totalorder %s18, 31
    %p206 = por %p204, %p205
    %p208 = scmp.ne.s32.totalorder %s191, %s207
    %p209 = scmp.eq.s32.totalorder %s18, 0
    %p210 = por %p208, %p209
    %p211 = scmp.le.s32.totalorder 1, %s12
    %p212 = scmp.lt.s32.totalorder %s12, 33
    %p213 = pnand %p211, %p212
    %p214 = pneg %p213
    // Predicated region
    $region9: #{en_res_block.2} parent=5 // pred_check
      _
    $region10: #{en_res_block.2} parent=5 // pred_check_branch
      %216 = sbr.rel (%p213) target = $region12
    $region11: #{en_res_block.2} parent=5 // pred_region
      %s217 = ssub.s32 %s12, 1
      // Predicated region
      $region13: #{en_res_block.2} parent=11 // pred_check
        %p218 = pneg %p133
      $region14: #{en_res_block.2} parent=11 // pred_check_branch
        %220 = sbr.rel (%p218) target = $region16
      $region15: #{en_res_block.2} parent=11 // pred_region
        _
      $region16: #{en_res_block.2} parent=11 // pred_fallthru
        _
      // Predicated region
      $region17: #{en_res_block.2} parent=11 // pred_check
        %p221 = pneg %p154
      $region18: #{en_res_block.2} parent=11 // pred_check_branch
        %223 = sbr.rel (%p221) target = $region20
      $region19: #{en_res_block.2} parent=11 // pred_region
        _
      $region20: #{en_res_block.2} parent=11 // pred_fallthru
        _
      // Predicated region
      $region21: #{en_res_block.2} parent=11 // pred_check
        %p224 = pneg %p175
      $region22: #{en_res_block.2} parent=11 // pred_check_branch
        %226 = sbr.rel (%p224) target = $region24
      $region23: #{en_res_block.2} parent=11 // pred_region
        _
      $region24: #{en_res_block.2} parent=11 // pred_fallthru
        _
    $region12: #{en_res_block.2} parent=5 // pred_fallthru
      _
    %p227 = scmp.lt.s32.totalorder %s12, 32
    // Predicated region
    $region25: #{en_res_block.2} parent=5 // pred_check
      %p228 = pneg %p227
    $region26: #{en_res_block.2} parent=5 // pred_check_branch
      %230 = sbr.rel (%p228) target = $region28
    $region27: #{en_res_block.2} parent=5 // pred_region
      // Predicated region
      $region29: #{en_res_block.2} parent=27 // pred_check
        %p231 = pneg %p46
      $region30: #{en_res_block.2} parent=27 // pred_check_branch
        %233 = sbr.rel (%p231) target = $region32
      $region31: #{en_res_block.2} parent=27 // pred_region
        %p234 = scmp.lt.s32.totalorder %s19, 1
        %s235 = scalar_select %p234, %s19, 1
        %p236 = scmp.lt.s32.totalorder %s20, 17
        %s237 = scalar_select %p236, %s20, 17
        %s238 = smul.addr %s237, 4
        %s239 = smul.addr %s235, 72
        %s240 = sadd.s32 %s238, %s239
        %s241 = smul.addr %s240, 2
        %s242 = scalar_lea.vmem %s0, %s241
      $region32: #{en_res_block.2} parent=27 // pred_fallthru
        _
      // Predicated region
      $region33: #{en_res_block.2} parent=27 // pred_check
        %p243 = pneg %p76
      $region34: #{en_res_block.2} parent=27 // pred_check_branch
        %245 = sbr.rel (%p243) target = $region36
      $region35: #{en_res_block.2} parent=27 // pred_region
        %s246 = sadd.s32 %s20, 1
        %p247 = scmp.lt.s32.totalorder %s19, 1
        %s248 = scalar_select %p247, %s19, 1
        %p249 = scmp.lt.s32.totalorder %s246, 17
        %s250 = scalar_select %p249, %s246, 17
        %s251 = smul.addr %s250, 4
        %s252 = smul.addr %s248, 72
        %s253 = sadd.s32 %s251, %s252
        %s254 = smul.addr %s253, 2
        %s255 = scalar_lea.vmem %s1, %s254
        %s256 = sadd.s32 %s20, 1
      $region36: #{en_res_block.2} parent=27 // pred_fallthru
        _
      // Predicated region
      $region37: #{en_res_block.2} parent=27 // pred_check
        %p257 = pneg %p106
      $region38: #{en_res_block.2} parent=27 // pred_check_branch
        %259 = sbr.rel (%p257) target = $region40
      $region39: #{en_res_block.2} parent=27 // pred_region
        %s260 = sadd.s32 %s20, 2
        %p261 = scmp.lt.s32.totalorder %s19, 1
        %s262 = scalar_select %p261, %s19, 1
        %p263 = scmp.lt.s32.totalorder %s260, 17
        %s264 = scalar_select %p263, %s260, 17
        %s265 = smul.addr %s264, 4
        %s266 = smul.addr %s262, 72
        %s267 = sadd.s32 %s265, %s266
        %s268 = smul.addr %s267, 2
        %s269 = scalar_lea.vmem %s2, %s268
        %s270 = sadd.s32 %s20, 2
      $region40: #{en_res_block.2} parent=27 // pred_fallthru
        _
    $region28: #{en_res_block.2} parent=5 // pred_fallthru
      _
    %p271 = scmp.le.s32.totalorder 1, %s12
    %p272 = scmp.lt.s32.totalorder %s12, 33
    %p273 = pnand %p271, %p272
    %p274 = pneg %p273
    // Predicated region
    $region41: #{en_res_block.2} parent=5 // pred_check
      _
    $region42: #{en_res_block.2} parent=5 // pred_check_branch
      %276 = sbr.rel (%p273) target = $region44
    $region43: #{en_res_block.2} parent=5 // pred_region
      %s277 = ssub.s32 %s12, 1
      %p278 = scmp.lt.s32.totalorder %s21, 1
      %s279 = scalar_select %p278, %s21, 1
      %p280 = scmp.lt.s32.totalorder %s22, 17
      %s281 = scalar_select %p280, %s22, 17
      %s282 = smul.addr %s281, 4
      %s283 = smul.addr %s279, 72
      %s284 = sadd.s32 %s282, %s283
      %s285 = smul.addr %s284, 2
      %s286 = scalar_lea.vmem %s0, %s285
      %p287 = pneg %p52
      %p288 = pneg %p49
      %s289 = sadd.s32 %s22, 1
      %p290 = scmp.lt.s32.totalorder %s21, 1
      %s291 = scalar_select %p290, %s21, 1
      %p292 = scmp.lt.s32.totalorder %s289, 17
      %s293 = scalar_select %p292, %s289, 17
      %s294 = smul.addr %s293, 4
      %s295 = smul.addr %s291, 72
      %s296 = sadd.s32 %s294, %s295
      %s297 = smul.addr %s296, 2
      %s298 = scalar_lea.vmem %s1, %s297
      %p299 = pneg %p82
      %p300 = pneg %p79
      %s301 = sadd.s32 %s22, 2
      %p302 = scmp.lt.s32.totalorder %s21, 1
      %s303 = scalar_select %p302, %s21, 1
      %p304 = scmp.lt.s32.totalorder %s301, 17
      %s305 = scalar_select %p304, %s301, 17
      %s306 = smul.addr %s305, 4
      %s307 = smul.addr %s303, 72
      %s308 = sadd.s32 %s306, %s307
      %s309 = smul.addr %s308, 2
      %s310 = scalar_lea.vmem %s2, %s309
      %p311 = pneg %p112
      %p312 = pneg %p109
      %p313 = pneg %p133
      %p314 = pneg %p130
      %p315 = pneg %p154
      %p316 = pneg %p151
      %p317 = pneg %p175
      %p318 = pneg %p172
      %p319 = pneg %p203
      %p320 = pneg %p200
      %p321 = scmp.lt.s32.totalorder %s21, 1
      %s322 = scalar_select %p321, %s21, 1
      %p323 = scmp.lt.s32.totalorder %s22, 15
      %s324 = scalar_select %p323, %s22, 15
      %s325 = smul.addr %s324, 3
      %s326 = smul.addr %s322, 48
      %s327 = sadd.s32 %s325, %s326
      %s328 = smul.addr %s327, 2
      %s329 = scalar_lea.vmem %s6, %s328
      %p330 = scmp.lt.s32.totalorder %s21, 1
      %s331 = scalar_select %p330, %s21, 1
      %p332 = scmp.lt.s32.totalorder %s22, 17
      %s333 = scalar_select %p332, %s22, 17
      %s334 = smul.addr %s333, 4
      %s335 = smul.addr %s331, 72
      %s336 = sadd.s32 %s334, %s335
      %s337 = smul.addr %s336, 2
      %s338 = scalar_lea.vmem %s0, %s337
      %s339 = sadd.s32 %s22, 1
      %p340 = scmp.lt.s32.totalorder %s21, 1
      %s341 = scalar_select %p340, %s21, 1
      %p342 = scmp.lt.s32.totalorder %s339, 17
      %s343 = scalar_select %p342, %s339, 17
      %s344 = smul.addr %s343, 4
      %s345 = smul.addr %s341, 72
      %s346 = sadd.s32 %s344, %s345
      %s347 = smul.addr %s346, 2
      %s348 = scalar_lea.vmem %s1, %s347
      %s349 = sadd.s32 %s22, 1
      %s350 = sadd.s32 %s22, 2
      %p351 = scmp.lt.s32.totalorder %s21, 1
      %s352 = scalar_select %p351, %s21, 1
      %p353 = scmp.lt.s32.totalorder %s350, 17
      %s354 = scalar_select %p353, %s350, 17
      %s355 = smul.addr %s354, 4
      %s356 = smul.addr %s352, 72
      %s357 = sadd.s32 %s355, %s356
      %s358 = smul.addr %s357, 2
      %s359 = scalar_lea.vmem %s2, %s358
      %s360 = sadd.s32 %s22, 2
      %p361 = scmp.lt.s32.totalorder %s21, 1
      %s362 = scalar_select %p361, %s21, 1
      %p363 = scmp.lt.s32.totalorder %s22, 15
      %s364 = scalar_select %p363, %s22, 15
      %s365 = smul.addr %s364, 3
      %s366 = smul.addr %s362, 48
      %s367 = sadd.s32 %s365, %s366
      %s368 = smul.addr %s367, 2
      %s369 = scalar_lea.vmem %s6, %s368
      %v370 = vld [vmem:[%s338] sm:$0xff]
      %v371 = vunpack.c.l.bf16 %v370
      %v372 = vunpack.c.h.bf16 %v370
      %v375 = vcombine.high %v371, %v371
      %v376 = vcombine.high %v372, %v372
      %377 = vrot.lane.b32.xlu0 %v371, 123
      %v378 = vpop.permute.xlu0 %377
      %379 = vrot.lane.b32.xlu0 %v375, 123
      %v380 = vpop.permute.xlu0 %379
      %381 = vrot.lane.b32.xlu0 %v372, 123
      %v382 = vpop.permute.xlu0 %381
      %383 = vrot.lane.b32.xlu0 %v376, 123
      %v384 = vpop.permute.xlu0 %383
      %vm385 = vcmask 1006592
      %v386 = vsel %vm385, %v378, %v380
      %v387 = vsel %vm385, %v380, %v382
      %v388 = vsel %vm385, %v382, %v384
      %392 = vst [vmem:[#allocation2] sm:$0xf] %v386
      %393 = vst [vmem:[#allocation2 + $0x8] sm:$0xf] %v387
      %394 = vst [vmem:[#allocation2 + $0x10] sm:$0xf] %v388
      %v395 = vld [vmem:[%s338] sm:$0xff]
      %v396 = vunpack.c.l.bf16 %v395
      %v397 = vunpack.c.h.bf16 %v395
      %v400 = vcombine.low %v396, %v396
      %v401 = vcombine.low %v397, %v397
      %402 = vrot.lane.b32.xlu0 %v400, 122
      %v403 = vpop.permute.xlu0 %402
      %404 = vrot.lane.b32.xlu0 %v396, 122
      %v405 = vpop.permute.xlu0 %404
      %406 = vrot.lane.b32.xlu0 %v401, 122
      %v407 = vpop.permute.xlu0 %406
      %408 = vrot.lane.b32.xlu0 %v397, 122
      %v409 = vpop.permute.xlu0 %408
      %vm410 = vcmask 998400
      %v411 = vsel %vm410, %v403, %v405
      %v412 = vsel %vm410, %v405, %v407
      %v413 = vsel %vm410, %v407, %v409
      %417 = vst [vmem:[#allocation2] sm:$0xf0] %v411
      %418 = vst [vmem:[#allocation2 + $0x8] sm:$0xf0] %v412
      %419 = vst [vmem:[#allocation2 + $0x10] sm:$0xf0] %v413
      %v420 = vld [vmem:[%s338] sm:$0xff]
      %v421 = vunpack.c.l.bf16 %v420
      %v422 = vunpack.c.h.bf16 %v420
      %v425 = vcombine.high %v421, %v421
      %v426 = vcombine.high %v422, %v422
      %427 = vrot.lane.b32.xlu0 %v421, 121
      %v428 = vpop.permute.xlu0 %427
      %429 = vrot.lane.b32.xlu0 %v425, 121
      %v430 = vpop.permute.xlu0 %429
      %431 = vrot.lane.b32.xlu0 %v422, 121
      %v432 = vpop.permute.xlu0 %431
      %433 = vrot.lane.b32.xlu0 %v426, 121
      %v434 = vpop.permute.xlu0 %433
      %vm435 = vcmask 990208
      %v436 = vsel %vm435, %v428, %v430
      %v437 = vsel %vm435, %v430, %v432
      %v438 = vsel %vm435, %v432, %v434
      %442 = vst [vmem:[#allocation2 + $0x18] sm:$0xf] %v436
      %443 = vst [vmem:[#allocation2 + $0x20] sm:$0xf] %v437
      %444 = vst [vmem:[#allocation2 + $0x28] sm:$0xf] %v438
      %v445 = vld [vmem:[%s338] sm:$0xff]
      %v446 = vunpack.c.l.bf16 %v445
      %v447 = vunpack.c.h.bf16 %v445
      %v450 = vcombine.low %v446, %v446
      %v451 = vcombine.low %v447, %v447
      %452 = vrot.lane.b32.xlu0 %v450, 105
      %v453 = vpop.permute.xlu0 %452
      %454 = vrot.lane.b32.xlu0 %v446, 105
      %v455 = vpop.permute.xlu0 %454
      %456 = vrot.lane.b32.xlu0 %v451, 105
      %v457 = vpop.permute.xlu0 %456
      %458 = vrot.lane.b32.xlu0 %v447, 105
      %v459 = vpop.permute.xlu0 %458
      %vm460 = vcmask 859136
      %v461 = vsel %vm460, %v453, %v455
      %v462 = vsel %vm460, %v455, %v457
      %v463 = vsel %vm460, %v457, %v459
      %467 = vst [vmem:[#allocation2 + $0x18] sm:$0xf0] %v461
      %468 = vst [vmem:[#allocation2 + $0x20] sm:$0xf0] %v462
      %469 = vst [vmem:[#allocation2 + $0x28] sm:$0xf0] %v463
      %v470 = vld [vmem:[%s338] sm:$0xff]
      %v471 = vunpack.c.l.bf16 %v470
      %v472 = vunpack.c.h.bf16 %v470
      %v475 = vcombine.high %v471, %v471
      %v476 = vcombine.high %v472, %v472
      %477 = vrot.lane.b32.xlu0 %v471, 104
      %v478 = vpop.permute.xlu0 %477
      %479 = vrot.lane.b32.xlu0 %v475, 104
      %v480 = vpop.permute.xlu0 %479
      %481 = vrot.lane.b32.xlu0 %v472, 104
      %v482 = vpop.permute.xlu0 %481
      %483 = vrot.lane.b32.xlu0 %v476, 104
      %v484 = vpop.permute.xlu0 %483
      %vm485 = vcmask 850944
      %v486 = vsel %vm485, %v478, %v480
      %v487 = vsel %vm485, %v480, %v482
      %v488 = vsel %vm485, %v482, %v484
      %492 = vst [vmem:[#allocation2 + $0x30] sm:$0xf] %v486
      %493 = vst [vmem:[#allocation2 + $0x38] sm:$0xf] %v487
      %494 = vst [vmem:[#allocation2 + $0x40] sm:$0xf] %v488
      %v495 = vld [vmem:[%s338] sm:$0xff]
      %v496 = vunpack.c.l.bf16 %v495
      %v497 = vunpack.c.h.bf16 %v495
      %v500 = vcombine.low %v496, %v496
      %v501 = vcombine.low %v497, %v497
      %502 = vrot.lane.b32.xlu0 %v500, 103
      %v503 = vpop.permute.xlu0 %502
      %504 = vrot.lane.b32.xlu0 %v496, 103
      %v505 = vpop.permute.xlu0 %504
      %506 = vrot.lane.b32.xlu0 %v501, 103
      %v507 = vpop.permute.xlu0 %506
      %508 = vrot.lane.b32.xlu0 %v497, 103
      %v509 = vpop.permute.xlu0 %508
      %vm510 = vcmask 842752
      %v511 = vsel %vm510, %v503, %v505
      %v512 = vsel %vm510, %v505, %v507
      %v513 = vsel %vm510, %v507, %v509
      %517 = vst [vmem:[#allocation2 + $0x30] sm:$0xf0] %v511
      %518 = vst [vmem:[#allocation2 + $0x38] sm:$0xf0] %v512
      %519 = vst [vmem:[#allocation2 + $0x40] sm:$0xf0] %v513
      %v520 = vld [vmem:[%s338] sm:$0xff]
      %v521 = vunpack.c.l.bf16 %v520
      %v522 = vunpack.c.h.bf16 %v520
      %v525 = vcombine.high %v521, %v521
      %v526 = vcombine.high %v522, %v522
      %527 = vrot.lane.b32.xlu0 %v521, 87
      %v528 = vpop.permute.xlu0 %527
      %529 = vrot.lane.b32.xlu0 %v525, 87
      %v530 = vpop.permute.xlu0 %529
      %531 = vrot.lane.b32.xlu0 %v522, 87
      %v532 = vpop.permute.xlu0 %531
      %533 = vrot.lane.b32.xlu0 %v526, 87
      %v534 = vpop.permute.xlu0 %533
      %vm535 = vcmask 711680
      %v536 = vsel %vm535, %v528, %v530
      %v537 = vsel %vm535, %v530, %v532
      %v538 = vsel %vm535, %v532, %v534
      %542 = vst [vmem:[#allocation2 + $0x48] sm:$0xf] %v536
      %543 = vst [vmem:[#allocation2 + $0x50] sm:$0xf] %v537
      %544 = vst [vmem:[#allocation2 + $0x58] sm:$0xf] %v538
      %v545 = vld [vmem:[%s338] sm:$0xff]
      %v546 = vunpack.c.l.bf16 %v545
      %v547 = vunpack.c.h.bf16 %v545
      %v550 = vcombine.low %v546, %v546
      %v551 = vcombine.low %v547, %v547
      %552 = vrot.lane.b32.xlu0 %v550, 86
      %v553 = vpop.permute.xlu0 %552
      %554 = vrot.lane.b32.xlu0 %v546, 86
      %v555 = vpop.permute.xlu0 %554
      %556 = vrot.lane.b32.xlu0 %v551, 86
      %v557 = vpop.permute.xlu0 %556
      %558 = vrot.lane.b32.xlu0 %v547, 86
      %v559 = vpop.permute.xlu0 %558
      %vm560 = vcmask 703488
      %v561 = vsel %vm560, %v553, %v555
      %v562 = vsel %vm560, %v555, %v557
      %v563 = vsel %vm560, %v557, %v559
      %567 = vst [vmem:[#allocation2 + $0x48] sm:$0xf0] %v561
      %568 = vst [vmem:[#allocation2 + $0x50] sm:$0xf0] %v562
      %569 = vst [vmem:[#allocation2 + $0x58] sm:$0xf0] %v563
      %v570 = vld [vmem:[%s338] sm:$0xff]
      %v571 = vunpack.c.l.bf16 %v570
      %v572 = vunpack.c.h.bf16 %v570
      %v575 = vcombine.high %v571, %v571
      %v576 = vcombine.high %v572, %v572
      %577 = vrot.lane.b32.xlu0 %v571, 85
      %v578 = vpop.permute.xlu0 %577
      %579 = vrot.lane.b32.xlu0 %v575, 85
      %v580 = vpop.permute.xlu0 %579
      %581 = vrot.lane.b32.xlu0 %v572, 85
      %v582 = vpop.permute.xlu0 %581
      %583 = vrot.lane.b32.xlu0 %v576, 85
      %v584 = vpop.permute.xlu0 %583
      %vm585 = vcmask 695296
      %v586 = vsel %vm585, %v578, %v580
      %v587 = vsel %vm585, %v580, %v582
      %v588 = vsel %vm585, %v582, %v584
      %592 = vst [vmem:[#allocation2 + $0x60] sm:$0xf] %v586
      %593 = vst [vmem:[#allocation2 + $0x68] sm:$0xf] %v587
      %594 = vst [vmem:[#allocation2 + $0x70] sm:$0xf] %v588
      %v595 = vld [vmem:[%s348] sm:$0xff]
      %v596 = vunpack.c.l.bf16 %v595
      %v597 = vunpack.c.h.bf16 %v595
      %v600 = vcombine.low %v596, %v596
      %v601 = vcombine.low %v597, %v597
      %602 = vrot.lane.b32.xlu0 %v600, 123
      %v603 = vpop.permute.xlu0 %602
      %604 = vrot.lane.b32.xlu0 %v596, 123
      %v605 = vpop.permute.xlu0 %604
      %606 = vrot.lane.b32.xlu0 %v601, 123
      %v607 = vpop.permute.xlu0 %606
      %608 = vrot.lane.b32.xlu0 %v597, 123
      %v609 = vpop.permute.xlu0 %608
      %v610 = vsel %vm385, %v603, %v605
      %v611 = vsel %vm385, %v605, %v607
      %v612 = vsel %vm385, %v607, %v609
      %616 = vst [vmem:[#allocation2 + $0x60] sm:$0xf0] %v610
      %617 = vst [vmem:[#allocation2 + $0x68] sm:$0xf0] %v611
      %618 = vst [vmem:[#allocation2 + $0x70] sm:$0xf0] %v612
      %v619 = vld [vmem:[%s348] sm:$0xff]
      %v620 = vunpack.c.l.bf16 %v619
      %v621 = vunpack.c.h.bf16 %v619
      %v624 = vcombine.high %v620, %v620
      %v625 = vcombine.high %v621, %v621
      %626 = vrot.lane.b32.xlu0 %v620, 122
      %v627 = vpop.permute.xlu0 %626
      %628 = vrot.lane.b32.xlu0 %v624, 122
      %v629 = vpop.permute.xlu0 %628
      %630 = vrot.lane.b32.xlu0 %v621, 122
      %v631 = vpop.permute.xlu0 %630
      %632 = vrot.lane.b32.xlu0 %v625, 122
      %v633 = vpop.permute.xlu0 %632
      %v634 = vsel %vm410, %v627, %v629
      %v635 = vsel %vm410, %v629, %v631
      %v636 = vsel %vm410, %v631, %v633
      %640 = vst [vmem:[#allocation2 + $0x78] sm:$0xf] %v634
      %641 = vst [vmem:[#allocation2 + $0x80] sm:$0xf] %v635
      %642 = vst [vmem:[#allocation2 + $0x88] sm:$0xf] %v636
      %v643 = vld [vmem:[%s348] sm:$0xff]
      %v644 = vunpack.c.l.bf16 %v643
      %v645 = vunpack.c.h.bf16 %v643
      %v648 = vcombine.low %v644, %v644
      %v649 = vcombine.low %v645, %v645
      %650 = vrot.lane.b32.xlu0 %v648, 121
      %v651 = vpop.permute.xlu0 %650
      %652 = vrot.lane.b32.xlu0 %v644, 121
      %v653 = vpop.permute.xlu0 %652
      %654 = vrot.lane.b32.xlu0 %v649, 121
      %v655 = vpop.permute.xlu0 %654
      %656 = vrot.lane.b32.xlu0 %v645, 121
      %v657 = vpop.permute.xlu0 %656
      %v658 = vsel %vm435, %v651, %v653
      %v659 = vsel %vm435, %v653, %v655
      %v660 = vsel %vm435, %v655, %v657
      %664 = vst [vmem:[#allocation2 + $0x78] sm:$0xf0] %v658
      %665 = vst [vmem:[#allocation2 + $0x80] sm:$0xf0] %v659
      %666 = vst [vmem:[#allocation2 + $0x88] sm:$0xf0] %v660
      %v667 = vld [vmem:[%s348] sm:$0xff]
      %v668 = vunpack.c.l.bf16 %v667
      %v669 = vunpack.c.h.bf16 %v667
      %v672 = vcombine.high %v668, %v668
      %v673 = vcombine.high %v669, %v669
      %674 = vrot.lane.b32.xlu0 %v668, 105
      %v675 = vpop.permute.xlu0 %674
      %676 = vrot.lane.b32.xlu0 %v672, 105
      %v677 = vpop.permute.xlu0 %676
      %678 = vrot.lane.b32.xlu0 %v669, 105
      %v679 = vpop.permute.xlu0 %678
      %680 = vrot.lane.b32.xlu0 %v673, 105
      %v681 = vpop.permute.xlu0 %680
      %v682 = vsel %vm460, %v675, %v677
      %v683 = vsel %vm460, %v677, %v679
      %v684 = vsel %vm460, %v679, %v681
      %688 = vst [vmem:[#allocation2 + $0x90] sm:$0xf] %v682
      %689 = vst [vmem:[#allocation2 + $0x98] sm:$0xf] %v683
      %690 = vst [vmem:[#allocation2 + $0xa0] sm:$0xf] %v684
      %v691 = vld [vmem:[%s348] sm:$0xff]
      %v692 = vunpack.c.l.bf16 %v691
      %v693 = vunpack.c.h.bf16 %v691
      %v696 = vcombine.low %v692, %v692
      %v697 = vcombine.low %v693, %v693
      %698 = vrot.lane.b32.xlu0 %v696, 104
      %v699 = vpop.permute.xlu0 %698
      %700 = vrot.lane.b32.xlu0 %v692, 104
      %v701 = vpop.permute.xlu0 %700
      %702 = vrot.lane.b32.xlu0 %v697, 104
      %v703 = vpop.permute.xlu0 %702
      %704 = vrot.lane.b32.xlu0 %v693, 104
      %v705 = vpop.permute.xlu0 %704
      %v706 = vsel %vm485, %v699, %v701
      %v707 = vsel %vm485, %v701, %v703
      %v708 = vsel %vm485, %v703, %v705
      %712 = vst [vmem:[#allocation2 + $0x90] sm:$0xf0] %v706
      %713 = vst [vmem:[#allocation2 + $0x98] sm:$0xf0] %v707
      %714 = vst [vmem:[#allocation2 + $0xa0] sm:$0xf0] %v708
      %v715 = vld [vmem:[%s348] sm:$0xff]
      %v716 = vunpack.c.l.bf16 %v715
      %v717 = vunpack.c.h.bf16 %v715
      %v720 = vcombine.high %v716, %v716
      %v721 = vcombine.high %v717, %v717
      %722 = vrot.lane.b32.xlu0 %v716, 103
      %v723 = vpop.permute.xlu0 %722
      %724 = vrot.lane.b32.xlu0 %v720, 103
      %v725 = vpop.permute.xlu0 %724
      %726 = vrot.lane.b32.xlu0 %v717, 103
      %v727 = vpop.permute.xlu0 %726
      %728 = vrot.lane.b32.xlu0 %v721, 103
      %v729 = vpop.permute.xlu0 %728
      %v730 = vsel %vm510, %v723, %v725
      %v731 = vsel %vm510, %v725, %v727
      %v732 = vsel %vm510, %v727, %v729
      %736 = vst [vmem:[#allocation2 + $0xa8] sm:$0xf] %v730
      %737 = vst [vmem:[#allocation2 + $0xb0] sm:$0xf] %v731
      %738 = vst [vmem:[#allocation2 + $0xb8] sm:$0xf] %v732
      %v739 = vld [vmem:[%s348] sm:$0xff]
      %v740 = vunpack.c.l.bf16 %v739
      %v741 = vunpack.c.h.bf16 %v739
      %v744 = vcombine.low %v740, %v740
      %v745 = vcombine.low %v741, %v741
      %746 = vrot.lane.b32.xlu0 %v744, 87
      %v747 = vpop.permute.xlu0 %746
      %748 = vrot.lane.b32.xlu0 %v740, 87
      %v749 = vpop.permute.xlu0 %748
      %750 = vrot.lane.b32.xlu0 %v745, 87
      %v751 = vpop.permute.xlu0 %750
      %752 = vrot.lane.b32.xlu0 %v741, 87
      %v753 = vpop.permute.xlu0 %752
      %v754 = vsel %vm535, %v747, %v749
      %v755 = vsel %vm535, %v749, %v751
      %v756 = vsel %vm535, %v751, %v753
      %760 = vst [vmem:[#allocation2 + $0xa8] sm:$0xf0] %v754
      %761 = vst [vmem:[#allocation2 + $0xb0] sm:$0xf0] %v755
      %762 = vst [vmem:[#allocation2 + $0xb8] sm:$0xf0] %v756
      %v763 = vld [vmem:[%s348] sm:$0xff]
      %v764 = vunpack.c.l.bf16 %v763
      %v765 = vunpack.c.h.bf16 %v763
      %v768 = vcombine.high %v764, %v764
      %v769 = vcombine.high %v765, %v765
      %770 = vrot.lane.b32.xlu0 %v764, 86
      %v771 = vpop.permute.xlu0 %770
      %772 = vrot.lane.b32.xlu0 %v768, 86
      %v773 = vpop.permute.xlu0 %772
      %774 = vrot.lane.b32.xlu0 %v765, 86
      %v775 = vpop.permute.xlu0 %774
      %776 = vrot.lane.b32.xlu0 %v769, 86
      %v777 = vpop.permute.xlu0 %776
      %v778 = vsel %vm560, %v771, %v773
      %v779 = vsel %vm560, %v773, %v775
      %v780 = vsel %vm560, %v775, %v777
      %784 = vst [vmem:[#allocation2 + $0xc0] sm:$0xf] %v778
      %785 = vst [vmem:[#allocation2 + $0xc8] sm:$0xf] %v779
      %786 = vst [vmem:[#allocation2 + $0xd0] sm:$0xf] %v780
      %v787 = vld [vmem:[%s348] sm:$0xff]
      %v788 = vunpack.c.l.bf16 %v787
      %v789 = vunpack.c.h.bf16 %v787
      %v792 = vcombine.low %v788, %v788
      %v793 = vcombine.low %v789, %v789
      %794 = vrot.lane.b32.xlu0 %v792, 85
      %v795 = vpop.permute.xlu0 %794
      %796 = vrot.lane.b32.xlu0 %v788, 85
      %v797 = vpop.permute.xlu0 %796
      %798 = vrot.lane.b32.xlu0 %v793, 85
      %v799 = vpop.permute.xlu0 %798
      %800 = vrot.lane.b32.xlu0 %v789, 85
      %v801 = vpop.permute.xlu0 %800
      %v802 = vsel %vm585, %v795, %v797
      %v803 = vsel %vm585, %v797, %v799
      %v804 = vsel %vm585, %v799, %v801
      %808 = vst [vmem:[#allocation2 + $0xc0] sm:$0xf0] %v802
      %809 = vst [vmem:[#allocation2 + $0xc8] sm:$0xf0] %v803
      %810 = vst [vmem:[#allocation2 + $0xd0] sm:$0xf0] %v804
      %v811 = vld [vmem:[%s359] sm:$0xff]
      %v812 = vunpack.c.l.bf16 %v811
      %v813 = vunpack.c.h.bf16 %v811
      %v816 = vcombine.high %v812, %v812
      %v817 = vcombine.high %v813, %v813
      %818 = vrot.lane.b32.xlu0 %v812, 123
      %v819 = vpop.permute.xlu0 %818
      %820 = vrot.lane.b32.xlu0 %v816, 123
      %v821 = vpop.permute.xlu0 %820
      %822 = vrot.lane.b32.xlu0 %v813, 123
      %v823 = vpop.permute.xlu0 %822
      %824 = vrot.lane.b32.xlu0 %v817, 123
      %v825 = vpop.permute.xlu0 %824
      %v826 = vsel %vm385, %v819, %v821
      %v827 = vsel %vm385, %v821, %v823
      %v828 = vsel %vm385, %v823, %v825
      %832 = vst [vmem:[#allocation2 + $0xd8] sm:$0xf] %v826
      %833 = vst [vmem:[#allocation2 + $0xe0] sm:$0xf] %v827
      %834 = vst [vmem:[#allocation2 + $0xe8] sm:$0xf] %v828
      %v835 = vld [vmem:[%s359] sm:$0xff]
      %v836 = vunpack.c.l.bf16 %v835
      %v837 = vunpack.c.h.bf16 %v835
      %v840 = vcombine.low %v836, %v836
      %v841 = vcombine.low %v837, %v837
      %842 = vrot.lane.b32.xlu0 %v840, 122
      %v843 = vpop.permute.xlu0 %842
      %844 = vrot.lane.b32.xlu0 %v836, 122
      %v845 = vpop.permute.xlu0 %844
      %846 = vrot.lane.b32.xlu0 %v841, 122
      %v847 = vpop.permute.xlu0 %846
      %848 = vrot.lane.b32.xlu0 %v837, 122
      %v849 = vpop.permute.xlu0 %848
      %v850 = vsel %vm410, %v843, %v845
      %v851 = vsel %vm410, %v845, %v847
      %v852 = vsel %vm410, %v847, %v849
      %856 = vst [vmem:[#allocation2 + $0xd8] sm:$0xf0] %v850
      %857 = vst [vmem:[#allocation2 + $0xe0] sm:$0xf0] %v851
      %858 = vst [vmem:[#allocation2 + $0xe8] sm:$0xf0] %v852
      %v859 = vld [vmem:[%s359] sm:$0xff]
      %v860 = vunpack.c.l.bf16 %v859
      %v861 = vunpack.c.h.bf16 %v859
      %v864 = vcombine.high %v860, %v860
      %v865 = vcombine.high %v861, %v861
      %866 = vrot.lane.b32.xlu0 %v860, 121
      %v867 = vpop.permute.xlu0 %866
      %868 = vrot.lane.b32.xlu0 %v864, 121
      %v869 = vpop.permute.xlu0 %868
      %870 = vrot.lane.b32.xlu0 %v861, 121
      %v871 = vpop.permute.xlu0 %870
      %872 = vrot.lane.b32.xlu0 %v865, 121
      %v873 = vpop.permute.xlu0 %872
      %v874 = vsel %vm435, %v867, %v869
      %v875 = vsel %vm435, %v869, %v871
      %v876 = vsel %vm435, %v871, %v873
      %880 = vst [vmem:[#allocation2 + $0xf0] sm:$0xf] %v874
      %881 = vst [vmem:[#allocation2 + $0xf8] sm:$0xf] %v875
      %882 = vst [vmem:[#allocation2 + $0x100] sm:$0xf] %v876
      %v883 = vld [vmem:[%s359] sm:$0xff]
      %v884 = vunpack.c.l.bf16 %v883
      %v885 = vunpack.c.h.bf16 %v883
      %v888 = vcombine.low %v884, %v884
      %v889 = vcombine.low %v885, %v885
      %890 = vrot.lane.b32.xlu0 %v888, 105
      %v891 = vpop.permute.xlu0 %890
      %892 = vrot.lane.b32.xlu0 %v884, 105
      %v893 = vpop.permute.xlu0 %892
      %894 = vrot.lane.b32.xlu0 %v889, 105
      %v895 = vpop.permute.xlu0 %894
      %896 = vrot.lane.b32.xlu0 %v885, 105
      %v897 = vpop.permute.xlu0 %896
      %v898 = vsel %vm460, %v891, %v893
      %v899 = vsel %vm460, %v893, %v895
      %v900 = vsel %vm460, %v895, %v897
      %904 = vst [vmem:[#allocation2 + $0xf0] sm:$0xf0] %v898
      %905 = vst [vmem:[#allocation2 + $0xf8] sm:$0xf0] %v899
      %906 = vst [vmem:[#allocation2 + $0x100] sm:$0xf0] %v900
      %v907 = vld [vmem:[%s359] sm:$0xff]
      %v908 = vunpack.c.l.bf16 %v907
      %v909 = vunpack.c.h.bf16 %v907
      %v912 = vcombine.high %v908, %v908
      %v913 = vcombine.high %v909, %v909
      %914 = vrot.lane.b32.xlu0 %v908, 104
      %v915 = vpop.permute.xlu0 %914
      %916 = vrot.lane.b32.xlu0 %v912, 104
      %v917 = vpop.permute.xlu0 %916
      %918 = vrot.lane.b32.xlu0 %v909, 104
      %v919 = vpop.permute.xlu0 %918
      %920 = vrot.lane.b32.xlu0 %v913, 104
      %v921 = vpop.permute.xlu0 %920
      %v922 = vsel %vm485, %v915, %v917
      %v923 = vsel %vm485, %v917, %v919
      %v924 = vsel %vm485, %v919, %v921
      %928 = vst [vmem:[#allocation2 + $0x108] sm:$0xf] %v922
      %929 = vst [vmem:[#allocation2 + $0x110] sm:$0xf] %v923
      %930 = vst [vmem:[#allocation2 + $0x118] sm:$0xf] %v924
      %v931 = vld [vmem:[%s359] sm:$0xff]
      %v932 = vunpack.c.l.bf16 %v931
      %v933 = vunpack.c.h.bf16 %v931
      %v936 = vcombine.low %v932, %v932
      %v937 = vcombine.low %v933, %v933
      %938 = vrot.lane.b32.xlu0 %v936, 103
      %v939 = vpop.permute.xlu0 %938
      %940 = vrot.lane.b32.xlu0 %v932, 103
      %v941 = vpop.permute.xlu0 %940
      %942 = vrot.lane.b32.xlu0 %v937, 103
      %v943 = vpop.permute.xlu0 %942
      %944 = vrot.lane.b32.xlu0 %v933, 103
      %v945 = vpop.permute.xlu0 %944
      %v946 = vsel %vm510, %v939, %v941
      %v947 = vsel %vm510, %v941, %v943
      %v948 = vsel %vm510, %v943, %v945
      %952 = vst [vmem:[#allocation2 + $0x108] sm:$0xf0] %v946
      %953 = vst [vmem:[#allocation2 + $0x110] sm:$0xf0] %v947
      %954 = vst [vmem:[#allocation2 + $0x118] sm:$0xf0] %v948
      %v955 = vld [vmem:[%s359] sm:$0xff]
      %v956 = vunpack.c.l.bf16 %v955
      %v957 = vunpack.c.h.bf16 %v955
      %v960 = vcombine.high %v956, %v956
      %v961 = vcombine.high %v957, %v957
      %962 = vrot.lane.b32.xlu0 %v956, 87
      %v963 = vpop.permute.xlu0 %962
      %964 = vrot.lane.b32.xlu0 %v960, 87
      %v965 = vpop.permute.xlu0 %964
      %966 = vrot.lane.b32.xlu0 %v957, 87
      %v967 = vpop.permute.xlu0 %966
      %968 = vrot.lane.b32.xlu0 %v961, 87
      %v969 = vpop.permute.xlu0 %968
      %v970 = vsel %vm535, %v963, %v965
      %v971 = vsel %vm535, %v965, %v967
      %v972 = vsel %vm535, %v967, %v969
      %976 = vst [vmem:[#allocation2 + $0x120] sm:$0xf] %v970
      %977 = vst [vmem:[#allocation2 + $0x128] sm:$0xf] %v971
      %978 = vst [vmem:[#allocation2 + $0x130] sm:$0xf] %v972
      %v979 = vld [vmem:[%s359] sm:$0xff]
      %v980 = vunpack.c.l.bf16 %v979
      %v981 = vunpack.c.h.bf16 %v979
      %v984 = vcombine.low %v980, %v980
      %v985 = vcombine.low %v981, %v981
      %986 = vrot.lane.b32.xlu0 %v984, 86
      %v987 = vpop.permute.xlu0 %986
      %988 = vrot.lane.b32.xlu0 %v980, 86
      %v989 = vpop.permute.xlu0 %988
      %990 = vrot.lane.b32.xlu0 %v985, 86
      %v991 = vpop.permute.xlu0 %990
      %992 = vrot.lane.b32.xlu0 %v981, 86
      %v993 = vpop.permute.xlu0 %992
      %v994 = vsel %vm560, %v987, %v989
      %v995 = vsel %vm560, %v989, %v991
      %v996 = vsel %vm560, %v991, %v993
      %1000 = vst [vmem:[#allocation2 + $0x120] sm:$0xf0] %v994
      %1001 = vst [vmem:[#allocation2 + $0x128] sm:$0xf0] %v995
      %1002 = vst [vmem:[#allocation2 + $0x130] sm:$0xf0] %v996
      %v1003 = vld [vmem:[%s359] sm:$0xff]
      %v1004 = vunpack.c.l.bf16 %v1003
      %v1005 = vunpack.c.h.bf16 %v1003
      %v1008 = vcombine.high %v1004, %v1004
      %v1009 = vcombine.high %v1005, %v1005
      %1010 = vrot.lane.b32.xlu0 %v1004, 85
      %v1011 = vpop.permute.xlu0 %1010
      %1012 = vrot.lane.b32.xlu0 %v1008, 85
      %v1013 = vpop.permute.xlu0 %1012
      %1014 = vrot.lane.b32.xlu0 %v1005, 85
      %v1015 = vpop.permute.xlu0 %1014
      %1016 = vrot.lane.b32.xlu0 %v1009, 85
      %v1017 = vpop.permute.xlu0 %1016
      %v1018 = vsel %vm585, %v1011, %v1013
      %v1019 = vsel %vm585, %v1013, %v1015
      %v1020 = vsel %vm585, %v1015, %v1017
      %1024 = vst [vmem:[#allocation2 + $0x138] sm:$0xf] %v1018
      %1025 = vst [vmem:[#allocation2 + $0x140] sm:$0xf] %v1019
      %1026 = vst [vmem:[#allocation2 + $0x148] sm:$0xf] %v1020
      %v1027 = vld [vmem:[%s3] sm:$0xf]
      %v1028 = vld [vmem:[#allocation2] sm:$0xff]
      %v1029 = vld [vmem:[#allocation2 + $0x8] sm:$0xff]
      %v1030 = vld [vmem:[#allocation2 + $0x10] sm:$0xff]
      %v1031 = vld [vmem:[#allocation2 + $0x18] sm:$0xff]
      %v1032 = vld [vmem:[#allocation2 + $0x20] sm:$0xff]
      %v1033 = vld [vmem:[#allocation2 + $0x28] sm:$0xff]
      %v1034 = vld [vmem:[#allocation2 + $0x30] sm:$0xff]
      %v1035 = vld [vmem:[#allocation2 + $0x38] sm:$0xff]
      %v1036 = vld [vmem:[#allocation2 + $0x40] sm:$0xff]
      %v1037 = vld [vmem:[#allocation2 + $0x48] sm:$0xff]
      %v1038 = vld [vmem:[#allocation2 + $0x50] sm:$0xff]
      %v1039 = vld [vmem:[#allocation2 + $0x58] sm:$0xff]
      %v1040 = vld [vmem:[#allocation2 + $0x60] sm:$0xff]
      %v1041 = vld [vmem:[#allocation2 + $0x68] sm:$0xff]
      %v1042 = vld [vmem:[#allocation2 + $0x70] sm:$0xff]
      %v1043 = vld [vmem:[#allocation2 + $0x78] sm:$0xff]
      %v1044 = vld [vmem:[#allocation2 + $0x80] sm:$0xff]
      %v1045 = vld [vmem:[#allocation2 + $0x88] sm:$0xff]
      %v1046 = vld [vmem:[#allocation2 + $0x90] sm:$0xff]
      %v1047 = vld [vmem:[#allocation2 + $0x98] sm:$0xff]
      %v1048 = vld [vmem:[#allocation2 + $0xa0] sm:$0xff]
      %v1049 = vld [vmem:[#allocation2 + $0xa8] sm:$0xff]
      %v1050 = vld [vmem:[#allocation2 + $0xb0] sm:$0xff]
      %v1051 = vld [vmem:[#allocation2 + $0xb8] sm:$0xff]
      %v1052 = vld [vmem:[#allocation2 + $0xc0] sm:$0xff]
      %v1053 = vld [vmem:[#allocation2 + $0xc8] sm:$0xff]
      %v1054 = vld [vmem:[#allocation2 + $0xd0] sm:$0xff]
      %v1055 = vld [vmem:[#allocation2 + $0xd8] sm:$0xff]
      %v1056 = vld [vmem:[#allocation2 + $0xe0] sm:$0xff]
      %v1057 = vld [vmem:[#allocation2 + $0xe8] sm:$0xff]
      %v1058 = vld [vmem:[#allocation2 + $0xf0] sm:$0xff]
      %v1059 = vld [vmem:[#allocation2 + $0xf8] sm:$0xff]
      %v1060 = vld [vmem:[#allocation2 + $0x100] sm:$0xff]
      %v1061 = vld [vmem:[#allocation2 + $0x108] sm:$0xff]
      %v1062 = vld [vmem:[#allocation2 + $0x110] sm:$0xff]
      %v1063 = vld [vmem:[#allocation2 + $0x118] sm:$0xff]
      %v1064 = vld [vmem:[#allocation2 + $0x120] sm:$0xff]
      %v1065 = vld [vmem:[#allocation2 + $0x128] sm:$0xff]
      %v1066 = vld [vmem:[#allocation2 + $0x130] sm:$0xff]
      %v1067 = vld [vmem:[#allocation2 + $0x138] sm:$0xf]
      %v1068 = vld [vmem:[#allocation2 + $0x140] sm:$0xf]
      %v1069 = vld [vmem:[#allocation2 + $0x148] sm:$0xf]
      %v1070 = vld [vmem:[%s4] sm:$0xf]
      %v1071 = vld [vmem:[%s4 + $0x4] sm:$0xf]
      %v1072 = vld [vmem:[%s4 + $0x8] sm:$0xf]
      %1074 = vset.pattern.permute.xlu0 0
      %1075 = vperm.xlu0 %1074, %v1070
      %v1076 = vpop.permute.xlu0 %1075
      %vm1078 = vcmask 883712
      %v1080 = vsel %vm1078, %v1027, 0
      %vm1082 = vcmask 1043456
      %v1084 = vsel %vm1082, %v1067, 0
      %v1087 = vsel %vm1082, %v1068, 0
      %v1090 = vsel %vm1082, %v1069, 0
      %1092 = vmatprep.subr.mxu0 %v1029
      %1093 = vmatpush1.msra.mxu0 %v1028
      %1094 = vmatprep.subr.mxu0 %v1032
      %1095 = vmatpush1.msra.mxu0 %v1031
      %1096 = vmatprep.subr.mxu0 %v1035
      %1097 = vmatpush1.msra.mxu0 %v1034
      %1098 = vmatprep.subr.mxu0 %v1038
      %1099 = vmatpush1.msra.mxu0 %v1037
      %1100 = vmatprep.subr.mxu0 %v1041
      %1101 = vmatpush1.msra.mxu0 %v1040
      %1102 = vmatprep.subr.mxu0 %v1044
      %1103 = vmatpush1.msra.mxu0 %v1043
      %1104 = vmatprep.subr.mxu0 %v1047
      %1105 = vmatpush1.msra.mxu0 %v1046
      %1106 = vmatprep.subr.mxu0 %v1050
      %1107 = vmatpush1.msra.mxu0 %v1049
      %1108 = vmatprep.subr.mxu0 %v1053
      %1109 = vmatpush1.msra.mxu0 %v1052
      %1110 = vmatprep.subr.mxu0 %v1056
      %1111 = vmatpush1.msra.mxu0 %v1055
      %1112 = vmatprep.subr.mxu0 %v1059
      %1113 = vmatpush1.msra.mxu0 %v1058
      %1114 = vmatprep.subr.mxu0 %v1062
      %1115 = vmatpush1.msra.mxu0 %v1061
      %1116 = vmatprep.subr.mxu0 %v1065
      %1117 = vmatpush1.msra.mxu0 %v1064
      %1118 = vmatprep.subr.mxu0 %v1087
      %1119 = vmatpush1.msra.mxu0 %v1084
      %1120 = vmatprep.subr.mxu0 0.0
      %1121 = vmatpush1.msra.mxu0 0.0
      %1122 = vmatprep.subr.mxu0 0.0
      %1123 = vmatpush1.msra.mxu0 0.0
      %1124 = vmatprep.subr.mxu0 0.0
      %1125 = vmatpush1.msra.mxu0 0.0
      %1126 = vmatprep.subr.mxu0 0.0
      %1127 = vmatpush1.msra.mxu0 0.0
      %1128 = vmatprep.subr.mxu0 0.0
      %1129 = vmatpush1.msra.mxu0 0.0
      %1130 = vmatprep.subr.mxu0 0.0
      %1131 = vmatpush1.msra.mxu0 0.0
      %1132 = vmatprep.subr.mxu0 0.0
      %1133 = vmatpush1.msra.mxu0 0.0
      %1134 = vmatprep.subr.mxu0 0.0
      %1135 = vmatpush1.msra.mxu0 0.0
      %1136 = vmatprep.subr.mxu0 0.0
      %1137 = vmatpush1.msra.mxu0 0.0
      %1138 = vmatprep.subr.mxu0 0.0
      %1139 = vmatpush1.msra.mxu0 0.0
      %1140 = vmatprep.subr.mxu0 0.0
      %1141 = vmatpush1.msra.mxu0 0.0
      %1142 = vmatprep.subr.mxu0 0.0
      %1143 = vmatpush1.msra.mxu0 0.0
      %1144 = vmatprep.subr.mxu0 0.0
      %1145 = vmatpush1.msra.mxu0 0.0
      %1146 = vmatprep.subr.mxu0 0.0
      %1147 = vmatpush1.msra.mxu0 0.0
      %1148 = vmatprep.subr.mxu0 0.0
      %1149 = vmatpush1.msra.mxu0 0.0
      %1150 = vmatprep.subr.mxu0 0.0
      %1151 = vmatpush1.msra.mxu0 0.0
      %1152 = vmatprep.subr.mxu0 0.0
      %1153 = vmatpush1.msra.mxu0 0.0
      %1154 = vmatprep.subr.mxu0 0.0
      %1155 = vmatpush1.msra.mxu0 0.0
      %1156 = vmatprep.mubr.f32.mxu0 0.0
      %1157 = vmatmul.mubr.f32.gmra.mrb[0].mxu0 %v1080
      %v1158 = vpop.f32.mrb[0].mxu0
      %v1159 = vadd.f32 %v1076, %v1158
      %v1160 = vpop.f32.mrb[0].mxu0
      %v1161 = vadd.f32 %v1076, %v1160
      %1162 = vdwg.mxu0
      %1163 = vmatprep.subr.mxu0 0.0
      %1164 = vmatpush1.msra.mxu0 %v1030
      %1165 = vmatprep.subr.mxu0 0.0
      %1166 = vmatpush1.msra.mxu0 %v1033
      %1167 = vmatprep.subr.mxu0 0.0
      %1168 = vmatpush1.msra.mxu0 %v1036
      %1169 = vmatprep.subr.mxu0 0.0
      %1170 = vmatpush1.msra.mxu0 %v1039
      %1171 = vmatprep.subr.mxu0 0.0
      %1172 = vmatpush1.msra.mxu0 %v1042
      %1173 = vmatprep.subr.mxu0 0.0
      %1174 = vmatpush1.msra.mxu0 %v1045
      %1175 = vmatprep.subr.mxu0 0.0
      %1176 = vmatpush1.msra.mxu0 %v1048
      %1177 = vmatprep.subr.mxu0 0.0
      %1178 = vmatpush1.msra.mxu0 %v1051
      %1179 = vmatprep.subr.mxu0 0.0
      %1180 = vmatpush1.msra.mxu0 %v1054
      %1181 = vmatprep.subr.mxu0 0.0
      %1182 = vmatpush1.msra.mxu0 %v1057
      %1183 = vmatprep.subr.mxu0 0.0
      %1184 = vmatpush1.msra.mxu0 %v1060
      %1185 = vmatprep.subr.mxu0 0.0
      %1186 = vmatpush1.msra.mxu0 %v1063
      %1187 = vmatprep.subr.mxu0 0.0
      %1188 = vmatpush1.msra.mxu0 %v1066
      %1189 = vmatprep.subr.mxu0 0.0
      %1190 = vmatpush1.msra.mxu0 %v1090
      %1191 = vmatprep.subr.mxu0 0.0
      %1192 = vmatpush1.msra.mxu0 0.0
      %1193 = vmatprep.subr.mxu0 0.0
      %1194 = vmatpush1.msra.mxu0 0.0
      %1195 = vmatprep.subr.mxu0 0.0
      %1196 = vmatpush1.msra.mxu0 0.0
      %1197 = vmatprep.subr.mxu0 0.0
      %1198 = vmatpush1.msra.mxu0 0.0
      %1199 = vmatprep.subr.mxu0 0.0
      %1200 = vmatpush1.msra.mxu0 0.0
      %1201 = vmatprep.subr.mxu0 0.0
      %1202 = vmatpush1.msra.mxu0 0.0
      %1203 = vmatprep.subr.mxu0 0.0
      %1204 = vmatpush1.msra.mxu0 0.0
      %1205 = vmatprep.subr.mxu0 0.0
      %1206 = vmatpush1.msra.mxu0 0.0
      %1207 = vmatprep.subr.mxu0 0.0
      %1208 = vmatpush1.msra.mxu0 0.0
      %1209 = vmatprep.subr.mxu0 0.0
      %1210 = vmatpush1.msra.mxu0 0.0
      %1211 = vmatprep.subr.mxu0 0.0
      %1212 = vmatpush1.msra.mxu0 0.0
      %1213 = vmatprep.subr.mxu0 0.0
      %1214 = vmatpush1.msra.mxu0 0.0
      %1215 = vmatprep.subr.mxu0 0.0
      %1216 = vmatpush1.msra.mxu0 0.0
      %1217 = vmatprep.subr.mxu0 0.0
      %1218 = vmatpush1.msra.mxu0 0.0
      %1219 = vmatprep.subr.mxu0 0.0
      %1220 = vmatpush1.msra.mxu0 0.0
      %1221 = vmatprep.subr.mxu0 0.0
      %1222 = vmatpush1.msra.mxu0 0.0
      %1223 = vmatprep.subr.mxu0 0.0
      %1224 = vmatpush1.msra.mxu0 0.0
      %1225 = vmatprep.subr.mxu0 0.0
      %1226 = vmatpush1.msra.mxu0 0.0
      %1227 = vmatprep.mubr.f32.mxu0 0.0
      %1228 = vmatmul.mubr.f32.gmra.mrb[0].mxu0 %v1080
      %v1229 = vpop.f32.mrb[0].mxu0
      %v1230 = vadd.f32 %v1076, %v1229
      %v1231 = vpop.f32.mrb[0].mxu0
      %1232 = vdwg.mxu0
      %v1233 = vmax.f32 %v1159, 0.0
      %v1234 = vmax.f32 %v1161, 0.0
      %v1235 = vmax.f32 %v1230, 0.0
      %1237 = vset.pattern.permute.xlu0 0
      %1238 = vperm.xlu0 %1237, %v1071
      %v1239 = vpop.permute.xlu0 %1238
      %v1241 = vmul.f32 %v1233, %v1239
      %v1242 = vmul.f32 %v1234, %v1239
      %v1243 = vmul.f32 %v1235, %v1239
      %1245 = vset.pattern.permute.xlu0 0
      %1246 = vperm.xlu0 %1245, %v1072
      %v1247 = vpop.permute.xlu0 %1246
      %v1249 = vadd.f32 %v1241, %v1247
      %v1250 = vadd.f32 %v1242, %v1247
      %v1251 = vadd.f32 %v1243, %v1247
      %v1252 = vld [vmem:[%s5] sm:$0x7]
      %v1254 = vlaneseq
      %v1255 = vshrl.u32 %v1254, 7
      %v1256 = vsub.s32 0, %v1255
      %v1257 = vrot.slane %v1252, %v1256
      %v1258 = vlaneseq
      %v1259 = vshrl.u32 %v1258, 7
      %v1260 = vsub.s32 1, %v1259
      %v1261 = vrot.slane %v1252, %v1260
      %v1262 = vlaneseq
      %v1263 = vshrl.u32 %v1262, 7
      %v1264 = vsub.s32 2, %v1263
      %v1265 = vrot.slane %v1252, %v1264
      %v1269 = vmul.f32 %v1249, %v1257
      %v1270 = vmul.f32 %v1250, %v1261
      %v1271 = vmul.f32 %v1251, %v1265
      %v1272 = vpack.c.bf16 %v1269, %v1269
      %v1273 = vpack.c.bf16 %v1270, %v1270
      %v1274 = vpack.c.bf16 %v1271, %v1271
      %v1278 = vcombine.low %v1272, %v1273
      %v1280 = vunpack.c.l.s4 1983009808
      %v1281 = vunpack.c.0.s8 %v1280
      %v1282 = vlaneseq
      %v1283 = vshrl.u32 %v1282, 7
      %v1284 = vsub.s32 %v1281, %v1283
      %v1285 = vrot.slane %v1278, %v1284
      %v1287 = vunpack.c.l.s4 1983009808
      %v1288 = vunpack.c.0.s8 %v1287
      %v1289 = vlaneseq
      %v1290 = vshrl.u32 %v1289, 7
      %v1291 = vsub.s32 %v1288, %v1290
      %v1292 = vrot.slane %v1274, %v1291
      %v1293 = vcombine.low %v1285, %v1292
      %1295 = vst [vmem:[%s369] sm:$0x3f] %v1293
      %p1296 = scmp.lt.s32.totalorder %s21, 1
      %s1297 = scalar_select %p1296, %s21, 1
      %p1298 = scmp.lt.s32.totalorder %s22, 15
      %s1299 = scalar_select %p1298, %s22, 15
      %s1300 = smul.addr %s1299, 3
      %s1301 = smul.addr %s1297, 48
      %s1302 = sadd.s32 %s1300, %s1301
      %s1303 = smul.addr %s1302, 2
      %s1304 = scalar_lea.vmem %s6, %s1303
      // Predicated region
      $region45: #{en_res_block.2} parent=43 // pred_check
        %p1305 = pneg %p200
      $region46: #{en_res_block.2} parent=43 // pred_check_branch
        %1307 = sbr.rel (%p1305) target = $region48
      $region47: #{en_res_block.2} parent=43 // pred_region
        _
      $region48: #{en_res_block.2} parent=43 // pred_fallthru
        _
    $region44: #{en_res_block.2} parent=5 // pred_fallthru
      _
    %p1308 = scmp.le.s32.totalorder 2, %s12
    // Predicated region
    $region49: #{en_res_block.2} parent=5 // pred_check
      %p1309 = pneg %p1308
    $region50: #{en_res_block.2} parent=5 // pred_check_branch
      %1311 = sbr.rel (%p1309) target = $region52
    $region51: #{en_res_block.2} parent=5 // pred_region
      %s1312 = ssub.s32 %s12, 2
      // Predicated region
      $region53: #{en_res_block.2} parent=51 // pred_check
        %p1313 = pneg %p206
      $region54: #{en_res_block.2} parent=51 // pred_check_branch
        %1315 = sbr.rel (%p1313) target = $region56
      $region55: #{en_res_block.2} parent=51 // pred_region
        %p1316 = scmp.lt.s32.totalorder %s23, 1
        %s1317 = scalar_select %p1316, %s23, 1
        %p1318 = scmp.lt.s32.totalorder %s24, 15
        %s1319 = scalar_select %p1318, %s24, 15
        %s1320 = smul.addr %s1319, 3
        %s1321 = smul.addr %s1317, 48
        %s1322 = sadd.s32 %s1320, %s1321
        %s1323 = smul.addr %s1322, 2
        %s1324 = scalar_lea.vmem %s6, %s1323
      $region56: #{en_res_block.2} parent=51 // pred_fallthru
        _
    $region52: #{en_res_block.2} parent=5 // pred_fallthru
      _
  $region6: #{en_res_block.2} parent=0 // loop_footer
    %s16 = sadd.s32 1, %s12
  $region7: #{en_res_block.2} parent=0 // loop_footer_branch
    %11 = sbr.rel target = $region3
  $region8: #{en_res_block.2} parent=0 // loop_exit
    _

// kernel: en_res_block.3
$region0: #{en_res_block.3}
  #allocation0 [shape = 'u32[]', space=smem, size = 0x4, offset = 0x4, fixed_abs, tag = 'smem constant byte address 0x4 - core index']
  #allocation1 [shape = 'u32[144,128]{1,0:T(1,128)}', space=vmem, size = 0x12000, scoped, tag = 'internal scratch']
  #allocation2 [shape = 'f32[108,128]{1,0:T(8,128)}', space=vmem, size = 0xe000, scoped, tag = 'scratch operand']
  %s0 = inlined_call_operand.vmem [shape: bf16[2,9,8,4,256], index: 0, kind: input, shape index: {}, may-alias: {0,1}]
  %s1 = inlined_call_operand.vmem [shape: bf16[2,9,8,4,256], index: 1, kind: input, shape index: {}, may-alias: {0,1}]
  %s2 = inlined_call_operand.vmem [shape: bf16[2,9,8,4,256], index: 2, kind: input, shape index: {}, may-alias: {2,3}]
  %s3 = inlined_call_operand.vmem [shape: bf16[2,9,8,4,256], index: 3, kind: input, shape index: {}, may-alias: {2,3}]
  %s4 = inlined_call_operand.vmem [shape: f32[8,108], index: 4, kind: input, shape index: {}]
  %s5 = inlined_call_operand.vmem [shape: f32[8,108], index: 5, kind: input, shape index: {}]
  %s6 = inlined_call_operand.vmem [shape: f32[3,8,1], index: 6, kind: input, shape index: {}]
  %s7 = inlined_call_operand.vmem [shape: f32[3,8,1], index: 7, kind: input, shape index: {}]
  %s8 = inlined_call_operand.vmem [shape: f32[2,8,8,128], index: 8, kind: output, shape index: {}]
  %s9 = sld [smem:[#allocation0]]
  $region65: #{en_res_block.3} parent=0
    _
  %s11 = ssub.s32 1, %s9
  %s12 = scalar_select 0, %s11, %s9
  loop: start=0, step=1, limit=18
  $region2: #{en_res_block.3} parent=0 // loop_pre_header
    _
  $region3: #{en_res_block.3} parent=0 // loop_header
    %s14 = sphi 0, %s18
    %p15 = scmp.ge.s32.totalorder %s14, 18
    %s21 = sphi 0, %s33
    %s22 = sphi 0, %s29
    %s23 = sphi 0, %s21
    %s24 = sphi 0, %s22
    %s25 = sphi 0, %s23
    %s26 = sphi 0, %s24
    %s38 = sphi 0, %s40
    %s41 = sphi 0, %s38
    %s42 = sphi 0, %s41
    %s58 = sphi 0, %s42
    %s68 = sphi 0, %s70
    %s71 = sphi 0, %s68
    %s72 = sphi 0, %s71
    %s88 = sphi 0, %s72
    %s96 = sphi 0, %s98
    %s99 = sphi 0, %s96
    %s100 = sphi 0, %s99
    %s116 = sphi 0, %s100
    %s126 = sphi 0, %s128
    %s129 = sphi 0, %s126
    %s130 = sphi 0, %s129
    %s146 = sphi 0, %s130
    %s150 = sphi 0, %s150
    %s152 = sphi 0, %s150
    %s153 = sphi 0, %s152
    %s167 = sphi 0, %s153
    %s171 = sphi 0, %s171
    %s173 = sphi 0, %s171
    %s174 = sphi 0, %s173
    %s188 = sphi 0, %s174
    %s192 = sphi 0, %s192
    %s194 = sphi 0, %s192
    %s195 = sphi 0, %s194
    %s209 = sphi 0, %s195
    %s213 = sphi 0, %s213
    %s215 = sphi 0, %s213
    %s216 = sphi 0, %s215
    %s230 = sphi 0, %s216
    %s238 = sphi 0, %s240
    %s241 = sphi 0, %s238
    %s242 = sphi 0, %s241
    %s258 = sphi 0, %s242
  $region4: #{en_res_block.3} parent=0 // loop_header_branch
    %17 = sbr.rel (%p15) target = $region8
  $region5: #{en_res_block.3} parent=0 // loop_body
    %s19 = ssub.s32 %s14, 1
    %s20 = ssub.s32 %s14, 2
    %s27 = sadd.s32 1, %s22
    %p28 = scmp.ge.s32.totalorder %s27, 8
    %s29 = scalar_select %p28, 0, %s27
    %s30 = sadd.s32 1, %s21
    %s31 = scalar_select %p28, %s30, %s21
    %p32 = scmp.ge.s32.totalorder %s31, 2
    %s33 = scalar_select %p32, 0, %s31
    %s34 = ssub.s32 %s21, %s33
    %s35 = ssub.s32 %s22, %s29
    %s36 = sor.u32 %s34, %s35
    %p37 = scmp.eq.s32.totalorder %s36, 0
    %s39 = sadd.s32 %s38, 1
    %s40 = scalar_select %p37, %s38, %s39
    %p43 = pneg %p37
    %p44 = scmp.eq.s32.totalorder %s14, 15
    %p45 = por %p43, %p44
    %p46 = scmp.ne.s32.totalorder %s38, %s41
    %p47 = scmp.eq.s32.totalorder %s14, 0
    %p48 = por %p46, %p47
    %p49 = scmp.ne.s32.totalorder %s38, %s41
    %p50 = scmp.eq.s32.totalorder %s19, 15
    %p51 = por %p49, %p50
    %p52 = scmp.ne.s32.totalorder %s41, %s42
    %p53 = scmp.eq.s32.totalorder %s19, 0
    %p54 = por %p52, %p53
    %p55 = scmp.ne.s32.totalorder %s41, %s42
    %p56 = scmp.eq.s32.totalorder %s20, 15
    %p57 = por %p55, %p56
    %p59 = scmp.ne.s32.totalorder %s42, %s58
    %p60 = scmp.eq.s32.totalorder %s20, 0
    %p61 = por %p59, %p60
    %s62 = sadd.s32 %s22, 1
    %s63 = sadd.s32 %s29, 1
    %s64 = ssub.s32 %s21, %s33
    %s65 = ssub.s32 %s62, %s63
    %s66 = sor.u32 %s64, %s65
    %p67 = scmp.eq.s32.totalorder %s66, 0
    %s69 = sadd.s32 %s68, 1
    %s70 = scalar_select %p67, %s68, %s69
    %p73 = pneg %p67
    %p74 = scmp.eq.s32.totalorder %s14, 15
    %p75 = por %p73, %p74
    %p76 = scmp.ne.s32.totalorder %s68, %s71
    %p77 = scmp.eq.s32.totalorder %s14, 0
    %p78 = por %p76, %p77
    %p79 = scmp.ne.s32.totalorder %s68, %s71
    %p80 = scmp.eq.s32.totalorder %s19, 15
    %p81 = por %p79, %p80
    %p82 = scmp.ne.s32.totalorder %s71, %s72
    %p83 = scmp.eq.s32.totalorder %s19, 0
    %p84 = por %p82, %p83
    %p85 = scmp.ne.s32.totalorder %s71, %s72
    %p86 = scmp.eq.s32.totalorder %s20, 15
    %p87 = por %p85, %p86
    %p89 = scmp.ne.s32.totalorder %s72, %s88
    %p90 = scmp.eq.s32.totalorder %s20, 0
    %p91 = por %p89, %p90
    %s92 = ssub.s32 %s21, %s33
    %s93 = ssub.s32 %s22, %s29
    %s94 = sor.u32 %s92, %s93
    %p95 = scmp.eq.s32.totalorder %s94, 0
    %s97 = sadd.s32 %s96, 1
    %s98 = scalar_select %p95, %s96, %s97
    %p101 = pneg %p95
    %p102 = scmp.eq.s32.totalorder %s14, 15
    %p103 = por %p101, %p102
    %p104 = scmp.ne.s32.totalorder %s96, %s99
    %p105 = scmp.eq.s32.totalorder %s14, 0
    %p106 = por %p104, %p105
    %p107 = scmp.ne.s32.totalorder %s96, %s99
    %p108 = scmp.eq.s32.totalorder %s19, 15
    %p109 = por %p107, %p108
    %p110 = scmp.ne.s32.totalorder %s99, %s100
    %p111 = scmp.eq.s32.totalorder %s19, 0
    %p112 = por %p110, %p111
    %p113 = scmp.ne.s32.totalorder %s99, %s100
    %p114 = scmp.eq.s32.totalorder %s20, 15
    %p115 = por %p113, %p114
    %p117 = scmp.ne.s32.totalorder %s100, %s116
    %p118 = scmp.eq.s32.totalorder %s20, 0
    %p119 = por %p117, %p118
    %s120 = sadd.s32 %s22, 1
    %s121 = sadd.s32 %s29, 1
    %s122 = ssub.s32 %s21, %s33
    %s123 = ssub.s32 %s120, %s121
    %s124 = sor.u32 %s122, %s123
    %p125 = scmp.eq.s32.totalorder %s124, 0
    %s127 = sadd.s32 %s126, 1
    %s128 = scalar_select %p125, %s126, %s127
    %p131 = pneg %p125
    %p132 = scmp.eq.s32.totalorder %s14, 15
    %p133 = por %p131, %p132
    %p134 = scmp.ne.s32.totalorder %s126, %s129
    %p135 = scmp.eq.s32.totalorder %s14, 0
    %p136 = por %p134, %p135
    %p137 = scmp.ne.s32.totalorder %s126, %s129
    %p138 = scmp.eq.s32.totalorder %s19, 15
    %p139 = por %p137, %p138
    %p140 = scmp.ne.s32.totalorder %s129, %s130
    %p141 = scmp.eq.s32.totalorder %s19, 0
    %p142 = por %p140, %p141
    %p143 = scmp.ne.s32.totalorder %s129, %s130
    %p144 = scmp.eq.s32.totalorder %s20, 15
    %p145 = por %p143, %p144
    %p147 = scmp.ne.s32.totalorder %s130, %s146
    %p148 = scmp.eq.s32.totalorder %s20, 0
    %p149 = por %p147, %p148
    %s151 = sadd.s32 %s150, 1
    %p154 = scmp.eq.s32.totalorder %s14, 15
    %p155 = scmp.ne.s32.totalorder %s150, %s152
    %p156 = scmp.eq.s32.totalorder %s14, 0
    %p157 = por %p155, %p156
    %p158 = scmp.ne.s32.totalorder %s150, %s152
    %p159 = scmp.eq.s32.totalorder %s19, 15
    %p160 = por %p158, %p159
    %p161 = scmp.ne.s32.totalorder %s152, %s153
    %p162 = scmp.eq.s32.totalorder %s19, 0
    %p163 = por %p161, %p162
    %p164 = scmp.ne.s32.totalorder %s152, %s153
    %p165 = scmp.eq.s32.totalorder %s20, 15
    %p166 = por %p164, %p165
    %p168 = scmp.ne.s32.totalorder %s153, %s167
    %p169 = scmp.eq.s32.totalorder %s20, 0
    %p170 = por %p168, %p169
    %s172 = sadd.s32 %s171, 1
    %p175 = scmp.eq.s32.totalorder %s14, 15
    %p176 = scmp.ne.s32.totalorder %s171, %s173
    %p177 = scmp.eq.s32.totalorder %s14, 0
    %p178 = por %p176, %p177
    %p179 = scmp.ne.s32.totalorder %s171, %s173
    %p180 = scmp.eq.s32.totalorder %s19, 15
    %p181 = por %p179, %p180
    %p182 = scmp.ne.s32.totalorder %s173, %s174
    %p183 = scmp.eq.s32.totalorder %s19, 0
    %p184 = por %p182, %p183
    %p185 = scmp.ne.s32.totalorder %s173, %s174
    %p186 = scmp.eq.s32.totalorder %s20, 15
    %p187 = por %p185, %p186
    %p189 = scmp.ne.s32.totalorder %s174, %s188
    %p190 = scmp.eq.s32.totalorder %s20, 0
    %p191 = por %p189, %p190
    %s193 = sadd.s32 %s192, 1
    %p196 = scmp.eq.s32.totalorder %s14, 15
    %p197 = scmp.ne.s32.totalorder %s192, %s194
    %p198 = scmp.eq.s32.totalorder %s14, 0
    %p199 = por %p197, %p198
    %p200 = scmp.ne.s32.totalorder %s192, %s194
    %p201 = scmp.eq.s32.totalorder %s19, 15
    %p202 = por %p200, %p201
    %p203 = scmp.ne.s32.totalorder %s194, %s195
    %p204 = scmp.eq.s32.totalorder %s19, 0
    %p205 = por %p203, %p204
    %p206 = scmp.ne.s32.totalorder %s194, %s195
    %p207 = scmp.eq.s32.totalorder %s20, 15
    %p208 = por %p206, %p207
    %p210 = scmp.ne.s32.totalorder %s195, %s209
    %p211 = scmp.eq.s32.totalorder %s20, 0
    %p212 = por %p210, %p211
    %s214 = sadd.s32 %s213, 1
    %p217 = scmp.eq.s32.totalorder %s14, 15
    %p218 = scmp.ne.s32.totalorder %s213, %s215
    %p219 = scmp.eq.s32.totalorder %s14, 0
    %p220 = por %p218, %p219
    %p221 = scmp.ne.s32.totalorder %s213, %s215
    %p222 = scmp.eq.s32.totalorder %s19, 15
    %p223 = por %p221, %p222
    %p224 = scmp.ne.s32.totalorder %s215, %s216
    %p225 = scmp.eq.s32.totalorder %s19, 0
    %p226 = por %p224, %p225
    %p227 = scmp.ne.s32.totalorder %s215, %s216
    %p228 = scmp.eq.s32.totalorder %s20, 15
    %p229 = por %p227, %p228
    %p231 = scmp.ne.s32.totalorder %s216, %s230
    %p232 = scmp.eq.s32.totalorder %s20, 0
    %p233 = por %p231, %p232
    %s234 = ssub.s32 %s21, %s33
    %s235 = ssub.s32 %s22, %s29
    %s236 = sor.u32 %s234, %s235
    %p237 = scmp.eq.s32.totalorder %s236, 0
    %s239 = sadd.s32 %s238, 1
    %s240 = scalar_select %p237, %s238, %s239
    %p243 = pneg %p237
    %p244 = scmp.eq.s32.totalorder %s14, 15
    %p245 = por %p243, %p244
    %p246 = scmp.ne.s32.totalorder %s238, %s241
    %p247 = scmp.eq.s32.totalorder %s14, 0
    %p248 = por %p246, %p247
    %p249 = scmp.ne.s32.totalorder %s238, %s241
    %p250 = scmp.eq.s32.totalorder %s19, 15
    %p251 = por %p249, %p250
    %p252 = scmp.ne.s32.totalorder %s241, %s242
    %p253 = scmp.eq.s32.totalorder %s19, 0
    %p254 = por %p252, %p253
    %p255 = scmp.ne.s32.totalorder %s241, %s242
    %p256 = scmp.eq.s32.totalorder %s20, 15
    %p257 = por %p255, %p256
    %p259 = scmp.ne.s32.totalorder %s242, %s258
    %p260 = scmp.eq.s32.totalorder %s20, 0
    %p261 = por %p259, %p260
    %p262 = scmp.le.s32.totalorder 1, %s14
    %p263 = scmp.lt.s32.totalorder %s14, 17
    %p264 = pnand %p262, %p263
    %p265 = pneg %p264
    // Predicated region
    $region9: #{en_res_block.3} parent=5 // pred_check
      _
    $region10: #{en_res_block.3} parent=5 // pred_check_branch
      %267 = sbr.rel (%p264) target = $region12
    $region11: #{en_res_block.3} parent=5 // pred_region
      %s268 = ssub.s32 %s14, 1
      // Predicated region
      $region13: #{en_res_block.3} parent=11 // pred_check
        %p269 = pneg %p163
      $region14: #{en_res_block.3} parent=11 // pred_check_branch
        %271 = sbr.rel (%p269) target = $region16
      $region15: #{en_res_block.3} parent=11 // pred_region
        _
      $region16: #{en_res_block.3} parent=11 // pred_fallthru
        _
      // Predicated region
      $region17: #{en_res_block.3} parent=11 // pred_check
        %p272 = pneg %p184
      $region18: #{en_res_block.3} parent=11 // pred_check_branch
        %274 = sbr.rel (%p272) target = $region20
      $region19: #{en_res_block.3} parent=11 // pred_region
        _
      $region20: #{en_res_block.3} parent=11 // pred_fallthru
        _
      // Predicated region
      $region21: #{en_res_block.3} parent=11 // pred_check
        %p275 = pneg %p205
      $region22: #{en_res_block.3} parent=11 // pred_check_branch
        %277 = sbr.rel (%p275) target = $region24
      $region23: #{en_res_block.3} parent=11 // pred_region
        _
      $region24: #{en_res_block.3} parent=11 // pred_fallthru
        _
      // Predicated region
      $region25: #{en_res_block.3} parent=11 // pred_check
        %p278 = pneg %p226
      $region26: #{en_res_block.3} parent=11 // pred_check_branch
        %280 = sbr.rel (%p278) target = $region28
      $region27: #{en_res_block.3} parent=11 // pred_region
        _
      $region28: #{en_res_block.3} parent=11 // pred_fallthru
        _
    $region12: #{en_res_block.3} parent=5 // pred_fallthru
      _
    %p281 = scmp.lt.s32.totalorder %s14, 16
    // Predicated region
    $region29: #{en_res_block.3} parent=5 // pred_check
      %p282 = pneg %p281
    $region30: #{en_res_block.3} parent=5 // pred_check_branch
      %284 = sbr.rel (%p282) target = $region32
    $region31: #{en_res_block.3} parent=5 // pred_region
      // Predicated region
      $region33: #{en_res_block.3} parent=31 // pred_check
        %p285 = pneg %p48
      $region34: #{en_res_block.3} parent=31 // pred_check_branch
        %287 = sbr.rel (%p285) target = $region36
      $region35: #{en_res_block.3} parent=31 // pred_region
        %p288 = scmp.lt.s32.totalorder %s21, 1
        %s289 = scalar_select %p288, %s21, 1
        %p290 = scmp.lt.s32.totalorder %s22, 8
        %s291 = scalar_select %p290, %s22, 8
        %s292 = smul.addr %s291, 16
        %s293 = smul.addr %s289, 144
        %s294 = sadd.s32 %s292, %s293
        %s295 = smul.addr %s294, 2
        %s296 = scalar_lea.vmem %s0, %s295
      $region36: #{en_res_block.3} parent=31 // pred_fallthru
        _
      // Predicated region
      $region37: #{en_res_block.3} parent=31 // pred_check
        %p297 = pneg %p78
      $region38: #{en_res_block.3} parent=31 // pred_check_branch
        %299 = sbr.rel (%p297) target = $region40
      $region39: #{en_res_block.3} parent=31 // pred_region
        %s300 = sadd.s32 %s22, 1
        %p301 = scmp.lt.s32.totalorder %s21, 1
        %s302 = scalar_select %p301, %s21, 1
        %p303 = scmp.lt.s32.totalorder %s300, 8
        %s304 = scalar_select %p303, %s300, 8
        %s305 = smul.addr %s304, 16
        %s306 = smul.addr %s302, 144
        %s307 = sadd.s32 %s305, %s306
        %s308 = smul.addr %s307, 2
        %s309 = scalar_lea.vmem %s1, %s308
        %s310 = sadd.s32 %s22, 1
      $region40: #{en_res_block.3} parent=31 // pred_fallthru
        _
      // Predicated region
      $region41: #{en_res_block.3} parent=31 // pred_check
        %p311 = pneg %p106
      $region42: #{en_res_block.3} parent=31 // pred_check_branch
        %313 = sbr.rel (%p311) target = $region44
      $region43: #{en_res_block.3} parent=31 // pred_region
        %p314 = scmp.lt.s32.totalorder %s21, 1
        %s315 = scalar_select %p314, %s21, 1
        %p316 = scmp.lt.s32.totalorder %s22, 8
        %s317 = scalar_select %p316, %s22, 8
        %s318 = smul.addr %s317, 16
        %s319 = smul.addr %s315, 144
        %s320 = sadd.s32 %s318, %s319
        %s321 = smul.addr %s320, 2
        %s322 = scalar_lea.vmem %s2, %s321
      $region44: #{en_res_block.3} parent=31 // pred_fallthru
        _
      // Predicated region
      $region45: #{en_res_block.3} parent=31 // pred_check
        %p323 = pneg %p136
      $region46: #{en_res_block.3} parent=31 // pred_check_branch
        %325 = sbr.rel (%p323) target = $region48
      $region47: #{en_res_block.3} parent=31 // pred_region
        %s326 = sadd.s32 %s22, 1
        %p327 = scmp.lt.s32.totalorder %s21, 1
        %s328 = scalar_select %p327, %s21, 1
        %p329 = scmp.lt.s32.totalorder %s326, 8
        %s330 = scalar_select %p329, %s326, 8
        %s331 = smul.addr %s330, 16
        %s332 = smul.addr %s328, 144
        %s333 = sadd.s32 %s331, %s332
        %s334 = smul.addr %s333, 2
        %s335 = scalar_lea.vmem %s3, %s334
        %s336 = sadd.s32 %s22, 1
      $region48: #{en_res_block.3} parent=31 // pred_fallthru
        _
    $region32: #{en_res_block.3} parent=5 // pred_fallthru
      _
    %p337 = scmp.le.s32.totalorder 1, %s14
    %p338 = scmp.lt.s32.totalorder %s14, 17
    %p339 = pnand %p337, %p338
    %p340 = pneg %p339
    // Predicated region
    $region49: #{en_res_block.3} parent=5 // pred_check
      _
    $region50: #{en_res_block.3} parent=5 // pred_check_branch
      %342 = sbr.rel (%p339) target = $region52
    $region51: #{en_res_block.3} parent=5 // pred_region
      %s343 = ssub.s32 %s14, 1
      %p344 = scmp.lt.s32.totalorder %s23, 1
      %s345 = scalar_select %p344, %s23, 1
      %p346 = scmp.lt.s32.totalorder %s24, 8
      %s347 = scalar_select %p346, %s24, 8
      %s348 = smul.addr %s347, 16
      %s349 = smul.addr %s345, 144
      %s350 = sadd.s32 %s348, %s349
      %s351 = smul.addr %s350, 2
      %s352 = scalar_lea.vmem %s0, %s351
      %p353 = pneg %p54
      %p354 = pneg %p51
      %s355 = sadd.s32 %s24, 1
      %p356 = scmp.lt.s32.totalorder %s23, 1
      %s357 = scalar_select %p356, %s23, 1
      %p358 = scmp.lt.s32.totalorder %s355, 8
      %s359 = scalar_select %p358, %s355, 8
      %s360 = smul.addr %s359, 16
      %s361 = smul.addr %s357, 144
      %s362 = sadd.s32 %s360, %s361
      %s363 = smul.addr %s362, 2
      %s364 = scalar_lea.vmem %s1, %s363
      %p365 = pneg %p84
      %p366 = pneg %p81
      %p367 = scmp.lt.s32.totalorder %s23, 1
      %s368 = scalar_select %p367, %s23, 1
      %p369 = scmp.lt.s32.totalorder %s24, 8
      %s370 = scalar_select %p369, %s24, 8
      %s371 = smul.addr %s370, 16
      %s372 = smul.addr %s368, 144
      %s373 = sadd.s32 %s371, %s372
      %s374 = smul.addr %s373, 2
      %s375 = scalar_lea.vmem %s2, %s374
      %p376 = pneg %p112
      %p377 = pneg %p109
      %s378 = sadd.s32 %s24, 1
      %p379 = scmp.lt.s32.totalorder %s23, 1
      %s380 = scalar_select %p379, %s23, 1
      %p381 = scmp.lt.s32.totalorder %s378, 8
      %s382 = scalar_select %p381, %s378, 8
      %s383 = smul.addr %s382, 16
      %s384 = smul.addr %s380, 144
      %s385 = sadd.s32 %s383, %s384
      %s386 = smul.addr %s385, 2
      %s387 = scalar_lea.vmem %s3, %s386
      %p388 = pneg %p142
      %p389 = pneg %p139
      %p390 = pneg %p163
      %p391 = pneg %p160
      %p392 = pneg %p184
      %p393 = pneg %p181
      %p394 = pneg %p205
      %p395 = pneg %p202
      %p396 = pneg %p226
      %p397 = pneg %p223
      %p398 = pneg %p254
      %p399 = pneg %p251
      %p400 = scmp.lt.s32.totalorder %s23, 1
      %s401 = scalar_select %p400, %s23, 1
      %p402 = scmp.lt.s32.totalorder %s24, 7
      %s403 = scalar_select %p402, %s24, 7
      %s404 = smul.addr %s401, 8
      %s405 = sadd.s32 %s403, %s404
      %s406 = smul.addr %s405, 8
      %s407 = scalar_lea.vmem %s8, %s406
      %p408 = scmp.lt.s32.totalorder %s23, 1
      %s409 = scalar_select %p408, %s23, 1
      %p410 = scmp.lt.s32.totalorder %s24, 8
      %s411 = scalar_select %p410, %s24, 8
      %s412 = smul.addr %s411, 16
      %s413 = smul.addr %s409, 144
      %s414 = sadd.s32 %s412, %s413
      %s415 = smul.addr %s414, 2
      %s416 = scalar_lea.vmem %s0, %s415
      %s417 = sadd.s32 %s24, 1
      %p418 = scmp.lt.s32.totalorder %s23, 1
      %s419 = scalar_select %p418, %s23, 1
      %p420 = scmp.lt.s32.totalorder %s417, 8
      %s421 = scalar_select %p420, %s417, 8
      %s422 = smul.addr %s421, 16
      %s423 = smul.addr %s419, 144
      %s424 = sadd.s32 %s422, %s423
      %s425 = smul.addr %s424, 2
      %s426 = scalar_lea.vmem %s1, %s425
      %s427 = sadd.s32 %s24, 1
      %p428 = scmp.lt.s32.totalorder %s23, 1
      %s429 = scalar_select %p428, %s23, 1
      %p430 = scmp.lt.s32.totalorder %s24, 8
      %s431 = scalar_select %p430, %s24, 8
      %s432 = smul.addr %s431, 16
      %s433 = smul.addr %s429, 144
      %s434 = sadd.s32 %s432, %s433
      %s435 = smul.addr %s434, 2
      %s436 = scalar_lea.vmem %s2, %s435
      %s437 = sadd.s32 %s24, 1
      %p438 = scmp.lt.s32.totalorder %s23, 1
      %s439 = scalar_select %p438, %s23, 1
      %p440 = scmp.lt.s32.totalorder %s437, 8
      %s441 = scalar_select %p440, %s437, 8
      %s442 = smul.addr %s441, 16
      %s443 = smul.addr %s439, 144
      %s444 = sadd.s32 %s442, %s443
      %s445 = smul.addr %s444, 2
      %s446 = scalar_lea.vmem %s3, %s445
      %s447 = sadd.s32 %s24, 1
      %p448 = scmp.lt.s32.totalorder %s23, 1
      %s449 = scalar_select %p448, %s23, 1
      %p450 = scmp.lt.s32.totalorder %s24, 7
      %s451 = scalar_select %p450, %s24, 7
      %s452 = smul.addr %s449, 8
      %s453 = sadd.s32 %s451, %s452
      %s454 = smul.addr %s453, 8
      %s455 = scalar_lea.vmem %s8, %s454
      %v456 = vld [vmem:[%s416] sm:$0x3]
      %v457 = vunpack.c.l.bf16 %v456
      %458 = vst [vmem:[#allocation2] sm:$0xf] %v457
      %s459 = scalar_lea.vmem %s416, 4
      %v460 = vld [vmem:[%s459] sm:$0x3]
      %v461 = vunpack.c.l.bf16 %v460
      %462 = vst [vmem:[#allocation2 + $0x4] sm:$0xf] %v461
      %v463 = vld [vmem:[%s416] sm:$0xf]
      %v464 = vunpack.c.l.bf16 %v463
      %v466 = vcombine.high %v464, %v464
      %467 = vrot.lane.b32.xlu0 %v464, 127
      %v468 = vpop.permute.xlu0 %467
      %469 = vrot.lane.b32.xlu0 %v466, 127
      %v470 = vpop.permute.xlu0 %469
      %vm471 = vcmask 1039360
      %v472 = vsel %vm471, %v468, %v470
      %474 = vst [vmem:[#allocation2 + $0x8] sm:$0xf] %v472
      %s475 = scalar_lea.vmem %s416, 8
      %v476 = vld [vmem:[%s475] sm:$0x3]
      %v477 = vunpack.c.l.bf16 %v476
      %478 = vst [vmem:[#allocation2 + $0xc] sm:$0xf] %v477
      %s479 = scalar_lea.vmem %s416, 12
      %v480 = vld [vmem:[%s479] sm:$0x3]
      %v481 = vunpack.c.l.bf16 %v480
      %482 = vst [vmem:[#allocation2 + $0x10] sm:$0xf] %v481
      %v483 = vld [vmem:[%s475] sm:$0xf]
      %v484 = vunpack.c.l.bf16 %v483
      %v486 = vcombine.high %v484, %v484
      %487 = vrot.lane.b32.xlu0 %v484, 127
      %v488 = vpop.permute.xlu0 %487
      %489 = vrot.lane.b32.xlu0 %v486, 127
      %v490 = vpop.permute.xlu0 %489
      %v491 = vsel %vm471, %v488, %v490
      %493 = vst [vmem:[#allocation2 + $0x14] sm:$0xf] %v491
      %v494 = vld [vmem:[%s416] sm:$0xf]
      %v495 = vunpack.c.l.bf16 %v494
      %v497 = vcombine.high %v495, %v495
      %498 = vrot.lane.b32.xlu0 %v495, 119
      %v499 = vpop.permute.xlu0 %498
      %500 = vrot.lane.b32.xlu0 %v497, 119
      %v501 = vpop.permute.xlu0 %500
      %vm502 = vcmask 973824
      %v503 = vsel %vm502, %v499, %v501
      %505 = vst [vmem:[#allocation2 + $0x18] sm:$0xf] %v503
      %v506 = vld [vmem:[%s459] sm:$0xf]
      %v507 = vunpack.c.l.bf16 %v506
      %v509 = vcombine.high %v507, %v507
      %510 = vrot.lane.b32.xlu0 %v507, 119
      %v511 = vpop.permute.xlu0 %510
      %512 = vrot.lane.b32.xlu0 %v509, 119
      %v513 = vpop.permute.xlu0 %512
      %v514 = vsel %vm502, %v511, %v513
      %516 = vst [vmem:[#allocation2 + $0x1c] sm:$0xf] %v514
      %v517 = vld [vmem:[%s416] sm:$0xf]
      %v518 = vunpack.c.l.bf16 %v517
      %v520 = vcombine.high %v518, %v518
      %521 = vrot.lane.b32.xlu0 %v518, 118
      %v522 = vpop.permute.xlu0 %521
      %523 = vrot.lane.b32.xlu0 %v520, 118
      %v524 = vpop.permute.xlu0 %523
      %vm525 = vcmask 965632
      %v526 = vsel %vm525, %v522, %v524
      %528 = vst [vmem:[#allocation2 + $0x20] sm:$0xf] %v526
      %s529 = scalar_lea.vmem %s416, 16
      %v530 = vld [vmem:[%s529] sm:$0x3]
      %v531 = vunpack.c.l.bf16 %v530
      %532 = vst [vmem:[#allocation2 + $0x24] sm:$0xf] %v531
      %s533 = scalar_lea.vmem %s416, 20
      %v534 = vld [vmem:[%s533] sm:$0x3]
      %v535 = vunpack.c.l.bf16 %v534
      %536 = vst [vmem:[#allocation2 + $0x28] sm:$0xf] %v535
      %v537 = vld [vmem:[%s529] sm:$0xf]
      %v538 = vunpack.c.l.bf16 %v537
      %v540 = vcombine.high %v538, %v538
      %541 = vrot.lane.b32.xlu0 %v538, 127
      %v542 = vpop.permute.xlu0 %541
      %543 = vrot.lane.b32.xlu0 %v540, 127
      %v544 = vpop.permute.xlu0 %543
      %v545 = vsel %vm471, %v542, %v544
      %547 = vst [vmem:[#allocation2 + $0x2c] sm:$0xf] %v545
      %s548 = scalar_lea.vmem %s416, 24
      %v549 = vld [vmem:[%s548] sm:$0x3]
      %v550 = vunpack.c.l.bf16 %v549
      %551 = vst [vmem:[#allocation2 + $0x30] sm:$0xf] %v550
      %s552 = scalar_lea.vmem %s416, 28
      %v553 = vld [vmem:[%s552] sm:$0x3]
      %v554 = vunpack.c.l.bf16 %v553
      %555 = vst [vmem:[#allocation2 + $0x34] sm:$0xf] %v554
      %v556 = vld [vmem:[%s548] sm:$0xf]
      %v557 = vunpack.c.l.bf16 %v556
      %v559 = vcombine.high %v557, %v557
      %560 = vrot.lane.b32.xlu0 %v557, 127
      %v561 = vpop.permute.xlu0 %560
      %562 = vrot.lane.b32.xlu0 %v559, 127
      %v563 = vpop.permute.xlu0 %562
      %v564 = vsel %vm471, %v561, %v563
      %566 = vst [vmem:[#allocation2 + $0x38] sm:$0xf] %v564
      %v567 = vld [vmem:[%s529] sm:$0xf]
      %v568 = vunpack.c.l.bf16 %v567
      %v570 = vcombine.high %v568, %v568
      %571 = vrot.lane.b32.xlu0 %v568, 119
      %v572 = vpop.permute.xlu0 %571
      %573 = vrot.lane.b32.xlu0 %v570, 119
      %v574 = vpop.permute.xlu0 %573
      %v575 = vsel %vm502, %v572, %v574
      %577 = vst [vmem:[#allocation2 + $0x3c] sm:$0xf] %v575
      %v578 = vld [vmem:[%s533] sm:$0xf]
      %v579 = vunpack.c.l.bf16 %v578
      %v581 = vcombine.high %v579, %v579
      %582 = vrot.lane.b32.xlu0 %v579, 119
      %v583 = vpop.permute.xlu0 %582
      %584 = vrot.lane.b32.xlu0 %v581, 119
      %v585 = vpop.permute.xlu0 %584
      %v586 = vsel %vm502, %v583, %v585
      %588 = vst [vmem:[#allocation2 + $0x40] sm:$0xf] %v586
      %v589 = vld [vmem:[%s529] sm:$0xf]
      %v590 = vunpack.c.l.bf16 %v589
      %v592 = vcombine.high %v590, %v590
      %593 = vrot.lane.b32.xlu0 %v590, 118
      %v594 = vpop.permute.xlu0 %593
      %595 = vrot.lane.b32.xlu0 %v592, 118
      %v596 = vpop.permute.xlu0 %595
      %v597 = vsel %vm525, %v594, %v596
      %599 = vst [vmem:[#allocation2 + $0x44] sm:$0xf] %v597
      %v600 = vld [vmem:[%s426] sm:$0x3]
      %v601 = vunpack.c.l.bf16 %v600
      %602 = vst [vmem:[#allocation2 + $0x48] sm:$0xf] %v601
      %s603 = scalar_lea.vmem %s426, 4
      %v604 = vld [vmem:[%s603] sm:$0x3]
      %v605 = vunpack.c.l.bf16 %v604
      %606 = vst [vmem:[#allocation2 + $0x4c] sm:$0xf] %v605
      %v607 = vld [vmem:[%s426] sm:$0xf]
      %v608 = vunpack.c.l.bf16 %v607
      %v610 = vcombine.high %v608, %v608
      %611 = vrot.lane.b32.xlu0 %v608, 127
      %v612 = vpop.permute.xlu0 %611
      %613 = vrot.lane.b32.xlu0 %v610, 127
      %v614 = vpop.permute.xlu0 %613
      %v615 = vsel %vm471, %v612, %v614
      %617 = vst [vmem:[#allocation2 + $0x50] sm:$0xf] %v615
      %s618 = scalar_lea.vmem %s426, 8
      %v619 = vld [vmem:[%s618] sm:$0x3]
      %v620 = vunpack.c.l.bf16 %v619
      %621 = vst [vmem:[#allocation2 + $0x54] sm:$0xf] %v620
      %s622 = scalar_lea.vmem %s426, 12
      %v623 = vld [vmem:[%s622] sm:$0x3]
      %v624 = vunpack.c.l.bf16 %v623
      %625 = vst [vmem:[#allocation2 + $0x58] sm:$0xf] %v624
      %v626 = vld [vmem:[%s618] sm:$0xf]
      %v627 = vunpack.c.l.bf16 %v626
      %v629 = vcombine.high %v627, %v627
      %630 = vrot.lane.b32.xlu0 %v627, 127
      %v631 = vpop.permute.xlu0 %630
      %632 = vrot.lane.b32.xlu0 %v629, 127
      %v633 = vpop.permute.xlu0 %632
      %v634 = vsel %vm471, %v631, %v633
      %636 = vst [vmem:[#allocation2 + $0x5c] sm:$0xf] %v634
      %v637 = vld [vmem:[%s426] sm:$0xf]
      %v638 = vunpack.c.l.bf16 %v637
      %v640 = vcombine.high %v638, %v638
      %641 = vrot.lane.b32.xlu0 %v638, 119
      %v642 = vpop.permute.xlu0 %641
      %643 = vrot.lane.b32.xlu0 %v640, 119
      %v644 = vpop.permute.xlu0 %643
      %v645 = vsel %vm502, %v642, %v644
      %647 = vst [vmem:[#allocation2 + $0x60] sm:$0xf] %v645
      %v648 = vld [vmem:[%s603] sm:$0xf]
      %v649 = vunpack.c.l.bf16 %v648
      %v651 = vcombine.high %v649, %v649
      %652 = vrot.lane.b32.xlu0 %v649, 119
      %v653 = vpop.permute.xlu0 %652
      %654 = vrot.lane.b32.xlu0 %v651, 119
      %v655 = vpop.permute.xlu0 %654
      %v656 = vsel %vm502, %v653, %v655
      %658 = vst [vmem:[#allocation2 + $0x64] sm:$0xf] %v656
      %v659 = vld [vmem:[%s426] sm:$0xf]
      %v660 = vunpack.c.l.bf16 %v659
      %v662 = vcombine.high %v660, %v660
      %663 = vrot.lane.b32.xlu0 %v660, 118
      %v664 = vpop.permute.xlu0 %663
      %665 = vrot.lane.b32.xlu0 %v662, 118
      %v666 = vpop.permute.xlu0 %665
      %v667 = vsel %vm525, %v664, %v666
      %669 = vst [vmem:[#allocation2 + $0x68] sm:$0xf] %v667
      %v670 = vld [vmem:[%s4] sm:$0xff]
      %v671 = vld [vmem:[#allocation2] sm:$0xff]
      %v672 = vld [vmem:[#allocation2 + $0x8] sm:$0xff]
      %v673 = vld [vmem:[#allocation2 + $0x10] sm:$0xff]
      %v674 = vld [vmem:[#allocation2 + $0x18] sm:$0xff]
      %v675 = vld [vmem:[#allocation2 + $0x20] sm:$0xff]
      %v676 = vld [vmem:[#allocation2 + $0x28] sm:$0xff]
      %v677 = vld [vmem:[#allocation2 + $0x30] sm:$0xff]
      %v678 = vld [vmem:[#allocation2 + $0x38] sm:$0xff]
      %v679 = vld [vmem:[#allocation2 + $0x40] sm:$0xff]
      %v680 = vld [vmem:[#allocation2 + $0x48] sm:$0xff]
      %v681 = vld [vmem:[#allocation2 + $0x50] sm:$0xff]
      %v682 = vld [vmem:[#allocation2 + $0x58] sm:$0xff]
      %v683 = vld [vmem:[#allocation2 + $0x60] sm:$0xff]
      %v684 = vld [vmem:[#allocation2 + $0x68] sm:$0xf]
      %v685 = vld [vmem:[%s6] sm:$0xff]
      %v686 = vld [vmem:[%s6 + $0x8] sm:$0xff]
      %v687 = vld [vmem:[%s6 + $0x10] sm:$0xff]
      %689 = vset.pattern.permute.xlu0 0
      %690 = vperm.xlu0 %689, %v685
      %v691 = vpop.permute.xlu0 %690
      %vm693 = vcmask 883712
      %v695 = vsel %vm693, %v670, 0
      %vm697 = vcmask 1043456
      %v699 = vsel %vm697, %v684, 0
      %701 = vmatprep.subr.mxu0 0.0
      %702 = vmatpush1.msra.mxu0 %v671
      %703 = vmatprep.subr.mxu0 0.0
      %704 = vmatpush1.msra.mxu0 %v672
      %705 = vmatprep.subr.mxu0 0.0
      %706 = vmatpush1.msra.mxu0 %v673
      %707 = vmatprep.subr.mxu0 0.0
      %708 = vmatpush1.msra.mxu0 %v674
      %709 = vmatprep.subr.mxu0 0.0
      %710 = vmatpush1.msra.mxu0 %v675
      %711 = vmatprep.subr.mxu0 0.0
      %712 = vmatpush1.msra.mxu0 %v676
      %713 = vmatprep.subr.mxu0 0.0
      %714 = vmatpush1.msra.mxu0 %v677
      %715 = vmatprep.subr.mxu0 0.0
      %716 = vmatpush1.msra.mxu0 %v678
      %717 = vmatprep.subr.mxu0 0.0
      %718 = vmatpush1.msra.mxu0 %v679
      %719 = vmatprep.subr.mxu0 0.0
      %720 = vmatpush1.msra.mxu0 %v680
      %721 = vmatprep.subr.mxu0 0.0
      %722 = vmatpush1.msra.mxu0 %v681
      %723 = vmatprep.subr.mxu0 0.0
      %724 = vmatpush1.msra.mxu0 %v682
      %725 = vmatprep.subr.mxu0 0.0
      %726 = vmatpush1.msra.mxu0 %v683
      %727 = vmatprep.subr.mxu0 0.0
      %728 = vmatpush1.msra.mxu0 %v699
      %729 = vmatprep.subr.mxu0 0.0
      %730 = vmatpush1.msra.mxu0 0.0
      %731 = vmatprep.subr.mxu0 0.0
      %732 = vmatpush1.msra.mxu0 0.0
      %733 = vmatprep.subr.mxu0 0.0
      %734 = vmatpush1.msra.mxu0 0.0
      %735 = vmatprep.subr.mxu0 0.0
      %736 = vmatpush1.msra.mxu0 0.0
      %737 = vmatprep.subr.mxu0 0.0
      %738 = vmatpush1.msra.mxu0 0.0
      %739 = vmatprep.subr.mxu0 0.0
      %740 = vmatpush1.msra.mxu0 0.0
      %741 = vmatprep.subr.mxu0 0.0
      %742 = vmatpush1.msra.mxu0 0.0
      %743 = vmatprep.subr.mxu0 0.0
      %744 = vmatpush1.msra.mxu0 0.0
      %745 = vmatprep.subr.mxu0 0.0
      %746 = vmatpush1.msra.mxu0 0.0
      %747 = vmatprep.subr.mxu0 0.0
      %748 = vmatpush1.msra.mxu0 0.0
      %749 = vmatprep.subr.mxu0 0.0
      %750 = vmatpush1.msra.mxu0 0.0
      %751 = vmatprep.subr.mxu0 0.0
      %752 = vmatpush1.msra.mxu0 0.0
      %753 = vmatprep.subr.mxu0 0.0
      %754 = vmatpush1.msra.mxu0 0.0
      %755 = vmatprep.subr.mxu0 0.0
      %756 = vmatpush1.msra.mxu0 0.0
      %757 = vmatprep.subr.mxu0 0.0
      %758 = vmatpush1.msra.mxu0 0.0
      %759 = vmatprep.subr.mxu0 0.0
      %760 = vmatpush1.msra.mxu0 0.0
      %761 = vmatprep.subr.mxu0 0.0
      %762 = vmatpush1.msra.mxu0 0.0
      %763 = vmatprep.subr.mxu0 0.0
      %764 = vmatpush1.msra.mxu0 0.0
      %765 = vmatprep.mubr.f32.mxu0 0.0
      %766 = vmatmul.mubr.f32.gmra.mrb[0].mxu0 %v695
      %v767 = vpop.f32.mrb[0].mxu0
      %v768 = vadd.f32 %v691, %v767
      %v769 = vpop.f32.mrb[0].mxu0
      %770 = vdwg.mxu0
      %v771 = vmax.f32 %v768, 0.0
      %773 = vset.pattern.permute.xlu0 0
      %774 = vperm.xlu0 %773, %v686
      %v775 = vpop.permute.xlu0 %774
      %v777 = vmul.f32 %v771, %v775
      %779 = vset.pattern.permute.xlu0 0
      %780 = vperm.xlu0 %779, %v687
      %v781 = vpop.permute.xlu0 %780
      %v783 = vadd.f32 %v777, %v781
      %v784 = vld [vmem:[%s436] sm:$0x3]
      %v785 = vunpack.c.l.bf16 %v784
      %786 = vst [vmem:[#allocation2] sm:$0xf] %v785
      %s787 = scalar_lea.vmem %s436, 4
      %v788 = vld [vmem:[%s787] sm:$0x3]
      %v789 = vunpack.c.l.bf16 %v788
      %790 = vst [vmem:[#allocation2 + $0x4] sm:$0xf] %v789
      %v791 = vld [vmem:[%s436] sm:$0xf]
      %v792 = vunpack.c.l.bf16 %v791
      %v794 = vcombine.high %v792, %v792
      %795 = vrot.lane.b32.xlu0 %v792, 127
      %v796 = vpop.permute.xlu0 %795
      %797 = vrot.lane.b32.xlu0 %v794, 127
      %v798 = vpop.permute.xlu0 %797
      %v799 = vsel %vm471, %v796, %v798
      %801 = vst [vmem:[#allocation2 + $0x8] sm:$0xf] %v799
      %s802 = scalar_lea.vmem %s436, 8
      %v803 = vld [vmem:[%s802] sm:$0x3]
      %v804 = vunpack.c.l.bf16 %v803
      %805 = vst [vmem:[#allocation2 + $0xc] sm:$0xf] %v804
      %s806 = scalar_lea.vmem %s436, 12
      %v807 = vld [vmem:[%s806] sm:$0x3]
      %v808 = vunpack.c.l.bf16 %v807
      %809 = vst [vmem:[#allocation2 + $0x10] sm:$0xf] %v808
      %v810 = vld [vmem:[%s802] sm:$0xf]
      %v811 = vunpack.c.l.bf16 %v810
      %v813 = vcombine.high %v811, %v811
      %814 = vrot.lane.b32.xlu0 %v811, 127
      %v815 = vpop.permute.xlu0 %814
      %816 = vrot.lane.b32.xlu0 %v813, 127
      %v817 = vpop.permute.xlu0 %816
      %v818 = vsel %vm471, %v815, %v817
      %820 = vst [vmem:[#allocation2 + $0x14] sm:$0xf] %v818
      %v821 = vld [vmem:[%s436] sm:$0xf]
      %v822 = vunpack.c.l.bf16 %v821
      %v824 = vcombine.high %v822, %v822
      %825 = vrot.lane.b32.xlu0 %v822, 119
      %v826 = vpop.permute.xlu0 %825
      %827 = vrot.lane.b32.xlu0 %v824, 119
      %v828 = vpop.permute.xlu0 %827
      %v829 = vsel %vm502, %v826, %v828
      %831 = vst [vmem:[#allocation2 + $0x18] sm:$0xf] %v829
      %v832 = vld [vmem:[%s787] sm:$0xf]
      %v833 = vunpack.c.l.bf16 %v832
      %v835 = vcombine.high %v833, %v833
      %836 = vrot.lane.b32.xlu0 %v833, 119
      %v837 = vpop.permute.xlu0 %836
      %838 = vrot.lane.b32.xlu0 %v835, 119
      %v839 = vpop.permute.xlu0 %838
      %v840 = vsel %vm502, %v837, %v839
      %842 = vst [vmem:[#allocation2 + $0x1c] sm:$0xf] %v840
      %v843 = vld [vmem:[%s436] sm:$0xf]
      %v844 = vunpack.c.l.bf16 %v843
      %v846 = vcombine.high %v844, %v844
      %847 = vrot.lane.b32.xlu0 %v844, 118
      %v848 = vpop.permute.xlu0 %847
      %849 = vrot.lane.b32.xlu0 %v846, 118
      %v850 = vpop.permute.xlu0 %849
      %v851 = vsel %vm525, %v848, %v850
      %853 = vst [vmem:[#allocation2 + $0x20] sm:$0xf] %v851
      %s854 = scalar_lea.vmem %s436, 16
      %v855 = vld [vmem:[%s854] sm:$0x3]
      %v856 = vunpack.c.l.bf16 %v855
      %857 = vst [vmem:[#allocation2 + $0x24] sm:$0xf] %v856
      %s858 = scalar_lea.vmem %s436, 20
      %v859 = vld [vmem:[%s858] sm:$0x3]
      %v860 = vunpack.c.l.bf16 %v859
      %861 = vst [vmem:[#allocation2 + $0x28] sm:$0xf] %v860
      %v862 = vld [vmem:[%s854] sm:$0xf]
      %v863 = vunpack.c.l.bf16 %v862
      %v865 = vcombine.high %v863, %v863
      %866 = vrot.lane.b32.xlu0 %v863, 127
      %v867 = vpop.permute.xlu0 %866
      %868 = vrot.lane.b32.xlu0 %v865, 127
      %v869 = vpop.permute.xlu0 %868
      %v870 = vsel %vm471, %v867, %v869
      %872 = vst [vmem:[#allocation2 + $0x2c] sm:$0xf] %v870
      %s873 = scalar_lea.vmem %s436, 24
      %v874 = vld [vmem:[%s873] sm:$0x3]
      %v875 = vunpack.c.l.bf16 %v874
      %876 = vst [vmem:[#allocation2 + $0x30] sm:$0xf] %v875
      %s877 = scalar_lea.vmem %s436, 28
      %v878 = vld [vmem:[%s877] sm:$0x3]
      %v879 = vunpack.c.l.bf16 %v878
      %880 = vst [vmem:[#allocation2 + $0x34] sm:$0xf] %v879
      %v881 = vld [vmem:[%s873] sm:$0xf]
      %v882 = vunpack.c.l.bf16 %v881
      %v884 = vcombine.high %v882, %v882
      %885 = vrot.lane.b32.xlu0 %v882, 127
      %v886 = vpop.permute.xlu0 %885
      %887 = vrot.lane.b32.xlu0 %v884, 127
      %v888 = vpop.permute.xlu0 %887
      %v889 = vsel %vm471, %v886, %v888
      %891 = vst [vmem:[#allocation2 + $0x38] sm:$0xf] %v889
      %v892 = vld [vmem:[%s854] sm:$0xf]
      %v893 = vunpack.c.l.bf16 %v892
      %v895 = vcombine.high %v893, %v893
      %896 = vrot.lane.b32.xlu0 %v893, 119
      %v897 = vpop.permute.xlu0 %896
      %898 = vrot.lane.b32.xlu0 %v895, 119
      %v899 = vpop.permute.xlu0 %898
      %v900 = vsel %vm502, %v897, %v899
      %902 = vst [vmem:[#allocation2 + $0x3c] sm:$0xf] %v900
      %v903 = vld [vmem:[%s858] sm:$0xf]
      %v904 = vunpack.c.l.bf16 %v903
      %v906 = vcombine.high %v904, %v904
      %907 = vrot.lane.b32.xlu0 %v904, 119
      %v908 = vpop.permute.xlu0 %907
      %909 = vrot.lane.b32.xlu0 %v906, 119
      %v910 = vpop.permute.xlu0 %909
      %v911 = vsel %vm502, %v908, %v910
      %913 = vst [vmem:[#allocation2 + $0x40] sm:$0xf] %v911
      %v914 = vld [vmem:[%s854] sm:$0xf]
      %v915 = vunpack.c.l.bf16 %v914
      %v917 = vcombine.high %v915, %v915
      %918 = vrot.lane.b32.xlu0 %v915, 118
      %v919 = vpop.permute.xlu0 %918
      %920 = vrot.lane.b32.xlu0 %v917, 118
      %v921 = vpop.permute.xlu0 %920
      %v922 = vsel %vm525, %v919, %v921
      %924 = vst [vmem:[#allocation2 + $0x44] sm:$0xf] %v922
      %v925 = vld [vmem:[%s446] sm:$0x3]
      %v926 = vunpack.c.l.bf16 %v925
      %927 = vst [vmem:[#allocation2 + $0x48] sm:$0xf] %v926
      %s928 = scalar_lea.vmem %s446, 4
      %v929 = vld [vmem:[%s928] sm:$0x3]
      %v930 = vunpack.c.l.bf16 %v929
      %931 = vst [vmem:[#allocation2 + $0x4c] sm:$0xf] %v930
      %v932 = vld [vmem:[%s446] sm:$0xf]
      %v933 = vunpack.c.l.bf16 %v932
      %v935 = vcombine.high %v933, %v933
      %936 = vrot.lane.b32.xlu0 %v933, 127
      %v937 = vpop.permute.xlu0 %936
      %938 = vrot.lane.b32.xlu0 %v935, 127
      %v939 = vpop.permute.xlu0 %938
      %v940 = vsel %vm471, %v937, %v939
      %942 = vst [vmem:[#allocation2 + $0x50] sm:$0xf] %v940
      %s943 = scalar_lea.vmem %s446, 8
      %v944 = vld [vmem:[%s943] sm:$0x3]
      %v945 = vunpack.c.l.bf16 %v944
      %946 = vst [vmem:[#allocation2 + $0x54] sm:$0xf] %v945
      %s947 = scalar_lea.vmem %s446, 12
      %v948 = vld [vmem:[%s947] sm:$0x3]
      %v949 = vunpack.c.l.bf16 %v948
      %950 = vst [vmem:[#allocation2 + $0x58] sm:$0xf] %v949
      %v951 = vld [vmem:[%s943] sm:$0xf]
      %v952 = vunpack.c.l.bf16 %v951
      %v954 = vcombine.high %v952, %v952
      %955 = vrot.lane.b32.xlu0 %v952, 127
      %v956 = vpop.permute.xlu0 %955
      %957 = vrot.lane.b32.xlu0 %v954, 127
      %v958 = vpop.permute.xlu0 %957
      %v959 = vsel %vm471, %v956, %v958
      %961 = vst [vmem:[#allocation2 + $0x5c] sm:$0xf] %v959
      %v962 = vld [vmem:[%s446] sm:$0xf]
      %v963 = vunpack.c.l.bf16 %v962
      %v965 = vcombine.high %v963, %v963
      %966 = vrot.lane.b32.xlu0 %v963, 119
      %v967 = vpop.permute.xlu0 %966
      %968 = vrot.lane.b32.xlu0 %v965, 119
      %v969 = vpop.permute.xlu0 %968
      %v970 = vsel %vm502, %v967, %v969
      %972 = vst [vmem:[#allocation2 + $0x60] sm:$0xf] %v970
      %v973 = vld [vmem:[%s928] sm:$0xf]
      %v974 = vunpack.c.l.bf16 %v973
      %v976 = vcombine.high %v974, %v974
      %977 = vrot.lane.b32.xlu0 %v974, 119
      %v978 = vpop.permute.xlu0 %977
      %979 = vrot.lane.b32.xlu0 %v976, 119
      %v980 = vpop.permute.xlu0 %979
      %v981 = vsel %vm502, %v978, %v980
      %983 = vst [vmem:[#allocation2 + $0x64] sm:$0xf] %v981
      %v984 = vld [vmem:[%s446] sm:$0xf]
      %v985 = vunpack.c.l.bf16 %v984
      %v987 = vcombine.high %v985, %v985
      %988 = vrot.lane.b32.xlu0 %v985, 118
      %v989 = vpop.permute.xlu0 %988
      %990 = vrot.lane.b32.xlu0 %v987, 118
      %v991 = vpop.permute.xlu0 %990
      %v992 = vsel %vm525, %v989, %v991
      %994 = vst [vmem:[#allocation2 + $0x68] sm:$0xf] %v992
      %v995 = vld [vmem:[%s5] sm:$0xff]
      %v996 = vld [vmem:[#allocation2] sm:$0xff]
      %v997 = vld [vmem:[#allocation2 + $0x8] sm:$0xff]
      %v998 = vld [vmem:[#allocation2 + $0x10] sm:$0xff]
      %v999 = vld [vmem:[#allocation2 + $0x18] sm:$0xff]
      %v1000 = vld [vmem:[#allocation2 + $0x20] sm:$0xff]
      %v1001 = vld [vmem:[#allocation2 + $0x28] sm:$0xff]
      %v1002 = vld [vmem:[#allocation2 + $0x30] sm:$0xff]
      %v1003 = vld [vmem:[#allocation2 + $0x38] sm:$0xff]
      %v1004 = vld [vmem:[#allocation2 + $0x40] sm:$0xff]
      %v1005 = vld [vmem:[#allocation2 + $0x48] sm:$0xff]
      %v1006 = vld [vmem:[#allocation2 + $0x50] sm:$0xff]
      %v1007 = vld [vmem:[#allocation2 + $0x58] sm:$0xff]
      %v1008 = vld [vmem:[#allocation2 + $0x60] sm:$0xff]
      %v1009 = vld [vmem:[#allocation2 + $0x68] sm:$0xf]
      %v1010 = vld [vmem:[%s7] sm:$0xff]
      %v1011 = vld [vmem:[%s7 + $0x8] sm:$0xff]
      %v1012 = vld [vmem:[%s7 + $0x10] sm:$0xff]
      %1014 = vset.pattern.permute.xlu0 0
      %1015 = vperm.xlu0 %1014, %v1010
      %v1016 = vpop.permute.xlu0 %1015
      %v1019 = vsel %vm693, %v995, 0
      %v1022 = vsel %vm697, %v1009, 0
      %1024 = vmatprep.subr.mxu0 0.0
      %1025 = vmatpush1.msra.mxu0 %v996
      %1026 = vmatprep.subr.mxu0 0.0
      %1027 = vmatpush1.msra.mxu0 %v997
      %1028 = vmatprep.subr.mxu0 0.0
      %1029 = vmatpush1.msra.mxu0 %v998
      %1030 = vmatprep.subr.mxu0 0.0
      %1031 = vmatpush1.msra.mxu0 %v999
      %1032 = vmatprep.subr.mxu0 0.0
      %1033 = vmatpush1.msra.mxu0 %v1000
      %1034 = vmatprep.subr.mxu0 0.0
      %1035 = vmatpush1.msra.mxu0 %v1001
      %1036 = vmatprep.subr.mxu0 0.0
      %1037 = vmatpush1.msra.mxu0 %v1002
      %1038 = vmatprep.subr.mxu0 0.0
      %1039 = vmatpush1.msra.mxu0 %v1003
      %1040 = vmatprep.subr.mxu0 0.0
      %1041 = vmatpush1.msra.mxu0 %v1004
      %1042 = vmatprep.subr.mxu0 0.0
      %1043 = vmatpush1.msra.mxu0 %v1005
      %1044 = vmatprep.subr.mxu0 0.0
      %1045 = vmatpush1.msra.mxu0 %v1006
      %1046 = vmatprep.subr.mxu0 0.0
      %1047 = vmatpush1.msra.mxu0 %v1007
      %1048 = vmatprep.subr.mxu0 0.0
      %1049 = vmatpush1.msra.mxu0 %v1008
      %1050 = vmatprep.subr.mxu0 0.0
      %1051 = vmatpush1.msra.mxu0 %v1022
      %1052 = vmatprep.subr.mxu0 0.0
      %1053 = vmatpush1.msra.mxu0 0.0
      %1054 = vmatprep.subr.mxu0 0.0
      %1055 = vmatpush1.msra.mxu0 0.0
      %1056 = vmatprep.subr.mxu0 0.0
      %1057 = vmatpush1.msra.mxu0 0.0
      %1058 = vmatprep.subr.mxu0 0.0
      %1059 = vmatpush1.msra.mxu0 0.0
      %1060 = vmatprep.subr.mxu0 0.0
      %1061 = vmatpush1.msra.mxu0 0.0
      %1062 = vmatprep.subr.mxu0 0.0
      %1063 = vmatpush1.msra.mxu0 0.0
      %1064 = vmatprep.subr.mxu0 0.0
      %1065 = vmatpush1.msra.mxu0 0.0
      %1066 = vmatprep.subr.mxu0 0.0
      %1067 = vmatpush1.msra.mxu0 0.0
      %1068 = vmatprep.subr.mxu0 0.0
      %1069 = vmatpush1.msra.mxu0 0.0
      %1070 = vmatprep.subr.mxu0 0.0
      %1071 = vmatpush1.msra.mxu0 0.0
      %1072 = vmatprep.subr.mxu0 0.0
      %1073 = vmatpush1.msra.mxu0 0.0
      %1074 = vmatprep.subr.mxu0 0.0
      %1075 = vmatpush1.msra.mxu0 0.0
      %1076 = vmatprep.subr.mxu0 0.0
      %1077 = vmatpush1.msra.mxu0 0.0
      %1078 = vmatprep.subr.mxu0 0.0
      %1079 = vmatpush1.msra.mxu0 0.0
      %1080 = vmatprep.subr.mxu0 0.0
      %1081 = vmatpush1.msra.mxu0 0.0
      %1082 = vmatprep.subr.mxu0 0.0
      %1083 = vmatpush1.msra.mxu0 0.0
      %1084 = vmatprep.subr.mxu0 0.0
      %1085 = vmatpush1.msra.mxu0 0.0
      %1086 = vmatprep.subr.mxu0 0.0
      %1087 = vmatpush1.msra.mxu0 0.0
      %1088 = vmatprep.mubr.f32.mxu0 0.0
      %1089 = vmatmul.mubr.f32.gmra.mrb[0].mxu0 %v1019
      %v1090 = vpop.f32.mrb[0].mxu0
      %v1091 = vadd.f32 %v1016, %v1090
      %v1092 = vpop.f32.mrb[0].mxu0
      %1093 = vdwg.mxu0
      %v1094 = vmax.f32 %v1091, 0.0
      %1096 = vset.pattern.permute.xlu0 0
      %1097 = vperm.xlu0 %1096, %v1011
      %v1098 = vpop.permute.xlu0 %1097
      %v1100 = vmul.f32 %v1094, %v1098
      %1102 = vset.pattern.permute.xlu0 0
      %1103 = vperm.xlu0 %1102, %v1012
      %v1104 = vpop.permute.xlu0 %1103
      %v1106 = vadd.f32 %v1100, %v1104
      %v1107 = vadd.f32 %v783, %v1106
      %1108 = vst [vmem:[%s455] sm:$0xff] %v1107
      %p1109 = scmp.lt.s32.totalorder %s23, 1
      %s1110 = scalar_select %p1109, %s23, 1
      %p1111 = scmp.lt.s32.totalorder %s24, 7
      %s1112 = scalar_select %p1111, %s24, 7
      %s1113 = smul.addr %s1110, 8
      %s1114 = sadd.s32 %s1112, %s1113
      %s1115 = smul.addr %s1114, 8
      %s1116 = scalar_lea.vmem %s8, %s1115
      // Predicated region
      $region53: #{en_res_block.3} parent=51 // pred_check
        %p1117 = pneg %p251
      $region54: #{en_res_block.3} parent=51 // pred_check_branch
        %1119 = sbr.rel (%p1117) target = $region56
      $region55: #{en_res_block.3} parent=51 // pred_region
        _
      $region56: #{en_res_block.3} parent=51 // pred_fallthru
        _
    $region52: #{en_res_block.3} parent=5 // pred_fallthru
      _
    %p1120 = scmp.le.s32.totalorder 2, %s14
    // Predicated region
    $region57: #{en_res_block.3} parent=5 // pred_check
      %p1121 = pneg %p1120
    $region58: #{en_res_block.3} parent=5 // pred_check_branch
      %1123 = sbr.rel (%p1121) target = $region60
    $region59: #{en_res_block.3} parent=5 // pred_region
      %s1124 = ssub.s32 %s14, 2
      // Predicated region
      $region61: #{en_res_block.3} parent=59 // pred_check
        %p1125 = pneg %p257
      $region62: #{en_res_block.3} parent=59 // pred_check_branch
        %1127 = sbr.rel (%p1125) target = $region64
      $region63: #{en_res_block.3} parent=59 // pred_region
        %p1128 = scmp.lt.s32.totalorder %s25, 1
        %s1129 = scalar_select %p1128, %s25, 1
        %p1130 = scmp.lt.s32.totalorder %s26, 7
        %s1131 = scalar_select %p1130, %s26, 7
        %s1132 = smul.addr %s1129, 8
        %s1133 = sadd.s32 %s1131, %s1132
        %s1134 = smul.addr %s1133, 8
        %s1135 = scalar_lea.vmem %s8, %s1134
      $region64: #{en_res_block.3} parent=59 // pred_fallthru
        _
    $region60: #{en_res_block.3} parent=5 // pred_fallthru
      _
  $region6: #{en_res_block.3} parent=0 // loop_footer
    %s18 = sadd.s32 1, %s14
  $region7: #{en_res_block.3} parent=0 // loop_footer_branch
    %13 = sbr.rel target = $region3
  $region8: #{en_res_block.3} parent=0 // loop_exit
    _

</llo_original>
